<compile_context>
chip_gen: v7x
topology: tpu7x:2x2x1
jax: 0.10.0
libtpu: 0.0.40
codegen_flags: <defaults>
</compile_context>

<pallas_src>
import functools
import math

import jax
import jax.numpy as jnp
import numpy as np
from jax.experimental import pallas as pl
from jax.experimental.pallas import tpu as pltpu

_LANE = 128
_SUBLANE = 8


def _round_up(x, m):
    return ((x + m - 1) // m) * m


def _pick_t_tile(T):
    for cand in (64, 32, 16, 8):
        if T % cand == 0:
            return cand
    return T  # block == full dim is always legal


def _gru_kernel(xp_ref, h0_ref, whh_zr_ref, whh_n_ref, bhh_zr_ref, bhh_n_ref,
                out_ref, h_scr, *, clip_value, t_tile, h_pad):
    """One grid step = (batch block, time block); recurrence over t_tile steps."""
    @pl.when(pl.program_id(1) == 0)
    def _():
        h_scr[...] = h0_ref[...]

    whh_zr = whh_zr_ref[...]        # (H_pad, 2*H_pad)  fused z|r hidden weights
    whh_n = whh_n_ref[...]          # (H_pad, H_pad)
    b_zr = bhh_zr_ref[...]          # (1, 2*H_pad)
    b_n = bhh_n_ref[...]            # (1, H_pad)
    w_dtype = whh_zr.dtype

    h = h_scr[...]                  # (B_tile, H_pad) f32
    for i in range(t_tile):         # small static unroll; x-projection is precomputed
        xg = xp_ref[:, i, :]        # (B_tile, 3*H_pad) = [x_z | x_r | x_n] (+ b_ih)
        x_z = xg[:, 0:h_pad]
        x_r = xg[:, h_pad:2 * h_pad]
        x_n = xg[:, 2 * h_pad:3 * h_pad]

        h_zr = jnp.dot(h.astype(w_dtype), whh_zr,
                       preferred_element_type=jnp.float32) + b_zr
        z = jax.nn.sigmoid(x_z + h_zr[:, 0:h_pad])
        r = jax.nn.sigmoid(x_r + h_zr[:, h_pad:2 * h_pad])

        # candidate: (r * h) @ W_hh_n.T + b_hh_n   (LFADS ClippedGRUCell semantics)
        h_n = jnp.dot((r * h).astype(w_dtype), whh_n,
                      preferred_element_type=jnp.float32) + b_n
        n = jnp.tanh(x_n + h_n)

        h = z * h + (1.0 - z) * n
        if math.isfinite(clip_value):     # static branch; skip clip for inf
            h = jnp.clip(h, -clip_value, clip_value)

        out_ref[:, i, :] = h.astype(out_ref.dtype)

    h_scr[...] = h


def prepare_params(w_ih, w_hh, b_ih, b_hh, *, param_dtype=jnp.float32):
    """Fuse / transpose / lane-pad raw nn.GRUCell-style parameters for the kernel.

    w_ih: (3H, D), w_hh: (3H, H), b_ih/b_hh: (3H,). Gate chunk order follows the
    module's torch.chunk convention (z, r, n). One-time prep (model init)."""
    three_h, _ = w_ih.shape
    H = three_h // 3
    H_pad = _round_up(H, _LANE)

    def gate(w, i):
        return w[i * H:(i + 1) * H]

    def pad_wT(w_gate, in_pad):      # (H, X) -> (X_pad, H_pad), transposed + zero pad
        wt = jnp.transpose(w_gate)
        return jnp.pad(wt, ((0, in_pad - wt.shape[0]), (0, H_pad - H)))

    def pad_b(b_gate):
        return jnp.pad(b_gate, (0, H_pad - H))

    D = w_ih.shape[1]
    # Fused input-projection weight (all 3 gates) + folded input bias.
    w_ih_T = jnp.concatenate([pad_wT(gate(w_ih, g), D) for g in range(3)], axis=1)
    b_ih_f = jnp.concatenate([pad_b(gate(b_ih, g)) for g in range(3)], axis=0)

    # Hidden projection: z|r fused into one matmul; candidate gate separate.
    whh_zr = jnp.concatenate([pad_wT(gate(w_hh, 0), H_pad),
                              pad_wT(gate(w_hh, 1), H_pad)], axis=1)
    whh_n = pad_wT(gate(w_hh, 2), H_pad)
    bhh_zr = jnp.concatenate([pad_b(gate(b_hh, 0)), pad_b(gate(b_hh, 1))])[None, :]
    bhh_n = pad_b(gate(b_hh, 2))[None, :]

    return dict(
        w_ih_T=w_ih_T.astype(param_dtype),
        b_ih=b_ih_f.astype(jnp.float32),
        whh_zr=whh_zr.astype(param_dtype),
        whh_n=whh_n.astype(param_dtype),
        bhh_zr=bhh_zr.astype(jnp.float32),
        bhh_n=bhh_n.astype(jnp.float32),
    )


@functools.partial(jax.jit,
                   static_argnames=("hidden_size", "clip_value", "t_tile", "b_tile"))
def clipped_gru_forward(x, h0, kparams, *, hidden_size,
                        clip_value=float("inf"), t_tile=None, b_tile=None):
    """x: (B, T, D), h0: (B, H). Returns (output (B, T, H), final hidden (B, H))."""
    B, T, _ = x.shape
    H = hidden_size
    H_pad = kparams["whh_n"].shape[0]
    B_pad = _round_up(B, _SUBLANE)

    if t_tile is None:
        t_tile = _pick_t_tile(T)
    if b_tile is None:
        b_tile = 256 if (B_pad > 256 and B_pad % 256 == 0) else B_pad
    nb, nt = B_pad // b_tile, T // t_tile

    # Hoisted input projection: one big matmul over all timesteps (no h dependence),
    # b_ih folded in.  Output stays f32 regardless of weight dtype.
    x_pad = jnp.pad(x, ((0, B_pad - B), (0, 0), (0, 0)))
    xp = jnp.einsum("btd,dg->btg",
                    x_pad.astype(kparams["w_ih_T"].dtype), kparams["w_ih_T"],
                    preferred_element_type=jnp.float32) + kparams["b_ih"]
    h0_pad = jnp.pad(h0.astype(jnp.float32), ((0, B_pad - B), (0, H_pad - H)))

    kernel = functools.partial(_gru_kernel, clip_value=float(clip_value),
                               t_tile=t_tile, h_pad=H_pad)

    out_pad = pl.pallas_call(
        kernel,
        out_shape=jax.ShapeDtypeStruct((B_pad, T, H_pad), jnp.float32),
        grid_spec=pltpu.PrefetchScalarGridSpec(
            num_scalar_prefetch=0,
            grid=(nb, nt),
            in_specs=[
                pl.BlockSpec((b_tile, t_tile, 3 * H_pad), lambda b, t: (b, t, 0)),
                pl.BlockSpec((b_tile, H_pad), lambda b, t: (b, 0)),
                pl.BlockSpec((H_pad, 2 * H_pad), lambda b, t: (0, 0)),
                pl.BlockSpec((H_pad, H_pad), lambda b, t: (0, 0)),
                pl.BlockSpec((1, 2 * H_pad), lambda b, t: (0, 0)),
                pl.BlockSpec((1, H_pad), lambda b, t: (0, 0)),
            ],
            out_specs=pl.BlockSpec((b_tile, t_tile, H_pad), lambda b, t: (b, t, 0)),
            scratch_shapes=[pltpu.VMEM((b_tile, H_pad), jnp.float32)],
        ),
        compiler_params=pltpu.CompilerParams(
            # batch blocks independent (megacore-parallel on v7x); time carries state
            dimension_semantics=("parallel", "arbitrary")),
    )(xp, h0_pad,
      kparams["whh_zr"], kparams["whh_n"], kparams["bhh_zr"], kparams["bhh_n"])

    output = out_pad[:B, :, :H]
    hidden = output[:, -1, :]
    return output, hidden


def _init_params(key, input_size, hidden_size):
    """Synthetic nn.GRUCell-shaped parameters (deterministic)."""
    D, H = input_size, hidden_size
    k = 1.0 / np.sqrt(H)
    keys = jax.random.split(key, 4)
    w_ih = jax.random.uniform(keys[0], (3 * H, D), jnp.float32, -k, k)
    w_hh = jax.random.uniform(keys[1], (3 * H, H), jnp.float32, -k, k)
    b_ih = jax.random.uniform(keys[2], (3 * H,), jnp.float32, -k, k)
    b_hh = jax.random.uniform(keys[3], (3 * H,), jnp.float32, -k, k)
    # TODO(synk): init_gru_cell_ (LFADS-specific rescaling) is not in the reference; plain uniform init used.
    return w_ih, w_hh, b_ih, b_hh


def _reference_forward(x, h0, raw_params, clip_value):
    """Pure-JAX reference replicating the PyTorch ClippedGRU forward exactly."""
    w_ih, w_hh, b_ih, b_hh = raw_params
    H = h0.shape[1]

    def cell(h, x_t):
        x_all = x_t @ w_ih.T + b_ih
        x_z, x_r, x_n = x_all[:, :H], x_all[:, H:2 * H], x_all[:, 2 * H:]
        w_zr, w_n = w_hh[:2 * H], w_hh[2 * H:]
        b_zr, b_n = b_hh[:2 * H], b_hh[2 * H:]
        h_all = h @ w_zr.T + b_zr
        h_z, h_r = h_all[:, :H], h_all[:, H:]
        z = jax.nn.sigmoid(x_z + h_z)
        r = jax.nn.sigmoid(x_r + h_r)
        h_n = (r * h) @ w_n.T + b_n
        n = jnp.tanh(x_n + h_n)
        h_new = jnp.clip(z * h + (1 - z) * n, -clip_value, clip_value)
        return h_new, h_new

    h_final, ys = jax.lax.scan(cell, h0, jnp.transpose(x, (1, 0, 2)))
    return jnp.transpose(ys, (1, 0, 2)), h_final


if __name__ == "__main__":
    B, T, D, H = 2, 8, 16, 32
    clip_value = 5.0

    key = jax.random.PRNGKey(0)
    k_x, k_h, k_p = jax.random.split(key, 3)
    x = jax.random.normal(k_x, (B, T, D), jnp.float32)
    h0 = jax.random.normal(k_h, (B, H), jnp.float32)
    raw_params = _init_params(k_p, D, H)
    # f32 weights for exact comparison; param_dtype=jnp.bfloat16 is the v6e/v7x option.
    kparams = prepare_params(*raw_params, param_dtype=jnp.float32)

    output, hidden = jax.block_until_ready(
        clipped_gru_forward(x, h0, kparams, hidden_size=H, clip_value=clip_value))

    ref_out, ref_hid = _reference_forward(x, h0, raw_params, clip_value)
    assert output.shape == (B, T, H) and hidden.shape == (B, H)
    np.testing.assert_allclose(np.asarray(output), np.asarray(ref_out), rtol=1e-5, atol=1e-5)
    np.testing.assert_allclose(np.asarray(hidden), np.asarray(ref_hid), rtol=1e-5, atol=1e-5)

    print("KERNEL_OK")
</pallas_src>

<mosaic_0001>
module attributes {stable_mosaic.version = 11 : i64} {
  func.func @_gru_kernel(%arg0: i32, %arg1: i32, %arg2: memref<8x8x384xf32, #tpu.memory_space<vmem>>, %arg3: memref<8x128xf32, #tpu.memory_space<vmem>>, %arg4: memref<128x256xf32, #tpu.memory_space<vmem>>, %arg5: memref<128x128xf32, #tpu.memory_space<vmem>>, %arg6: memref<1x256xf32, #tpu.memory_space<vmem>>, %arg7: memref<1x128xf32, #tpu.memory_space<vmem>>, %arg8: memref<8x8x128xf32, #tpu.memory_space<vmem>>, %arg9: memref<8x128xf32, #tpu.memory_space<vmem>>) attributes {dimension_semantics = [#tpu.dimension_semantics<parallel>, #tpu.dimension_semantics<arbitrary>], iteration_bounds = array<i64: 1, 1>, scalar_prefetch = 0 : i64, scratch_operands = 1 : i64, tpu.core_type = #tpu.core_type<tc>, window_params = [{transform_indices = @transform_0, window_bounds = array<i64: 8, 8, 384>}, {transform_indices = @transform_1, window_bounds = array<i64: 8, 128>}, {pipeline_mode = #tpu.pipeline_mode<synchronous>, transform_indices = @transform_2, window_bounds = array<i64: 128, 256>}, {pipeline_mode = #tpu.pipeline_mode<synchronous>, transform_indices = @transform_3, window_bounds = array<i64: 128, 128>}, {pipeline_mode = #tpu.pipeline_mode<synchronous>, transform_indices = @transform_4, window_bounds = array<i64: 1, 256>}, {pipeline_mode = #tpu.pipeline_mode<synchronous>, transform_indices = @transform_5, window_bounds = array<i64: 1, 128>}, {transform_indices = @transform_6, window_bounds = array<i64: 8, 8, 128>}]} {
    %c0_i32 = arith.constant 0 : i32
    %0 = arith.cmpi eq, %arg1, %c0_i32 : i32
    %1 = arith.extui %0 : i1 to i32
    %c0_i32_0 = arith.constant 0 : i32
    %2 = arith.cmpi ne, %1, %c0_i32_0 : i32
    scf.if %2 {
      %c0_108 = arith.constant 0 : index
      %c0_109 = arith.constant 0 : index
      %329 = vector.load %arg3[%c0_108, %c0_109] : memref<8x128xf32, #tpu.memory_space<vmem>>, vector<8x128xf32>
      %c0_110 = arith.constant 0 : index
      %c0_111 = arith.constant 0 : index
      %330 = vector.load %arg9[%c0_110, %c0_111] : memref<8x128xf32, #tpu.memory_space<vmem>>, vector<8x128xf32>
      tpu.vector_store %arg9[%c0_110, %c0_111], %329 {strides = array<i32>} : memref<8x128xf32, #tpu.memory_space<vmem>>, vector<8x128xf32>,
    } else {
    }
    %c0 = arith.constant 0 : index
    %c0_1 = arith.constant 0 : index
    %3 = vector.load %arg4[%c0, %c0_1] : memref<128x256xf32, #tpu.memory_space<vmem>>, vector<128x256xf32>
    %c0_2 = arith.constant 0 : index
    %c0_3 = arith.constant 0 : index
    %4 = vector.load %arg5[%c0_2, %c0_3] : memref<128x128xf32, #tpu.memory_space<vmem>>, vector<128x128xf32>
    %c0_4 = arith.constant 0 : index
    %c0_5 = arith.constant 0 : index
    %5 = vector.load %arg6[%c0_4, %c0_5] : memref<1x256xf32, #tpu.memory_space<vmem>>, vector<1x256xf32>
    %c0_6 = arith.constant 0 : index
    %c0_7 = arith.constant 0 : index
    %6 = vector.load %arg7[%c0_6, %c0_7] : memref<1x128xf32, #tpu.memory_space<vmem>>, vector<1x128xf32>
    %c0_8 = arith.constant 0 : index
    %c0_9 = arith.constant 0 : index
    %7 = vector.load %arg9[%c0_8, %c0_9] : memref<8x128xf32, #tpu.memory_space<vmem>>, vector<8x128xf32>
    %c0_10 = arith.constant 0 : index
    %c0_11 = arith.constant 0 : index
    %c0_12 = arith.constant 0 : index
    %8 = vector.load %arg2[%c0_10, %c0_11, %c0_12] : memref<8x8x384xf32, #tpu.memory_space<vmem>>, vector<8x1x384xf32>
    %9 = vector.shape_cast %8 : vector<8x1x384xf32> to vector<8x384xf32>
    %10 = vector.extract_strided_slice %9 {offsets = [0, 0], sizes = [8, 128], strides = [1, 1]} : vector<8x384xf32> to vector<8x128xf32>
    %11 = vector.extract_strided_slice %9 {offsets = [0, 128], sizes = [8, 128], strides = [1, 1]} : vector<8x384xf32> to vector<8x128xf32>
    %12 = vector.extract_strided_slice %9 {offsets = [0, 256], sizes = [8, 128], strides = [1, 1]} : vector<8x384xf32> to vector<8x128xf32>
    %cst = arith.constant dense<0.000000e+00> : vector<8x256xf32>
    %13 = tpu.matmul %7, %3, %cst {dimension_numbers = #tpu.dot_dimension_numbers<[1], [0], [0], [1], [0, 0, 1, 1], [], []>} : vector<8x128xf32>, vector<128x256xf32>, vector<8x256xf32> -> vector<8x256xf32>
    %14 = vector.broadcast %5 : vector<1x256xf32> to vector<8x256xf32>
    %15 = arith.addf %13, %14 : vector<8x256xf32>
    %16 = vector.extract_strided_slice %15 {offsets = [0, 0], sizes = [8, 128], strides = [1, 1]} : vector<8x256xf32> to vector<8x128xf32>
    %17 = arith.addf %10, %16 : vector<8x128xf32>
    %18 = arith.negf %17 : vector<8x128xf32>
    %19 = math.exp %18 : vector<8x128xf32>
    %cst_13 = arith.constant 1.000000e+00 : f32
    %20 = vector.broadcast %cst_13 : f32 to vector<8x128xf32>
    %21 = arith.addf %20, %19 : vector<8x128xf32>
    %22 = arith.divf %20, %21 : vector<8x128xf32>
    %23 = vector.extract_strided_slice %15 {offsets = [0, 128], sizes = [8, 128], strides = [1, 1]} : vector<8x256xf32> to vector<8x128xf32>
    %24 = arith.addf %11, %23 : vector<8x128xf32>
    %25 = arith.negf %24 : vector<8x128xf32>
    %26 = math.exp %25 : vector<8x128xf32>
    %cst_14 = arith.constant 1.000000e+00 : f32
    %27 = vector.broadcast %cst_14 : f32 to vector<8x128xf32>
    %28 = arith.addf %27, %26 : vector<8x128xf32>
    %29 = arith.divf %27, %28 : vector<8x128xf32>
    %30 = arith.mulf %29, %7 : vector<8x128xf32>
    %cst_15 = arith.constant dense<0.000000e+00> : vector<8x128xf32>
    %31 = tpu.matmul %30, %4, %cst_15 {dimension_numbers = #tpu.dot_dimension_numbers<[1], [0], [0], [1], [0, 0, 1, 1], [], []>} : vector<8x128xf32>, vector<128x128xf32>, vector<8x128xf32> -> vector<8x128xf32>
    %32 = vector.broadcast %6 : vector<1x128xf32> to vector<8x128xf32>
    %33 = arith.addf %31, %32 : vector<8x128xf32>
    %34 = arith.addf %12, %33 : vector<8x128xf32>
    %35 = math.tanh %34 : vector<8x128xf32>
    %36 = arith.mulf %22, %7 : vector<8x128xf32>
    %cst_16 = arith.constant 1.000000e+00 : f32
    %37 = vector.broadcast %cst_16 : f32 to vector<8x128xf32>
    %38 = arith.subf %37, %22 : vector<8x128xf32>
    %39 = arith.mulf %38, %35 : vector<8x128xf32>
    %40 = arith.addf %36, %39 : vector<8x128xf32>
    %cst_17 = arith.constant -5.000000e+00 : f32
    %cst_18 = arith.constant 5.000000e+00 : f32
    %41 = vector.broadcast %cst_17 : f32 to vector<8x128xf32>
    %42 = arith.maximumf %41, %40 : vector<8x128xf32>
    %43 = vector.broadcast %cst_18 : f32 to vector<8x128xf32>
    %44 = arith.minimumf %43, %42 : vector<8x128xf32>
    %c0_19 = arith.constant 0 : index
    %c0_20 = arith.constant 0 : index
    %c0_21 = arith.constant 0 : index
    %45 = vector.load %arg8[%c0_19, %c0_20, %c0_21] : memref<8x8x128xf32, #tpu.memory_space<vmem>>, vector<8x1x128xf32>
    %46 = vector.shape_cast %45 : vector<8x1x128xf32> to vector<8x128xf32>
    %47 = vector.shape_cast %44 : vector<8x128xf32> to vector<8x1x128xf32>
    tpu.vector_store %arg8[%c0_19, %c0_20, %c0_21], %47 {strides = array<i32>} : memref<8x8x128xf32, #tpu.memory_space<vmem>>, vector<8x1x128xf32>,
    %c0_22 = arith.constant 0 : index
    %c1 = arith.constant 1 : index
    %c0_23 = arith.constant 0 : index
    %48 = vector.load %arg2[%c0_22, %c1, %c0_23] : memref<8x8x384xf32, #tpu.memory_space<vmem>>, vector<8x1x384xf32>
    %49 = vector.shape_cast %48 : vector<8x1x384xf32> to vector<8x384xf32>
    %50 = vector.extract_strided_slice %49 {offsets = [0, 0], sizes = [8, 128], strides = [1, 1]} : vector<8x384xf32> to vector<8x128xf32>
    %51 = vector.extract_strided_slice %49 {offsets = [0, 128], sizes = [8, 128], strides = [1, 1]} : vector<8x384xf32> to vector<8x128xf32>
    %52 = vector.extract_strided_slice %49 {offsets = [0, 256], sizes = [8, 128], strides = [1, 1]} : vector<8x384xf32> to vector<8x128xf32>
    %cst_24 = arith.constant dense<0.000000e+00> : vector<8x256xf32>
    %53 = tpu.matmul %44, %3, %cst_24 {dimension_numbers = #tpu.dot_dimension_numbers<[1], [0], [0], [1], [0, 0, 1, 1], [], []>} : vector<8x128xf32>, vector<128x256xf32>, vector<8x256xf32> -> vector<8x256xf32>
    %54 = vector.broadcast %5 : vector<1x256xf32> to vector<8x256xf32>
    %55 = arith.addf %53, %54 : vector<8x256xf32>
    %56 = vector.extract_strided_slice %55 {offsets = [0, 0], sizes = [8, 128], strides = [1, 1]} : vector<8x256xf32> to vector<8x128xf32>
    %57 = arith.addf %50, %56 : vector<8x128xf32>
    %58 = arith.negf %57 : vector<8x128xf32>
    %59 = math.exp %58 : vector<8x128xf32>
    %cst_25 = arith.constant 1.000000e+00 : f32
    %60 = vector.broadcast %cst_25 : f32 to vector<8x128xf32>
    %61 = arith.addf %60, %59 : vector<8x128xf32>
    %62 = arith.divf %60, %61 : vector<8x128xf32>
    %63 = vector.extract_strided_slice %55 {offsets = [0, 128], sizes = [8, 128], strides = [1, 1]} : vector<8x256xf32> to vector<8x128xf32>
    %64 = arith.addf %51, %63 : vector<8x128xf32>
    %65 = arith.negf %64 : vector<8x128xf32>
    %66 = math.exp %65 : vector<8x128xf32>
    %cst_26 = arith.constant 1.000000e+00 : f32
    %67 = vector.broadcast %cst_26 : f32 to vector<8x128xf32>
    %68 = arith.addf %67, %66 : vector<8x128xf32>
    %69 = arith.divf %67, %68 : vector<8x128xf32>
    %70 = arith.mulf %69, %44 : vector<8x128xf32>
    %cst_27 = arith.constant dense<0.000000e+00> : vector<8x128xf32>
    %71 = tpu.matmul %70, %4, %cst_27 {dimension_numbers = #tpu.dot_dimension_numbers<[1], [0], [0], [1], [0, 0, 1, 1], [], []>} : vector<8x128xf32>, vector<128x128xf32>, vector<8x128xf32> -> vector<8x128xf32>
    %72 = vector.broadcast %6 : vector<1x128xf32> to vector<8x128xf32>
    %73 = arith.addf %71, %72 : vector<8x128xf32>
    %74 = arith.addf %52, %73 : vector<8x128xf32>
    %75 = math.tanh %74 : vector<8x128xf32>
    %76 = arith.mulf %62, %44 : vector<8x128xf32>
    %cst_28 = arith.constant 1.000000e+00 : f32
    %77 = vector.broadcast %cst_28 : f32 to vector<8x128xf32>
    %78 = arith.subf %77, %62 : vector<8x128xf32>
    %79 = arith.mulf %78, %75 : vector<8x128xf32>
    %80 = arith.addf %76, %79 : vector<8x128xf32>
    %cst_29 = arith.constant -5.000000e+00 : f32
    %cst_30 = arith.constant 5.000000e+00 : f32
    %81 = vector.broadcast %cst_29 : f32 to vector<8x128xf32>
    %82 = arith.maximumf %81, %80 : vector<8x128xf32>
    %83 = vector.broadcast %cst_30 : f32 to vector<8x128xf32>
    %84 = arith.minimumf %83, %82 : vector<8x128xf32>
    %c0_31 = arith.constant 0 : index
    %c1_32 = arith.constant 1 : index
    %c0_33 = arith.constant 0 : index
    %85 = vector.load %arg8[%c0_31, %c1_32, %c0_33] : memref<8x8x128xf32, #tpu.memory_space<vmem>>, vector<8x1x128xf32>
    %86 = vector.shape_cast %85 : vector<8x1x128xf32> to vector<8x128xf32>
    %87 = vector.shape_cast %84 : vector<8x128xf32> to vector<8x1x128xf32>
    tpu.vector_store %arg8[%c0_31, %c1_32, %c0_33], %87 {strides = array<i32>} : memref<8x8x128xf32, #tpu.memory_space<vmem>>, vector<8x1x128xf32>,
    %c0_34 = arith.constant 0 : index
    %c2 = arith.constant 2 : index
    %c0_35 = arith.constant 0 : index
    %88 = vector.load %arg2[%c0_34, %c2, %c0_35] : memref<8x8x384xf32, #tpu.memory_space<vmem>>, vector<8x1x384xf32>
    %89 = vector.shape_cast %88 : vector<8x1x384xf32> to vector<8x384xf32>
    %90 = vector.extract_strided_slice %89 {offsets = [0, 0], sizes = [8, 128], strides = [1, 1]} : vector<8x384xf32> to vector<8x128xf32>
    %91 = vector.extract_strided_slice %89 {offsets = [0, 128], sizes = [8, 128], strides = [1, 1]} : vector<8x384xf32> to vector<8x128xf32>
    %92 = vector.extract_strided_slice %89 {offsets = [0, 256], sizes = [8, 128], strides = [1, 1]} : vector<8x384xf32> to vector<8x128xf32>
    %cst_36 = arith.constant dense<0.000000e+00> : vector<8x256xf32>
    %93 = tpu.matmul %84, %3, %cst_36 {dimension_numbers = #tpu.dot_dimension_numbers<[1], [0], [0], [1], [0, 0, 1, 1], [], []>} : vector<8x128xf32>, vector<128x256xf32>, vector<8x256xf32> -> vector<8x256xf32>
    %94 = vector.broadcast %5 : vector<1x256xf32> to vector<8x256xf32>
    %95 = arith.addf %93, %94 : vector<8x256xf32>
    %96 = vector.extract_strided_slice %95 {offsets = [0, 0], sizes = [8, 128], strides = [1, 1]} : vector<8x256xf32> to vector<8x128xf32>
    %97 = arith.addf %90, %96 : vector<8x128xf32>
    %98 = arith.negf %97 : vector<8x128xf32>
    %99 = math.exp %98 : vector<8x128xf32>
    %cst_37 = arith.constant 1.000000e+00 : f32
    %100 = vector.broadcast %cst_37 : f32 to vector<8x128xf32>
    %101 = arith.addf %100, %99 : vector<8x128xf32>
    %102 = arith.divf %100, %101 : vector<8x128xf32>
    %103 = vector.extract_strided_slice %95 {offsets = [0, 128], sizes = [8, 128], strides = [1, 1]} : vector<8x256xf32> to vector<8x128xf32>
    %104 = arith.addf %91, %103 : vector<8x128xf32>
    %105 = arith.negf %104 : vector<8x128xf32>
    %106 = math.exp %105 : vector<8x128xf32>
    %cst_38 = arith.constant 1.000000e+00 : f32
    %107 = vector.broadcast %cst_38 : f32 to vector<8x128xf32>
    %108 = arith.addf %107, %106 : vector<8x128xf32>
    %109 = arith.divf %107, %108 : vector<8x128xf32>
    %110 = arith.mulf %109, %84 : vector<8x128xf32>
    %cst_39 = arith.constant dense<0.000000e+00> : vector<8x128xf32>
    %111 = tpu.matmul %110, %4, %cst_39 {dimension_numbers = #tpu.dot_dimension_numbers<[1], [0], [0], [1], [0, 0, 1, 1], [], []>} : vector<8x128xf32>, vector<128x128xf32>, vector<8x128xf32> -> vector<8x128xf32>
    %112 = vector.broadcast %6 : vector<1x128xf32> to vector<8x128xf32>
    %113 = arith.addf %111, %112 : vector<8x128xf32>
    %114 = arith.addf %92, %113 : vector<8x128xf32>
    %115 = math.tanh %114 : vector<8x128xf32>
    %116 = arith.mulf %102, %84 : vector<8x128xf32>
    %cst_40 = arith.constant 1.000000e+00 : f32
    %117 = vector.broadcast %cst_40 : f32 to vector<8x128xf32>
    %118 = arith.subf %117, %102 : vector<8x128xf32>
    %119 = arith.mulf %118, %115 : vector<8x128xf32>
    %120 = arith.addf %116, %119 : vector<8x128xf32>
    %cst_41 = arith.constant -5.000000e+00 : f32
    %cst_42 = arith.constant 5.000000e+00 : f32
    %121 = vector.broadcast %cst_41 : f32 to vector<8x128xf32>
    %122 = arith.maximumf %121, %120 : vector<8x128xf32>
    %123 = vector.broadcast %cst_42 : f32 to vector<8x128xf32>
    %124 = arith.minimumf %123, %122 : vector<8x128xf32>
    %c0_43 = arith.constant 0 : index
    %c2_44 = arith.constant 2 : index
    %c0_45 = arith.constant 0 : index
    %125 = vector.load %arg8[%c0_43, %c2_44, %c0_45] : memref<8x8x128xf32, #tpu.memory_space<vmem>>, vector<8x1x128xf32>
    %126 = vector.shape_cast %125 : vector<8x1x128xf32> to vector<8x128xf32>
    %127 = vector.shape_cast %124 : vector<8x128xf32> to vector<8x1x128xf32>
    tpu.vector_store %arg8[%c0_43, %c2_44, %c0_45], %127 {strides = array<i32>} : memref<8x8x128xf32, #tpu.memory_space<vmem>>, vector<8x1x128xf32>,
    %c0_46 = arith.constant 0 : index
    %c3 = arith.constant 3 : index
    %c0_47 = arith.constant 0 : index
    %128 = vector.load %arg2[%c0_46, %c3, %c0_47] : memref<8x8x384xf32, #tpu.memory_space<vmem>>, vector<8x1x384xf32>
    %129 = vector.shape_cast %128 : vector<8x1x384xf32> to vector<8x384xf32>
    %130 = vector.extract_strided_slice %129 {offsets = [0, 0], sizes = [8, 128], strides = [1, 1]} : vector<8x384xf32> to vector<8x128xf32>
    %131 = vector.extract_strided_slice %129 {offsets = [0, 128], sizes = [8, 128], strides = [1, 1]} : vector<8x384xf32> to vector<8x128xf32>
    %132 = vector.extract_strided_slice %129 {offsets = [0, 256], sizes = [8, 128], strides = [1, 1]} : vector<8x384xf32> to vector<8x128xf32>
    %cst_48 = arith.constant dense<0.000000e+00> : vector<8x256xf32>
    %133 = tpu.matmul %124, %3, %cst_48 {dimension_numbers = #tpu.dot_dimension_numbers<[1], [0], [0], [1], [0, 0, 1, 1], [], []>} : vector<8x128xf32>, vector<128x256xf32>, vector<8x256xf32> -> vector<8x256xf32>
    %134 = vector.broadcast %5 : vector<1x256xf32> to vector<8x256xf32>
    %135 = arith.addf %133, %134 : vector<8x256xf32>
    %136 = vector.extract_strided_slice %135 {offsets = [0, 0], sizes = [8, 128], strides = [1, 1]} : vector<8x256xf32> to vector<8x128xf32>
    %137 = arith.addf %130, %136 : vector<8x128xf32>
    %138 = arith.negf %137 : vector<8x128xf32>
    %139 = math.exp %138 : vector<8x128xf32>
    %cst_49 = arith.constant 1.000000e+00 : f32
    %140 = vector.broadcast %cst_49 : f32 to vector<8x128xf32>
    %141 = arith.addf %140, %139 : vector<8x128xf32>
    %142 = arith.divf %140, %141 : vector<8x128xf32>
    %143 = vector.extract_strided_slice %135 {offsets = [0, 128], sizes = [8, 128], strides = [1, 1]} : vector<8x256xf32> to vector<8x128xf32>
    %144 = arith.addf %131, %143 : vector<8x128xf32>
    %145 = arith.negf %144 : vector<8x128xf32>
    %146 = math.exp %145 : vector<8x128xf32>
    %cst_50 = arith.constant 1.000000e+00 : f32
    %147 = vector.broadcast %cst_50 : f32 to vector<8x128xf32>
    %148 = arith.addf %147, %146 : vector<8x128xf32>
    %149 = arith.divf %147, %148 : vector<8x128xf32>
    %150 = arith.mulf %149, %124 : vector<8x128xf32>
    %cst_51 = arith.constant dense<0.000000e+00> : vector<8x128xf32>
    %151 = tpu.matmul %150, %4, %cst_51 {dimension_numbers = #tpu.dot_dimension_numbers<[1], [0], [0], [1], [0, 0, 1, 1], [], []>} : vector<8x128xf32>, vector<128x128xf32>, vector<8x128xf32> -> vector<8x128xf32>
    %152 = vector.broadcast %6 : vector<1x128xf32> to vector<8x128xf32>
    %153 = arith.addf %151, %152 : vector<8x128xf32>
    %154 = arith.addf %132, %153 : vector<8x128xf32>
    %155 = math.tanh %154 : vector<8x128xf32>
    %156 = arith.mulf %142, %124 : vector<8x128xf32>
    %cst_52 = arith.constant 1.000000e+00 : f32
    %157 = vector.broadcast %cst_52 : f32 to vector<8x128xf32>
    %158 = arith.subf %157, %142 : vector<8x128xf32>
    %159 = arith.mulf %158, %155 : vector<8x128xf32>
    %160 = arith.addf %156, %159 : vector<8x128xf32>
    %cst_53 = arith.constant -5.000000e+00 : f32
    %cst_54 = arith.constant 5.000000e+00 : f32
    %161 = vector.broadcast %cst_53 : f32 to vector<8x128xf32>
    %162 = arith.maximumf %161, %160 : vector<8x128xf32>
    %163 = vector.broadcast %cst_54 : f32 to vector<8x128xf32>
    %164 = arith.minimumf %163, %162 : vector<8x128xf32>
    %c0_55 = arith.constant 0 : index
    %c3_56 = arith.constant 3 : index
    %c0_57 = arith.constant 0 : index
    %165 = vector.load %arg8[%c0_55, %c3_56, %c0_57] : memref<8x8x128xf32, #tpu.memory_space<vmem>>, vector<8x1x128xf32>
    %166 = vector.shape_cast %165 : vector<8x1x128xf32> to vector<8x128xf32>
    %167 = vector.shape_cast %164 : vector<8x128xf32> to vector<8x1x128xf32>
    tpu.vector_store %arg8[%c0_55, %c3_56, %c0_57], %167 {strides = array<i32>} : memref<8x8x128xf32, #tpu.memory_space<vmem>>, vector<8x1x128xf32>,
    %c0_58 = arith.constant 0 : index
    %c4 = arith.constant 4 : index
    %c0_59 = arith.constant 0 : index
    %168 = vector.load %arg2[%c0_58, %c4, %c0_59] : memref<8x8x384xf32, #tpu.memory_space<vmem>>, vector<8x1x384xf32>
    %169 = vector.shape_cast %168 : vector<8x1x384xf32> to vector<8x384xf32>
    %170 = vector.extract_strided_slice %169 {offsets = [0, 0], sizes = [8, 128], strides = [1, 1]} : vector<8x384xf32> to vector<8x128xf32>
    %171 = vector.extract_strided_slice %169 {offsets = [0, 128], sizes = [8, 128], strides = [1, 1]} : vector<8x384xf32> to vector<8x128xf32>
    %172 = vector.extract_strided_slice %169 {offsets = [0, 256], sizes = [8, 128], strides = [1, 1]} : vector<8x384xf32> to vector<8x128xf32>
    %cst_60 = arith.constant dense<0.000000e+00> : vector<8x256xf32>
    %173 = tpu.matmul %164, %3, %cst_60 {dimension_numbers = #tpu.dot_dimension_numbers<[1], [0], [0], [1], [0, 0, 1, 1], [], []>} : vector<8x128xf32>, vector<128x256xf32>, vector<8x256xf32> -> vector<8x256xf32>
    %174 = vector.broadcast %5 : vector<1x256xf32> to vector<8x256xf32>
    %175 = arith.addf %173, %174 : vector<8x256xf32>
    %176 = vector.extract_strided_slice %175 {offsets = [0, 0], sizes = [8, 128], strides = [1, 1]} : vector<8x256xf32> to vector<8x128xf32>
    %177 = arith.addf %170, %176 : vector<8x128xf32>
    %178 = arith.negf %177 : vector<8x128xf32>
    %179 = math.exp %178 : vector<8x128xf32>
    %cst_61 = arith.constant 1.000000e+00 : f32
    %180 = vector.broadcast %cst_61 : f32 to vector<8x128xf32>
    %181 = arith.addf %180, %179 : vector<8x128xf32>
    %182 = arith.divf %180, %181 : vector<8x128xf32>
    %183 = vector.extract_strided_slice %175 {offsets = [0, 128], sizes = [8, 128], strides = [1, 1]} : vector<8x256xf32> to vector<8x128xf32>
    %184 = arith.addf %171, %183 : vector<8x128xf32>
    %185 = arith.negf %184 : vector<8x128xf32>
    %186 = math.exp %185 : vector<8x128xf32>
    %cst_62 = arith.constant 1.000000e+00 : f32
    %187 = vector.broadcast %cst_62 : f32 to vector<8x128xf32>
    %188 = arith.addf %187, %186 : vector<8x128xf32>
    %189 = arith.divf %187, %188 : vector<8x128xf32>
    %190 = arith.mulf %189, %164 : vector<8x128xf32>
    %cst_63 = arith.constant dense<0.000000e+00> : vector<8x128xf32>
    %191 = tpu.matmul %190, %4, %cst_63 {dimension_numbers = #tpu.dot_dimension_numbers<[1], [0], [0], [1], [0, 0, 1, 1], [], []>} : vector<8x128xf32>, vector<128x128xf32>, vector<8x128xf32> -> vector<8x128xf32>
    %192 = vector.broadcast %6 : vector<1x128xf32> to vector<8x128xf32>
    %193 = arith.addf %191, %192 : vector<8x128xf32>
    %194 = arith.addf %172, %193 : vector<8x128xf32>
    %195 = math.tanh %194 : vector<8x128xf32>
    %196 = arith.mulf %182, %164 : vector<8x128xf32>
    %cst_64 = arith.constant 1.000000e+00 : f32
    %197 = vector.broadcast %cst_64 : f32 to vector<8x128xf32>
    %198 = arith.subf %197, %182 : vector<8x128xf32>
    %199 = arith.mulf %198, %195 : vector<8x128xf32>
    %200 = arith.addf %196, %199 : vector<8x128xf32>
    %cst_65 = arith.constant -5.000000e+00 : f32
    %cst_66 = arith.constant 5.000000e+00 : f32
    %201 = vector.broadcast %cst_65 : f32 to vector<8x128xf32>
    %202 = arith.maximumf %201, %200 : vector<8x128xf32>
    %203 = vector.broadcast %cst_66 : f32 to vector<8x128xf32>
    %204 = arith.minimumf %203, %202 : vector<8x128xf32>
    %c0_67 = arith.constant 0 : index
    %c4_68 = arith.constant 4 : index
    %c0_69 = arith.constant 0 : index
    %205 = vector.load %arg8[%c0_67, %c4_68, %c0_69] : memref<8x8x128xf32, #tpu.memory_space<vmem>>, vector<8x1x128xf32>
    %206 = vector.shape_cast %205 : vector<8x1x128xf32> to vector<8x128xf32>
    %207 = vector.shape_cast %204 : vector<8x128xf32> to vector<8x1x128xf32>
    tpu.vector_store %arg8[%c0_67, %c4_68, %c0_69], %207 {strides = array<i32>} : memref<8x8x128xf32, #tpu.memory_space<vmem>>, vector<8x1x128xf32>,
    %c0_70 = arith.constant 0 : index
    %c5 = arith.constant 5 : index
    %c0_71 = arith.constant 0 : index
    %208 = vector.load %arg2[%c0_70, %c5, %c0_71] : memref<8x8x384xf32, #tpu.memory_space<vmem>>, vector<8x1x384xf32>
    %209 = vector.shape_cast %208 : vector<8x1x384xf32> to vector<8x384xf32>
    %210 = vector.extract_strided_slice %209 {offsets = [0, 0], sizes = [8, 128], strides = [1, 1]} : vector<8x384xf32> to vector<8x128xf32>
    %211 = vector.extract_strided_slice %209 {offsets = [0, 128], sizes = [8, 128], strides = [1, 1]} : vector<8x384xf32> to vector<8x128xf32>
    %212 = vector.extract_strided_slice %209 {offsets = [0, 256], sizes = [8, 128], strides = [1, 1]} : vector<8x384xf32> to vector<8x128xf32>
    %cst_72 = arith.constant dense<0.000000e+00> : vector<8x256xf32>
    %213 = tpu.matmul %204, %3, %cst_72 {dimension_numbers = #tpu.dot_dimension_numbers<[1], [0], [0], [1], [0, 0, 1, 1], [], []>} : vector<8x128xf32>, vector<128x256xf32>, vector<8x256xf32> -> vector<8x256xf32>
    %214 = vector.broadcast %5 : vector<1x256xf32> to vector<8x256xf32>
    %215 = arith.addf %213, %214 : vector<8x256xf32>
    %216 = vector.extract_strided_slice %215 {offsets = [0, 0], sizes = [8, 128], strides = [1, 1]} : vector<8x256xf32> to vector<8x128xf32>
    %217 = arith.addf %210, %216 : vector<8x128xf32>
    %218 = arith.negf %217 : vector<8x128xf32>
    %219 = math.exp %218 : vector<8x128xf32>
    %cst_73 = arith.constant 1.000000e+00 : f32
    %220 = vector.broadcast %cst_73 : f32 to vector<8x128xf32>
    %221 = arith.addf %220, %219 : vector<8x128xf32>
    %222 = arith.divf %220, %221 : vector<8x128xf32>
    %223 = vector.extract_strided_slice %215 {offsets = [0, 128], sizes = [8, 128], strides = [1, 1]} : vector<8x256xf32> to vector<8x128xf32>
    %224 = arith.addf %211, %223 : vector<8x128xf32>
    %225 = arith.negf %224 : vector<8x128xf32>
    %226 = math.exp %225 : vector<8x128xf32>
    %cst_74 = arith.constant 1.000000e+00 : f32
    %227 = vector.broadcast %cst_74 : f32 to vector<8x128xf32>
    %228 = arith.addf %227, %226 : vector<8x128xf32>
    %229 = arith.divf %227, %228 : vector<8x128xf32>
    %230 = arith.mulf %229, %204 : vector<8x128xf32>
    %cst_75 = arith.constant dense<0.000000e+00> : vector<8x128xf32>
    %231 = tpu.matmul %230, %4, %cst_75 {dimension_numbers = #tpu.dot_dimension_numbers<[1], [0], [0], [1], [0, 0, 1, 1], [], []>} : vector<8x128xf32>, vector<128x128xf32>, vector<8x128xf32> -> vector<8x128xf32>
    %232 = vector.broadcast %6 : vector<1x128xf32> to vector<8x128xf32>
    %233 = arith.addf %231, %232 : vector<8x128xf32>
    %234 = arith.addf %212, %233 : vector<8x128xf32>
    %235 = math.tanh %234 : vector<8x128xf32>
    %236 = arith.mulf %222, %204 : vector<8x128xf32>
    %cst_76 = arith.constant 1.000000e+00 : f32
    %237 = vector.broadcast %cst_76 : f32 to vector<8x128xf32>
    %238 = arith.subf %237, %222 : vector<8x128xf32>
    %239 = arith.mulf %238, %235 : vector<8x128xf32>
    %240 = arith.addf %236, %239 : vector<8x128xf32>
    %cst_77 = arith.constant -5.000000e+00 : f32
    %cst_78 = arith.constant 5.000000e+00 : f32
    %241 = vector.broadcast %cst_77 : f32 to vector<8x128xf32>
    %242 = arith.maximumf %241, %240 : vector<8x128xf32>
    %243 = vector.broadcast %cst_78 : f32 to vector<8x128xf32>
    %244 = arith.minimumf %243, %242 : vector<8x128xf32>
    %c0_79 = arith.constant 0 : index
    %c5_80 = arith.constant 5 : index
    %c0_81 = arith.constant 0 : index
    %245 = vector.load %arg8[%c0_79, %c5_80, %c0_81] : memref<8x8x128xf32, #tpu.memory_space<vmem>>, vector<8x1x128xf32>
    %246 = vector.shape_cast %245 : vector<8x1x128xf32> to vector<8x128xf32>
    %247 = vector.shape_cast %244 : vector<8x128xf32> to vector<8x1x128xf32>
    tpu.vector_store %arg8[%c0_79, %c5_80, %c0_81], %247 {strides = array<i32>} : memref<8x8x128xf32, #tpu.memory_space<vmem>>, vector<8x1x128xf32>,
    %c0_82 = arith.constant 0 : index
    %c6 = arith.constant 6 : index
    %c0_83 = arith.constant 0 : index
    %248 = vector.load %arg2[%c0_82, %c6, %c0_83] : memref<8x8x384xf32, #tpu.memory_space<vmem>>, vector<8x1x384xf32>
    %249 = vector.shape_cast %248 : vector<8x1x384xf32> to vector<8x384xf32>
    %250 = vector.extract_strided_slice %249 {offsets = [0, 0], sizes = [8, 128], strides = [1, 1]} : vector<8x384xf32> to vector<8x128xf32>
    %251 = vector.extract_strided_slice %249 {offsets = [0, 128], sizes = [8, 128], strides = [1, 1]} : vector<8x384xf32> to vector<8x128xf32>
    %252 = vector.extract_strided_slice %249 {offsets = [0, 256], sizes = [8, 128], strides = [1, 1]} : vector<8x384xf32> to vector<8x128xf32>
    %cst_84 = arith.constant dense<0.000000e+00> : vector<8x256xf32>
    %253 = tpu.matmul %244, %3, %cst_84 {dimension_numbers = #tpu.dot_dimension_numbers<[1], [0], [0], [1], [0, 0, 1, 1], [], []>} : vector<8x128xf32>, vector<128x256xf32>, vector<8x256xf32> -> vector<8x256xf32>
    %254 = vector.broadcast %5 : vector<1x256xf32> to vector<8x256xf32>
    %255 = arith.addf %253, %254 : vector<8x256xf32>
    %256 = vector.extract_strided_slice %255 {offsets = [0, 0], sizes = [8, 128], strides = [1, 1]} : vector<8x256xf32> to vector<8x128xf32>
    %257 = arith.addf %250, %256 : vector<8x128xf32>
    %258 = arith.negf %257 : vector<8x128xf32>
    %259 = math.exp %258 : vector<8x128xf32>
    %cst_85 = arith.constant 1.000000e+00 : f32
    %260 = vector.broadcast %cst_85 : f32 to vector<8x128xf32>
    %261 = arith.addf %260, %259 : vector<8x128xf32>
    %262 = arith.divf %260, %261 : vector<8x128xf32>
    %263 = vector.extract_strided_slice %255 {offsets = [0, 128], sizes = [8, 128], strides = [1, 1]} : vector<8x256xf32> to vector<8x128xf32>
    %264 = arith.addf %251, %263 : vector<8x128xf32>
    %265 = arith.negf %264 : vector<8x128xf32>
    %266 = math.exp %265 : vector<8x128xf32>
    %cst_86 = arith.constant 1.000000e+00 : f32
    %267 = vector.broadcast %cst_86 : f32 to vector<8x128xf32>
    %268 = arith.addf %267, %266 : vector<8x128xf32>
    %269 = arith.divf %267, %268 : vector<8x128xf32>
    %270 = arith.mulf %269, %244 : vector<8x128xf32>
    %cst_87 = arith.constant dense<0.000000e+00> : vector<8x128xf32>
    %271 = tpu.matmul %270, %4, %cst_87 {dimension_numbers = #tpu.dot_dimension_numbers<[1], [0], [0], [1], [0, 0, 1, 1], [], []>} : vector<8x128xf32>, vector<128x128xf32>, vector<8x128xf32> -> vector<8x128xf32>
    %272 = vector.broadcast %6 : vector<1x128xf32> to vector<8x128xf32>
    %273 = arith.addf %271, %272 : vector<8x128xf32>
    %274 = arith.addf %252, %273 : vector<8x128xf32>
    %275 = math.tanh %274 : vector<8x128xf32>
    %276 = arith.mulf %262, %244 : vector<8x128xf32>
    %cst_88 = arith.constant 1.000000e+00 : f32
    %277 = vector.broadcast %cst_88 : f32 to vector<8x128xf32>
    %278 = arith.subf %277, %262 : vector<8x128xf32>
    %279 = arith.mulf %278, %275 : vector<8x128xf32>
    %280 = arith.addf %276, %279 : vector<8x128xf32>
    %cst_89 = arith.constant -5.000000e+00 : f32
    %cst_90 = arith.constant 5.000000e+00 : f32
    %281 = vector.broadcast %cst_89 : f32 to vector<8x128xf32>
    %282 = arith.maximumf %281, %280 : vector<8x128xf32>
    %283 = vector.broadcast %cst_90 : f32 to vector<8x128xf32>
    %284 = arith.minimumf %283, %282 : vector<8x128xf32>
    %c0_91 = arith.constant 0 : index
    %c6_92 = arith.constant 6 : index
    %c0_93 = arith.constant 0 : index
    %285 = vector.load %arg8[%c0_91, %c6_92, %c0_93] : memref<8x8x128xf32, #tpu.memory_space<vmem>>, vector<8x1x128xf32>
    %286 = vector.shape_cast %285 : vector<8x1x128xf32> to vector<8x128xf32>
    %287 = vector.shape_cast %284 : vector<8x128xf32> to vector<8x1x128xf32>
    tpu.vector_store %arg8[%c0_91, %c6_92, %c0_93], %287 {strides = array<i32>} : memref<8x8x128xf32, #tpu.memory_space<vmem>>, vector<8x1x128xf32>,
    %c0_94 = arith.constant 0 : index
    %c7 = arith.constant 7 : index
    %c0_95 = arith.constant 0 : index
    %288 = vector.load %arg2[%c0_94, %c7, %c0_95] : memref<8x8x384xf32, #tpu.memory_space<vmem>>, vector<8x1x384xf32>
    %289 = vector.shape_cast %288 : vector<8x1x384xf32> to vector<8x384xf32>
    %290 = vector.extract_strided_slice %289 {offsets = [0, 0], sizes = [8, 128], strides = [1, 1]} : vector<8x384xf32> to vector<8x128xf32>
    %291 = vector.extract_strided_slice %289 {offsets = [0, 128], sizes = [8, 128], strides = [1, 1]} : vector<8x384xf32> to vector<8x128xf32>
    %292 = vector.extract_strided_slice %289 {offsets = [0, 256], sizes = [8, 128], strides = [1, 1]} : vector<8x384xf32> to vector<8x128xf32>
    %cst_96 = arith.constant dense<0.000000e+00> : vector<8x256xf32>
    %293 = tpu.matmul %284, %3, %cst_96 {dimension_numbers = #tpu.dot_dimension_numbers<[1], [0], [0], [1], [0, 0, 1, 1], [], []>} : vector<8x128xf32>, vector<128x256xf32>, vector<8x256xf32> -> vector<8x256xf32>
    %294 = vector.broadcast %5 : vector<1x256xf32> to vector<8x256xf32>
    %295 = arith.addf %293, %294 : vector<8x256xf32>
    %296 = vector.extract_strided_slice %295 {offsets = [0, 0], sizes = [8, 128], strides = [1, 1]} : vector<8x256xf32> to vector<8x128xf32>
    %297 = arith.addf %290, %296 : vector<8x128xf32>
    %298 = arith.negf %297 : vector<8x128xf32>
    %299 = math.exp %298 : vector<8x128xf32>
    %cst_97 = arith.constant 1.000000e+00 : f32
    %300 = vector.broadcast %cst_97 : f32 to vector<8x128xf32>
    %301 = arith.addf %300, %299 : vector<8x128xf32>
    %302 = arith.divf %300, %301 : vector<8x128xf32>
    %303 = vector.extract_strided_slice %295 {offsets = [0, 128], sizes = [8, 128], strides = [1, 1]} : vector<8x256xf32> to vector<8x128xf32>
    %304 = arith.addf %291, %303 : vector<8x128xf32>
    %305 = arith.negf %304 : vector<8x128xf32>
    %306 = math.exp %305 : vector<8x128xf32>
    %cst_98 = arith.constant 1.000000e+00 : f32
    %307 = vector.broadcast %cst_98 : f32 to vector<8x128xf32>
    %308 = arith.addf %307, %306 : vector<8x128xf32>
    %309 = arith.divf %307, %308 : vector<8x128xf32>
    %310 = arith.mulf %309, %284 : vector<8x128xf32>
    %cst_99 = arith.constant dense<0.000000e+00> : vector<8x128xf32>
    %311 = tpu.matmul %310, %4, %cst_99 {dimension_numbers = #tpu.dot_dimension_numbers<[1], [0], [0], [1], [0, 0, 1, 1], [], []>} : vector<8x128xf32>, vector<128x128xf32>, vector<8x128xf32> -> vector<8x128xf32>
    %312 = vector.broadcast %6 : vector<1x128xf32> to vector<8x128xf32>
    %313 = arith.addf %311, %312 : vector<8x128xf32>
    %314 = arith.addf %292, %313 : vector<8x128xf32>
    %315 = math.tanh %314 : vector<8x128xf32>
    %316 = arith.mulf %302, %284 : vector<8x128xf32>
    %cst_100 = arith.constant 1.000000e+00 : f32
    %317 = vector.broadcast %cst_100 : f32 to vector<8x128xf32>
    %318 = arith.subf %317, %302 : vector<8x128xf32>
    %319 = arith.mulf %318, %315 : vector<8x128xf32>
    %320 = arith.addf %316, %319 : vector<8x128xf32>
    %cst_101 = arith.constant -5.000000e+00 : f32
    %cst_102 = arith.constant 5.000000e+00 : f32
    %321 = vector.broadcast %cst_101 : f32 to vector<8x128xf32>
    %322 = arith.maximumf %321, %320 : vector<8x128xf32>
    %323 = vector.broadcast %cst_102 : f32 to vector<8x128xf32>
    %324 = arith.minimumf %323, %322 : vector<8x128xf32>
    %c0_103 = arith.constant 0 : index
    %c7_104 = arith.constant 7 : index
    %c0_105 = arith.constant 0 : index
    %325 = vector.load %arg8[%c0_103, %c7_104, %c0_105] : memref<8x8x128xf32, #tpu.memory_space<vmem>>, vector<8x1x128xf32>
    %326 = vector.shape_cast %325 : vector<8x1x128xf32> to vector<8x128xf32>
    %327 = vector.shape_cast %324 : vector<8x128xf32> to vector<8x1x128xf32>
    tpu.vector_store %arg8[%c0_103, %c7_104, %c0_105], %327 {strides = array<i32>} : memref<8x8x128xf32, #tpu.memory_space<vmem>>, vector<8x1x128xf32>,
    %c0_106 = arith.constant 0 : index
    %c0_107 = arith.constant 0 : index
    %328 = vector.load %arg9[%c0_106, %c0_107] : memref<8x128xf32, #tpu.memory_space<vmem>>, vector<8x128xf32>
    tpu.vector_store %arg9[%c0_106, %c0_107], %324 {strides = array<i32>} : memref<8x128xf32, #tpu.memory_space<vmem>>, vector<8x128xf32>,
    return
  }
  func.func @transform_0(%arg0: i32, %arg1: i32) -> (i32, i32, i32) {
    %c0_i32 = arith.constant 0 : i32
    %c0_i32_0 = arith.constant 0 : i32
    return %arg0, %arg1, %c0_i32 : i32, i32, i32
  }
  func.func @transform_1(%arg0: i32, %arg1: i32) -> (i32, i32) {
    %c0_i32 = arith.constant 0 : i32
    %c0_i32_0 = arith.constant 0 : i32
    return %arg0, %c0_i32 : i32, i32
  }
  func.func @transform_2(%arg0: i32, %arg1: i32) -> (i32, i32) {
    %c0_i32 = arith.constant 0 : i32
    %c0_i32_0 = arith.constant 0 : i32
    %c0_i32_1 = arith.constant 0 : i32
    return %c0_i32, %c0_i32_0 : i32, i32
  }
  func.func @transform_3(%arg0: i32, %arg1: i32) -> (i32, i32) {
    %c0_i32 = arith.constant 0 : i32
    %c0_i32_0 = arith.constant 0 : i32
    %c0_i32_1 = arith.constant 0 : i32
    return %c0_i32, %c0_i32_0 : i32, i32
  }
  func.func @transform_4(%arg0: i32, %arg1: i32) -> (i32, i32) {
    %c0_i32 = arith.constant 0 : i32
    %c0_i32_0 = arith.constant 0 : i32
    %c0_i32_1 = arith.constant 0 : i32
    return %c0_i32, %c0_i32_0 : i32, i32
  }
  func.func @transform_5(%arg0: i32, %arg1: i32) -> (i32, i32) {
    %c0_i32 = arith.constant 0 : i32
    %c0_i32_0 = arith.constant 0 : i32
    %c0_i32_1 = arith.constant 0 : i32
    return %c0_i32, %c0_i32_0 : i32, i32
  }
  func.func @transform_6(%arg0: i32, %arg1: i32) -> (i32, i32, i32) {
    %c0_i32 = arith.constant 0 : i32
    %c0_i32_0 = arith.constant 0 : i32
    return %arg0, %arg1, %c0_i32 : i32, i32, i32
  }
}

</mosaic_0001>

<llo_original>
// kernel: clipped_gru_forward.1
$region0: #{clipped_gru_forward.1}
  #allocation0 [shape = 'u32[]', space=smem, size = 0x4, offset = 0x4, fixed_abs, tag = 'smem constant byte address 0x4 - core index']
  #allocation1 [shape = 'u32[144,128]{1,0:T(1,128)}', space=vmem, size = 0x12000, scoped, tag = 'internal scratch']
  #allocation2 [shape = 'f32[8,128]{1,0:T(8,128)}', space=vmem, size = 0x1000, scoped, tag = 'scratch operand']
  %s0 = inlined_call_operand.vmem [shape: f32[8,8,384], index: 0, kind: input, shape index: {}]
  %s1 = inlined_call_operand.vmem [shape: f32[8,128], index: 1, kind: input, shape index: {}]
  %s2 = inlined_call_operand.vmem [shape: f32[128,256], index: 2, kind: input, shape index: {}]
  %s3 = inlined_call_operand.hbm [shape: f32[128,128], index: 3, kind: input, shape index: {}]
  %s4 = inlined_call_operand.vmem [shape: f32[1,256], index: 4, kind: input, shape index: {}]
  %s5 = inlined_call_operand.vmem [shape: f32[1,128], index: 5, kind: input, shape index: {}]
  %s6 = inlined_call_operand.vmem [shape: f32[8,8,128], index: 6, kind: output, shape index: {}]
  %s7 = sld [smem:[#allocation0]]
  $region42: #{clipped_gru_forward.1} parent=0
    _
  %s9 = ssub.s32 1, %s7
  %s10 = scalar_select 0, %s9, %s7
  $region1: #{clipped_gru_forward.1} parent=0
    #allocation3 [shape = 'u8[65536]{0}', space=vmem, size = 0x10000, scoped, tag = 'input window, operand 3, single buffered']
    #allocation4 [shape = 's32[1]{0}', space=sflag, size = 0x4, scoped, tag = 'scoped memory for clipped_gru_forward.1']
    %11 = vsyncpa [#allocation4], 0
    // Predicated region
    $region2: #{clipped_gru_forward.1} parent=1 // pred_check
      _
    $region3: #{clipped_gru_forward.1} parent=1 // pred_check_branch
      %13 = sbr.rel (0) target = $region5
    $region4: #{clipped_gru_forward.1} parent=1 // pred_region
      _
    $region5: #{clipped_gru_forward.1} parent=1 // pred_fallthru
      _
    // Predicated region
    $region6: #{clipped_gru_forward.1} parent=1 // pred_check
      _
    $region7: #{clipped_gru_forward.1} parent=1 // pred_check_branch
      %15 = sbr.rel (0) target = $region9
    $region8: #{clipped_gru_forward.1} parent=1 // pred_region
      _
    $region9: #{clipped_gru_forward.1} parent=1 // pred_fallthru
      _
    // Predicated region
    $region10: #{clipped_gru_forward.1} parent=1 // pred_check
      _
    $region11: #{clipped_gru_forward.1} parent=1 // pred_check_branch
      %17 = sbr.rel (0) target = $region13
    $region12: #{clipped_gru_forward.1} parent=1 // pred_region
      _
    $region13: #{clipped_gru_forward.1} parent=1 // pred_fallthru
      _
    // Predicated region
    $region14: #{clipped_gru_forward.1} parent=1 // pred_check
      _
    $region15: #{clipped_gru_forward.1} parent=1 // pred_check_branch
      %19 = sbr.rel (0) target = $region17
    $region16: #{clipped_gru_forward.1} parent=1 // pred_region
      %s21 = ssub.s32 2048, 2048
      %22 = vsyncadd [#allocation4], %s21
      %s23 = sshll.u32 [#allocation3], 4
      %s24 = int_to_ptr.vmem [resolvable:$true] %s23
      %29 = dma.hbm_to_vmem [thread:$0]  %s3, 2048, %s24, [#allocation4], 128, 128, 8
    $region17: #{clipped_gru_forward.1} parent=1 // pred_fallthru
      _
    // Predicated region
    $region18: #{clipped_gru_forward.1} parent=1 // pred_check
      _
    $region19: #{clipped_gru_forward.1} parent=1 // pred_check_branch
      %31 = sbr.rel (0) target = $region21
    $region20: #{clipped_gru_forward.1} parent=1 // pred_region
      _
    $region21: #{clipped_gru_forward.1} parent=1 // pred_fallthru
      _
    // Predicated region
    $region22: #{clipped_gru_forward.1} parent=1 // pred_check
      _
    $region23: #{clipped_gru_forward.1} parent=1 // pred_check_branch
      %33 = sbr.rel (0) target = $region25
    $region24: #{clipped_gru_forward.1} parent=1 // pred_region
      _
    $region25: #{clipped_gru_forward.1} parent=1 // pred_fallthru
      _
    // Predicated region
    $region26: #{clipped_gru_forward.1} parent=1 // pred_check
      _
    $region27: #{clipped_gru_forward.1} parent=1 // pred_check_branch
      %35 = sbr.rel (0) target = $region29
    $region28: #{clipped_gru_forward.1} parent=1 // pred_region
      %36 = dma.done [#allocation4], 2048
    $region29: #{clipped_gru_forward.1} parent=1 // pred_fallthru
      _
    %p37 = scmp.eq.s32.totalorder 0, 0
    // Predicated region
    $region30: #{clipped_gru_forward.1} parent=1 // pred_check
      %p38 = pneg %p37
    $region31: #{clipped_gru_forward.1} parent=1 // pred_check_branch
      %40 = sbr.rel (%p38) target = $region33
    $region32: #{clipped_gru_forward.1} parent=1 // pred_region
      %v41 = vld [vmem:[%s1] sm:$0xff]
      %42 = vst [vmem:[#allocation2] sm:$0xff] %v41
    $region33: #{clipped_gru_forward.1} parent=1 // pred_fallthru
      _
    %v43 = vld [vmem:[%s2] sm:$0xff]
    %v44 = vld [vmem:[%s2 + $0x8] sm:$0xff]
    %v45 = vld [vmem:[%s2 + $0x10] sm:$0xff]
    %v46 = vld [vmem:[%s2 + $0x18] sm:$0xff]
    %v47 = vld [vmem:[%s2 + $0x20] sm:$0xff]
    %v48 = vld [vmem:[%s2 + $0x28] sm:$0xff]
    %v49 = vld [vmem:[%s2 + $0x30] sm:$0xff]
    %v50 = vld [vmem:[%s2 + $0x38] sm:$0xff]
    %v51 = vld [vmem:[%s2 + $0x40] sm:$0xff]
    %v52 = vld [vmem:[%s2 + $0x48] sm:$0xff]
    %v53 = vld [vmem:[%s2 + $0x50] sm:$0xff]
    %v54 = vld [vmem:[%s2 + $0x58] sm:$0xff]
    %v55 = vld [vmem:[%s2 + $0x60] sm:$0xff]
    %v56 = vld [vmem:[%s2 + $0x68] sm:$0xff]
    %v57 = vld [vmem:[%s2 + $0x70] sm:$0xff]
    %v58 = vld [vmem:[%s2 + $0x78] sm:$0xff]
    %v59 = vld [vmem:[%s2 + $0x80] sm:$0xff]
    %v60 = vld [vmem:[%s2 + $0x88] sm:$0xff]
    %v61 = vld [vmem:[%s2 + $0x90] sm:$0xff]
    %v62 = vld [vmem:[%s2 + $0x98] sm:$0xff]
    %v63 = vld [vmem:[%s2 + $0xa0] sm:$0xff]
    %v64 = vld [vmem:[%s2 + $0xa8] sm:$0xff]
    %v65 = vld [vmem:[%s2 + $0xb0] sm:$0xff]
    %v66 = vld [vmem:[%s2 + $0xb8] sm:$0xff]
    %v67 = vld [vmem:[%s2 + $0xc0] sm:$0xff]
    %v68 = vld [vmem:[%s2 + $0xc8] sm:$0xff]
    %v69 = vld [vmem:[%s2 + $0xd0] sm:$0xff]
    %v70 = vld [vmem:[%s2 + $0xd8] sm:$0xff]
    %v71 = vld [vmem:[%s2 + $0xe0] sm:$0xff]
    %v72 = vld [vmem:[%s2 + $0xe8] sm:$0xff]
    %v73 = vld [vmem:[%s2 + $0xf0] sm:$0xff]
    %v74 = vld [vmem:[%s2 + $0xf8] sm:$0xff]
    %v75 = vld [vmem:[#allocation3] sm:$0xff]
    %v76 = vld [vmem:[#allocation3 + $0x8] sm:$0xff]
    %v77 = vld [vmem:[#allocation3 + $0x10] sm:$0xff]
    %v78 = vld [vmem:[#allocation3 + $0x18] sm:$0xff]
    %v79 = vld [vmem:[#allocation3 + $0x20] sm:$0xff]
    %v80 = vld [vmem:[#allocation3 + $0x28] sm:$0xff]
    %v81 = vld [vmem:[#allocation3 + $0x30] sm:$0xff]
    %v82 = vld [vmem:[#allocation3 + $0x38] sm:$0xff]
    %v83 = vld [vmem:[#allocation3 + $0x40] sm:$0xff]
    %v84 = vld [vmem:[#allocation3 + $0x48] sm:$0xff]
    %v85 = vld [vmem:[#allocation3 + $0x50] sm:$0xff]
    %v86 = vld [vmem:[#allocation3 + $0x58] sm:$0xff]
    %v87 = vld [vmem:[#allocation3 + $0x60] sm:$0xff]
    %v88 = vld [vmem:[#allocation3 + $0x68] sm:$0xff]
    %v89 = vld [vmem:[#allocation3 + $0x70] sm:$0xff]
    %v90 = vld [vmem:[#allocation3 + $0x78] sm:$0xff]
    %v91 = vld [vmem:[%s4] sm:$0x3]
    %v92 = vld [vmem:[%s5] sm:$0x1]
    %v93 = vld [vmem:[#allocation2] sm:$0xff]
    %v94 = vld [vmem:[%s0] ss:$8 sm:$0x7]
    %s95 = scalar_lea.vmem %s0, 24
    %v96 = vld [vmem:[%s95] ss:$8 sm:$0x7]
    %s97 = scalar_lea.vmem %s0, 48
    %v98 = vld [vmem:[%s97] ss:$8 sm:$0x7]
    %s99 = scalar_lea.vmem %s0, 72
    %v100 = vld [vmem:[%s99] ss:$8 sm:$0x7]
    %s101 = scalar_lea.vmem %s0, 96
    %v102 = vld [vmem:[%s101] ss:$8 sm:$0x7]
    %s103 = scalar_lea.vmem %s0, 120
    %v104 = vld [vmem:[%s103] ss:$8 sm:$0x7]
    %s105 = scalar_lea.vmem %s0, 144
    %v106 = vld [vmem:[%s105] ss:$8 sm:$0x7]
    %s107 = scalar_lea.vmem %s0, 168
    %v108 = vld [vmem:[%s107] ss:$8 sm:$0x7]
    %v110 = vlaneseq
    %v111 = vshrl.u32 %v110, 7
    %v112 = vsub.s32 0, %v111
    %v113 = vrot.slane %v91, %v112
    %v114 = vlaneseq
    %v115 = vshrl.u32 %v114, 7
    %v116 = vsub.s32 1, %v115
    %v117 = vrot.slane %v91, %v116
    %120 = vmatprep.subr.mxu0 %v44
    %121 = vmatpush1.msra.mxu0 %v43
    %122 = vmatprep.subr.mxu0 %v46
    %123 = vmatpush1.msra.mxu0 %v45
    %124 = vmatprep.subr.mxu0 %v48
    %125 = vmatpush1.msra.mxu0 %v47
    %126 = vmatprep.subr.mxu0 %v50
    %127 = vmatpush1.msra.mxu0 %v49
    %128 = vmatprep.subr.mxu0 %v52
    %129 = vmatpush1.msra.mxu0 %v51
    %130 = vmatprep.subr.mxu0 %v54
    %131 = vmatpush1.msra.mxu0 %v53
    %132 = vmatprep.subr.mxu0 %v56
    %133 = vmatpush1.msra.mxu0 %v55
    %134 = vmatprep.subr.mxu0 %v58
    %135 = vmatpush1.msra.mxu0 %v57
    %136 = vmatprep.subr.mxu0 %v60
    %137 = vmatpush1.msra.mxu0 %v59
    %138 = vmatprep.subr.mxu0 %v62
    %139 = vmatpush1.msra.mxu0 %v61
    %140 = vmatprep.subr.mxu0 %v64
    %141 = vmatpush1.msra.mxu0 %v63
    %142 = vmatprep.subr.mxu0 %v66
    %143 = vmatpush1.msra.mxu0 %v65
    %144 = vmatprep.subr.mxu0 %v68
    %145 = vmatpush1.msra.mxu0 %v67
    %146 = vmatprep.subr.mxu0 %v70
    %147 = vmatpush1.msra.mxu0 %v69
    %148 = vmatprep.subr.mxu0 %v72
    %149 = vmatpush1.msra.mxu0 %v71
    %150 = vmatprep.subr.mxu0 %v74
    %151 = vmatpush1.msra.mxu0 %v73
    %152 = vmatprep.subr.mxu0 0.0
    %153 = vmatpush1.msra.mxu0 0.0
    %154 = vmatprep.subr.mxu0 0.0
    %155 = vmatpush1.msra.mxu0 0.0
    %156 = vmatprep.subr.mxu0 0.0
    %157 = vmatpush1.msra.mxu0 0.0
    %158 = vmatprep.subr.mxu0 0.0
    %159 = vmatpush1.msra.mxu0 0.0
    %160 = vmatprep.subr.mxu0 0.0
    %161 = vmatpush1.msra.mxu0 0.0
    %162 = vmatprep.subr.mxu0 0.0
    %163 = vmatpush1.msra.mxu0 0.0
    %164 = vmatprep.subr.mxu0 0.0
    %165 = vmatpush1.msra.mxu0 0.0
    %166 = vmatprep.subr.mxu0 0.0
    %167 = vmatpush1.msra.mxu0 0.0
    %168 = vmatprep.subr.mxu0 0.0
    %169 = vmatpush1.msra.mxu0 0.0
    %170 = vmatprep.subr.mxu0 0.0
    %171 = vmatpush1.msra.mxu0 0.0
    %172 = vmatprep.subr.mxu0 0.0
    %173 = vmatpush1.msra.mxu0 0.0
    %174 = vmatprep.subr.mxu0 0.0
    %175 = vmatpush1.msra.mxu0 0.0
    %176 = vmatprep.subr.mxu0 0.0
    %177 = vmatpush1.msra.mxu0 0.0
    %178 = vmatprep.subr.mxu0 0.0
    %179 = vmatpush1.msra.mxu0 0.0
    %180 = vmatprep.subr.mxu0 0.0
    %181 = vmatpush1.msra.mxu0 0.0
    %182 = vmatprep.subr.mxu0 0.0
    %183 = vmatpush1.msra.mxu0 0.0
    %184 = vmatprep.mubr.f32.mxu0 0.0
    %185 = vmatmul.mubr.f32.gmra.mrb[0].mxu0 %v93
    %v186 = vpop.f32.mrb[0].mxu0
    %v187 = vadd.f32 %v113, %v186
    %v188 = vpop.f32.mrb[0].mxu0
    %v189 = vadd.f32 %v117, %v188
    %190 = vdwg.mxu0
    %v192 = vcombine.high %v187, %v187
    %v194 = vunpack.c.l.s4 1966171168
    %v195 = vunpack.c.0.s8 %v194
    %v196 = vlaneseq
    %v197 = vshrl.u32 %v196, 7
    %v198 = vsub.s32 %v195, %v197
    %v199 = vrot.slane %v187, %v198
    %v201 = vunpack.c.l.s4 1966171168
    %v202 = vunpack.c.0.s8 %v201
    %v203 = vlaneseq
    %v204 = vshrl.u32 %v203, 7
    %v205 = vsub.s32 %v202, %v204
    %v206 = vrot.slane %v192, %v205
    %v207 = vcombine.high %v199, %v199
    %v208 = vcombine.high %v206, %v206
    %v210 = vunpack.c.l.s4 1966171168
    %v211 = vunpack.c.0.s8 %v210
    %v212 = vlaneseq
    %v213 = vshrl.u32 %v212, 7
    %v214 = vsub.s32 %v211, %v213
    %v215 = vrot.slane %v199, %v214
    %v217 = vunpack.c.l.s4 1966171168
    %v218 = vunpack.c.0.s8 %v217
    %v219 = vlaneseq
    %v220 = vshrl.u32 %v219, 7
    %v221 = vsub.s32 %v218, %v220
    %v222 = vrot.slane %v206, %v221
    %v224 = vunpack.c.l.s4 1966171168
    %v225 = vunpack.c.0.s8 %v224
    %v226 = vlaneseq
    %v227 = vshrl.u32 %v226, 7
    %v228 = vsub.s32 %v225, %v227
    %v229 = vrot.slane %v207, %v228
    %v231 = vunpack.c.l.s4 1966171168
    %v232 = vunpack.c.0.s8 %v231
    %v233 = vlaneseq
    %v234 = vshrl.u32 %v233, 7
    %v235 = vsub.s32 %v232, %v234
    %v236 = vrot.slane %v208, %v235
    %v237 = vcombine.high %v215, %v215
    %v238 = vcombine.high %v222, %v222
    %v239 = vcombine.high %v229, %v229
    %v240 = vcombine.high %v236, %v236
    %v249 = vadd.f32 %v94, %v215
    %v250 = vadd.f32 %v96, %v229
    %v251 = vadd.f32 %v98, %v237
    %v252 = vadd.f32 %v100, %v239
    %v253 = vadd.f32 %v102, %v222
    %v254 = vadd.f32 %v104, %v236
    %v255 = vadd.f32 %v106, %v238
    %v256 = vadd.f32 %v108, %v240
    %v257 = vxor.u32 %v249, 2147483648
    %v258 = vxor.u32 %v250, 2147483648
    %v259 = vxor.u32 %v251, 2147483648
    %v260 = vxor.u32 %v252, 2147483648
    %v261 = vxor.u32 %v253, 2147483648
    %v262 = vxor.u32 %v254, 2147483648
    %v263 = vxor.u32 %v255, 2147483648
    %v264 = vxor.u32 %v256, 2147483648
    %v265 = vmul.f32 %v257, 1.442695
    %v266 = vpow.pop %v265
    %v267 = vmul.f32 %v258, 1.442695
    %v268 = vpow.pop %v267
    %v269 = vmul.f32 %v259, 1.442695
    %v270 = vpow.pop %v269
    %v271 = vmul.f32 %v260, 1.442695
    %v272 = vpow.pop %v271
    %v273 = vmul.f32 %v261, 1.442695
    %v274 = vpow.pop %v273
    %v275 = vmul.f32 %v262, 1.442695
    %v276 = vpow.pop %v275
    %v277 = vmul.f32 %v263, 1.442695
    %v278 = vpow.pop %v277
    %v279 = vmul.f32 %v264, 1.442695
    %v280 = vpow.pop %v279
    %v281 = vadd.f32 %v266, 1.0
    %v282 = vadd.f32 %v268, 1.0
    %v283 = vadd.f32 %v270, 1.0
    %v284 = vadd.f32 %v272, 1.0
    %v285 = vadd.f32 %v274, 1.0
    %v286 = vadd.f32 %v276, 1.0
    %v287 = vadd.f32 %v278, 1.0
    %v288 = vadd.f32 %v280, 1.0
    %v289 = vrcp.pop %v281
    %v290 = vmul.f32 1.0, %v289
    %v291 = vrcp.pop %v282
    %v292 = vmul.f32 1.0, %v291
    %v293 = vrcp.pop %v283
    %v294 = vmul.f32 1.0, %v293
    %v295 = vrcp.pop %v284
    %v296 = vmul.f32 1.0, %v295
    %v297 = vrcp.pop %v285
    %v298 = vmul.f32 1.0, %v297
    %v299 = vrcp.pop %v286
    %v300 = vmul.f32 1.0, %v299
    %v301 = vrcp.pop %v287
    %v302 = vmul.f32 1.0, %v301
    %v303 = vrcp.pop %v288
    %v304 = vmul.f32 1.0, %v303
    %v313 = vrot.slane %v94, 1
    %v314 = vrot.slane %v96, 1
    %v315 = vrot.slane %v98, 1
    %v316 = vrot.slane %v100, 1
    %v317 = vrot.slane %v102, 1
    %v318 = vrot.slane %v104, 1
    %v319 = vrot.slane %v106, 1
    %v320 = vrot.slane %v108, 1
    %v330 = vcombine.high %v189, %v189
    %v332 = vunpack.c.l.s4 1966171168
    %v333 = vunpack.c.0.s8 %v332
    %v334 = vlaneseq
    %v335 = vshrl.u32 %v334, 7
    %v336 = vsub.s32 %v333, %v335
    %v337 = vrot.slane %v189, %v336
    %v339 = vunpack.c.l.s4 1966171168
    %v340 = vunpack.c.0.s8 %v339
    %v341 = vlaneseq
    %v342 = vshrl.u32 %v341, 7
    %v343 = vsub.s32 %v340, %v342
    %v344 = vrot.slane %v330, %v343
    %v345 = vcombine.high %v337, %v337
    %v346 = vcombine.high %v344, %v344
    %v348 = vunpack.c.l.s4 1966171168
    %v349 = vunpack.c.0.s8 %v348
    %v350 = vlaneseq
    %v351 = vshrl.u32 %v350, 7
    %v352 = vsub.s32 %v349, %v351
    %v353 = vrot.slane %v337, %v352
    %v355 = vunpack.c.l.s4 1966171168
    %v356 = vunpack.c.0.s8 %v355
    %v357 = vlaneseq
    %v358 = vshrl.u32 %v357, 7
    %v359 = vsub.s32 %v356, %v358
    %v360 = vrot.slane %v344, %v359
    %v362 = vunpack.c.l.s4 1966171168
    %v363 = vunpack.c.0.s8 %v362
    %v364 = vlaneseq
    %v365 = vshrl.u32 %v364, 7
    %v366 = vsub.s32 %v363, %v365
    %v367 = vrot.slane %v345, %v366
    %v369 = vunpack.c.l.s4 1966171168
    %v370 = vunpack.c.0.s8 %v369
    %v371 = vlaneseq
    %v372 = vshrl.u32 %v371, 7
    %v373 = vsub.s32 %v370, %v372
    %v374 = vrot.slane %v346, %v373
    %v375 = vcombine.high %v353, %v353
    %v376 = vcombine.high %v360, %v360
    %v377 = vcombine.high %v367, %v367
    %v378 = vcombine.high %v374, %v374
    %v387 = vadd.f32 %v313, %v353
    %v388 = vadd.f32 %v314, %v367
    %v389 = vadd.f32 %v315, %v375
    %v390 = vadd.f32 %v316, %v377
    %v391 = vadd.f32 %v317, %v360
    %v392 = vadd.f32 %v318, %v374
    %v393 = vadd.f32 %v319, %v376
    %v394 = vadd.f32 %v320, %v378
    %v395 = vxor.u32 %v387, 2147483648
    %v396 = vxor.u32 %v388, 2147483648
    %v397 = vxor.u32 %v389, 2147483648
    %v398 = vxor.u32 %v390, 2147483648
    %v399 = vxor.u32 %v391, 2147483648
    %v400 = vxor.u32 %v392, 2147483648
    %v401 = vxor.u32 %v393, 2147483648
    %v402 = vxor.u32 %v394, 2147483648
    %v403 = vmul.f32 %v395, 1.442695
    %v404 = vpow.pop %v403
    %v405 = vmul.f32 %v396, 1.442695
    %v406 = vpow.pop %v405
    %v407 = vmul.f32 %v397, 1.442695
    %v408 = vpow.pop %v407
    %v409 = vmul.f32 %v398, 1.442695
    %v410 = vpow.pop %v409
    %v411 = vmul.f32 %v399, 1.442695
    %v412 = vpow.pop %v411
    %v413 = vmul.f32 %v400, 1.442695
    %v414 = vpow.pop %v413
    %v415 = vmul.f32 %v401, 1.442695
    %v416 = vpow.pop %v415
    %v417 = vmul.f32 %v402, 1.442695
    %v418 = vpow.pop %v417
    %v419 = vadd.f32 %v404, 1.0
    %v420 = vadd.f32 %v406, 1.0
    %v421 = vadd.f32 %v408, 1.0
    %v422 = vadd.f32 %v410, 1.0
    %v423 = vadd.f32 %v412, 1.0
    %v424 = vadd.f32 %v414, 1.0
    %v425 = vadd.f32 %v416, 1.0
    %v426 = vadd.f32 %v418, 1.0
    %v427 = vrcp.pop %v419
    %v428 = vmul.f32 1.0, %v427
    %v429 = vrcp.pop %v420
    %v430 = vmul.f32 1.0, %v429
    %v431 = vrcp.pop %v421
    %v432 = vmul.f32 1.0, %v431
    %v433 = vrcp.pop %v422
    %v434 = vmul.f32 1.0, %v433
    %v435 = vrcp.pop %v423
    %v436 = vmul.f32 1.0, %v435
    %v437 = vrcp.pop %v424
    %v438 = vmul.f32 1.0, %v437
    %v439 = vrcp.pop %v425
    %v440 = vmul.f32 1.0, %v439
    %v441 = vrcp.pop %v426
    %v442 = vmul.f32 1.0, %v441
    %v444 = vcombine.high %v93, %v93
    %v446 = vunpack.c.l.s4 1966171168
    %v447 = vunpack.c.0.s8 %v446
    %v448 = vlaneseq
    %v449 = vshrl.u32 %v448, 7
    %v450 = vsub.s32 %v447, %v449
    %v451 = vrot.slane %v93, %v450
    %v453 = vunpack.c.l.s4 1966171168
    %v454 = vunpack.c.0.s8 %v453
    %v455 = vlaneseq
    %v456 = vshrl.u32 %v455, 7
    %v457 = vsub.s32 %v454, %v456
    %v458 = vrot.slane %v444, %v457
    %v459 = vcombine.high %v451, %v451
    %v460 = vcombine.high %v458, %v458
    %v462 = vunpack.c.l.s4 1966171168
    %v463 = vunpack.c.0.s8 %v462
    %v464 = vlaneseq
    %v465 = vshrl.u32 %v464, 7
    %v466 = vsub.s32 %v463, %v465
    %v467 = vrot.slane %v451, %v466
    %v469 = vunpack.c.l.s4 1966171168
    %v470 = vunpack.c.0.s8 %v469
    %v471 = vlaneseq
    %v472 = vshrl.u32 %v471, 7
    %v473 = vsub.s32 %v470, %v472
    %v474 = vrot.slane %v458, %v473
    %v476 = vunpack.c.l.s4 1966171168
    %v477 = vunpack.c.0.s8 %v476
    %v478 = vlaneseq
    %v479 = vshrl.u32 %v478, 7
    %v480 = vsub.s32 %v477, %v479
    %v481 = vrot.slane %v459, %v480
    %v483 = vunpack.c.l.s4 1966171168
    %v484 = vunpack.c.0.s8 %v483
    %v485 = vlaneseq
    %v486 = vshrl.u32 %v485, 7
    %v487 = vsub.s32 %v484, %v486
    %v488 = vrot.slane %v460, %v487
    %v489 = vcombine.high %v467, %v467
    %v490 = vcombine.high %v474, %v474
    %v491 = vcombine.high %v481, %v481
    %v492 = vcombine.high %v488, %v488
    %v501 = vmul.f32 %v428, %v467
    %v502 = vmul.f32 %v430, %v481
    %v503 = vmul.f32 %v432, %v489
    %v504 = vmul.f32 %v434, %v491
    %v505 = vmul.f32 %v436, %v474
    %v506 = vmul.f32 %v438, %v488
    %v507 = vmul.f32 %v440, %v490
    %v508 = vmul.f32 %v442, %v492
    %v510 = vlaneseq
    %v511 = vshrl.u32 %v510, 7
    %v512 = vsub.s32 0, %v511
    %v513 = vrot.slane %v92, %v512
    %v523 = vcombine.low %v501, %v502
    %v524 = vcombine.low %v503, %v504
    %v525 = vcombine.low %v505, %v506
    %v526 = vcombine.low %v507, %v508
    %v528 = vunpack.c.l.s4 1966171168
    %v529 = vunpack.c.0.s8 %v528
    %v530 = vlaneseq
    %v531 = vshrl.u32 %v530, 7
    %v532 = vsub.s32 %v529, %v531
    %v533 = vrot.slane %v523, %v532
    %v535 = vunpack.c.l.s4 1966171168
    %v536 = vunpack.c.0.s8 %v535
    %v537 = vlaneseq
    %v538 = vshrl.u32 %v537, 7
    %v539 = vsub.s32 %v536, %v538
    %v540 = vrot.slane %v524, %v539
    %v542 = vunpack.c.l.s4 1966171168
    %v543 = vunpack.c.0.s8 %v542
    %v544 = vlaneseq
    %v545 = vshrl.u32 %v544, 7
    %v546 = vsub.s32 %v543, %v545
    %v547 = vrot.slane %v525, %v546
    %v549 = vunpack.c.l.s4 1966171168
    %v550 = vunpack.c.0.s8 %v549
    %v551 = vlaneseq
    %v552 = vshrl.u32 %v551, 7
    %v553 = vsub.s32 %v550, %v552
    %v554 = vrot.slane %v526, %v553
    %v555 = vcombine.low %v533, %v540
    %v556 = vcombine.low %v547, %v554
    %v558 = vunpack.c.l.s4 1966171168
    %v559 = vunpack.c.0.s8 %v558
    %v560 = vlaneseq
    %v561 = vshrl.u32 %v560, 7
    %v562 = vsub.s32 %v559, %v561
    %v563 = vrot.slane %v555, %v562
    %v565 = vunpack.c.l.s4 1966171168
    %v566 = vunpack.c.0.s8 %v565
    %v567 = vlaneseq
    %v568 = vshrl.u32 %v567, 7
    %v569 = vsub.s32 %v566, %v568
    %v570 = vrot.slane %v556, %v569
    %v571 = vcombine.low %v563, %v570
    %573 = vmatprep.subr.mxu0 0.0
    %574 = vmatpush1.msra.mxu0 %v75
    %575 = vmatprep.subr.mxu0 0.0
    %576 = vmatpush1.msra.mxu0 %v76
    %577 = vmatprep.subr.mxu0 0.0
    %578 = vmatpush1.msra.mxu0 %v77
    %579 = vmatprep.subr.mxu0 0.0
    %580 = vmatpush1.msra.mxu0 %v78
    %581 = vmatprep.subr.mxu0 0.0
    %582 = vmatpush1.msra.mxu0 %v79
    %583 = vmatprep.subr.mxu0 0.0
    %584 = vmatpush1.msra.mxu0 %v80
    %585 = vmatprep.subr.mxu0 0.0
    %586 = vmatpush1.msra.mxu0 %v81
    %587 = vmatprep.subr.mxu0 0.0
    %588 = vmatpush1.msra.mxu0 %v82
    %589 = vmatprep.subr.mxu0 0.0
    %590 = vmatpush1.msra.mxu0 %v83
    %591 = vmatprep.subr.mxu0 0.0
    %592 = vmatpush1.msra.mxu0 %v84
    %593 = vmatprep.subr.mxu0 0.0
    %594 = vmatpush1.msra.mxu0 %v85
    %595 = vmatprep.subr.mxu0 0.0
    %596 = vmatpush1.msra.mxu0 %v86
    %597 = vmatprep.subr.mxu0 0.0
    %598 = vmatpush1.msra.mxu0 %v87
    %599 = vmatprep.subr.mxu0 0.0
    %600 = vmatpush1.msra.mxu0 %v88
    %601 = vmatprep.subr.mxu0 0.0
    %602 = vmatpush1.msra.mxu0 %v89
    %603 = vmatprep.subr.mxu0 0.0
    %604 = vmatpush1.msra.mxu0 %v90
    %605 = vmatprep.subr.mxu0 0.0
    %606 = vmatpush1.msra.mxu0 0.0
    %607 = vmatprep.subr.mxu0 0.0
    %608 = vmatpush1.msra.mxu0 0.0
    %609 = vmatprep.subr.mxu0 0.0
    %610 = vmatpush1.msra.mxu0 0.0
    %611 = vmatprep.subr.mxu0 0.0
    %612 = vmatpush1.msra.mxu0 0.0
    %613 = vmatprep.subr.mxu0 0.0
    %614 = vmatpush1.msra.mxu0 0.0
    %615 = vmatprep.subr.mxu0 0.0
    %616 = vmatpush1.msra.mxu0 0.0
    %617 = vmatprep.subr.mxu0 0.0
    %618 = vmatpush1.msra.mxu0 0.0
    %619 = vmatprep.subr.mxu0 0.0
    %620 = vmatpush1.msra.mxu0 0.0
    %621 = vmatprep.subr.mxu0 0.0
    %622 = vmatpush1.msra.mxu0 0.0
    %623 = vmatprep.subr.mxu0 0.0
    %624 = vmatpush1.msra.mxu0 0.0
    %625 = vmatprep.subr.mxu0 0.0
    %626 = vmatpush1.msra.mxu0 0.0
    %627 = vmatprep.subr.mxu0 0.0
    %628 = vmatpush1.msra.mxu0 0.0
    %629 = vmatprep.subr.mxu0 0.0
    %630 = vmatpush1.msra.mxu0 0.0
    %631 = vmatprep.subr.mxu0 0.0
    %632 = vmatpush1.msra.mxu0 0.0
    %633 = vmatprep.subr.mxu0 0.0
    %634 = vmatpush1.msra.mxu0 0.0
    %635 = vmatprep.subr.mxu0 0.0
    %636 = vmatpush1.msra.mxu0 0.0
    %637 = vmatprep.mubr.f32.mxu0 0.0
    %638 = vmatmul.mubr.f32.gmra.mrb[0].mxu0 %v571
    %v639 = vpop.f32.mrb[0].mxu0
    %v640 = vadd.f32 %v513, %v639
    %v641 = vpop.f32.mrb[0].mxu0
    %642 = vdwg.mxu0
    %v643 = vrot.slane %v94, 2
    %v644 = vrot.slane %v96, 2
    %v645 = vrot.slane %v98, 2
    %v646 = vrot.slane %v100, 2
    %v647 = vrot.slane %v102, 2
    %v648 = vrot.slane %v104, 2
    %v649 = vrot.slane %v106, 2
    %v650 = vrot.slane %v108, 2
    %v660 = vcombine.high %v640, %v640
    %v662 = vunpack.c.l.s4 1966171168
    %v663 = vunpack.c.0.s8 %v662
    %v664 = vlaneseq
    %v665 = vshrl.u32 %v664, 7
    %v666 = vsub.s32 %v663, %v665
    %v667 = vrot.slane %v640, %v666
    %v669 = vunpack.c.l.s4 1966171168
    %v670 = vunpack.c.0.s8 %v669
    %v671 = vlaneseq
    %v672 = vshrl.u32 %v671, 7
    %v673 = vsub.s32 %v670, %v672
    %v674 = vrot.slane %v660, %v673
    %v675 = vcombine.high %v667, %v667
    %v676 = vcombine.high %v674, %v674
    %v678 = vunpack.c.l.s4 1966171168
    %v679 = vunpack.c.0.s8 %v678
    %v680 = vlaneseq
    %v681 = vshrl.u32 %v680, 7
    %v682 = vsub.s32 %v679, %v681
    %v683 = vrot.slane %v667, %v682
    %v685 = vunpack.c.l.s4 1966171168
    %v686 = vunpack.c.0.s8 %v685
    %v687 = vlaneseq
    %v688 = vshrl.u32 %v687, 7
    %v689 = vsub.s32 %v686, %v688
    %v690 = vrot.slane %v674, %v689
    %v692 = vunpack.c.l.s4 1966171168
    %v693 = vunpack.c.0.s8 %v692
    %v694 = vlaneseq
    %v695 = vshrl.u32 %v694, 7
    %v696 = vsub.s32 %v693, %v695
    %v697 = vrot.slane %v675, %v696
    %v699 = vunpack.c.l.s4 1966171168
    %v700 = vunpack.c.0.s8 %v699
    %v701 = vlaneseq
    %v702 = vshrl.u32 %v701, 7
    %v703 = vsub.s32 %v700, %v702
    %v704 = vrot.slane %v676, %v703
    %v705 = vcombine.high %v683, %v683
    %v706 = vcombine.high %v690, %v690
    %v707 = vcombine.high %v697, %v697
    %v708 = vcombine.high %v704, %v704
    %v717 = vadd.f32 %v643, %v683
    %v718 = vadd.f32 %v644, %v697
    %v719 = vadd.f32 %v645, %v705
    %v720 = vadd.f32 %v646, %v707
    %v721 = vadd.f32 %v647, %v690
    %v722 = vadd.f32 %v648, %v704
    %v723 = vadd.f32 %v649, %v706
    %v724 = vadd.f32 %v650, %v708
    %v725 = vtanh.pop %v717
    %v726 = vtanh.pop %v718
    %v727 = vtanh.pop %v719
    %v728 = vtanh.pop %v720
    %v729 = vtanh.pop %v721
    %v730 = vtanh.pop %v722
    %v731 = vtanh.pop %v723
    %v732 = vtanh.pop %v724
    %v733 = vmul.f32 %v290, %v467
    %v734 = vmul.f32 %v292, %v481
    %v735 = vmul.f32 %v294, %v489
    %v736 = vmul.f32 %v296, %v491
    %v737 = vmul.f32 %v298, %v474
    %v738 = vmul.f32 %v300, %v488
    %v739 = vmul.f32 %v302, %v490
    %v740 = vmul.f32 %v304, %v492
    %v741 = vsub.f32 1.0, %v290
    %v742 = vsub.f32 1.0, %v292
    %v743 = vsub.f32 1.0, %v294
    %v744 = vsub.f32 1.0, %v296
    %v745 = vsub.f32 1.0, %v298
    %v746 = vsub.f32 1.0, %v300
    %v747 = vsub.f32 1.0, %v302
    %v748 = vsub.f32 1.0, %v304
    %v749 = vmul.f32 %v741, %v725
    %v750 = vmul.f32 %v742, %v726
    %v751 = vmul.f32 %v743, %v727
    %v752 = vmul.f32 %v744, %v728
    %v753 = vmul.f32 %v745, %v729
    %v754 = vmul.f32 %v746, %v730
    %v755 = vmul.f32 %v747, %v731
    %v756 = vmul.f32 %v748, %v732
    %v757 = vadd.f32 %v733, %v749
    %v758 = vadd.f32 %v734, %v750
    %v759 = vadd.f32 %v735, %v751
    %v760 = vadd.f32 %v736, %v752
    %v761 = vadd.f32 %v737, %v753
    %v762 = vadd.f32 %v738, %v754
    %v763 = vadd.f32 %v739, %v755
    %v764 = vadd.f32 %v740, %v756
    %v765 = vmax.f32 %v757, -5.0
    %v766 = vmax.f32 %v758, -5.0
    %v767 = vmax.f32 %v759, -5.0
    %v768 = vmax.f32 %v760, -5.0
    %v769 = vmax.f32 %v761, -5.0
    %v770 = vmax.f32 %v762, -5.0
    %v771 = vmax.f32 %v763, -5.0
    %v772 = vmax.f32 %v764, -5.0
    %v773 = vmin.f32 %v765, 5.0
    %v774 = vmin.f32 %v766, 5.0
    %v775 = vmin.f32 %v767, 5.0
    %v776 = vmin.f32 %v768, 5.0
    %v777 = vmin.f32 %v769, 5.0
    %v778 = vmin.f32 %v770, 5.0
    %v779 = vmin.f32 %v771, 5.0
    %v780 = vmin.f32 %v772, 5.0
    %781 = vst [vmem:[%s6] sm:$0x1] %v773
    %782 = vst [vmem:[%s6 + $0x8] sm:$0x1] %v774
    %783 = vst [vmem:[%s6 + $0x10] sm:$0x1] %v775
    %784 = vst [vmem:[%s6 + $0x18] sm:$0x1] %v776
    %785 = vst [vmem:[%s6 + $0x20] sm:$0x1] %v777
    %786 = vst [vmem:[%s6 + $0x28] sm:$0x1] %v778
    %787 = vst [vmem:[%s6 + $0x30] sm:$0x1] %v779
    %788 = vst [vmem:[%s6 + $0x38] sm:$0x1] %v780
    %s789 = scalar_lea.vmem %s0, 1
    %v790 = vld [vmem:[%s789] ss:$8 sm:$0x7]
    %s791 = scalar_lea.vmem %s0, 25
    %v792 = vld [vmem:[%s791] ss:$8 sm:$0x7]
    %s793 = scalar_lea.vmem %s0, 49
    %v794 = vld [vmem:[%s793] ss:$8 sm:$0x7]
    %s795 = scalar_lea.vmem %s0, 73
    %v796 = vld [vmem:[%s795] ss:$8 sm:$0x7]
    %s797 = scalar_lea.vmem %s0, 97
    %v798 = vld [vmem:[%s797] ss:$8 sm:$0x7]
    %s799 = scalar_lea.vmem %s0, 121
    %v800 = vld [vmem:[%s799] ss:$8 sm:$0x7]
    %s801 = scalar_lea.vmem %s0, 145
    %v802 = vld [vmem:[%s801] ss:$8 sm:$0x7]
    %s803 = scalar_lea.vmem %s0, 169
    %v804 = vld [vmem:[%s803] ss:$8 sm:$0x7]
    %v813 = vcombine.low %v773, %v774
    %v814 = vcombine.low %v775, %v776
    %v815 = vcombine.low %v777, %v778
    %v816 = vcombine.low %v779, %v780
    %v818 = vunpack.c.l.s4 1966171168
    %v819 = vunpack.c.0.s8 %v818
    %v820 = vlaneseq
    %v821 = vshrl.u32 %v820, 7
    %v822 = vsub.s32 %v819, %v821
    %v823 = vrot.slane %v813, %v822
    %v825 = vunpack.c.l.s4 1966171168
    %v826 = vunpack.c.0.s8 %v825
    %v827 = vlaneseq
    %v828 = vshrl.u32 %v827, 7
    %v829 = vsub.s32 %v826, %v828
    %v830 = vrot.slane %v814, %v829
    %v832 = vunpack.c.l.s4 1966171168
    %v833 = vunpack.c.0.s8 %v832
    %v834 = vlaneseq
    %v835 = vshrl.u32 %v834, 7
    %v836 = vsub.s32 %v833, %v835
    %v837 = vrot.slane %v815, %v836
    %v839 = vunpack.c.l.s4 1966171168
    %v840 = vunpack.c.0.s8 %v839
    %v841 = vlaneseq
    %v842 = vshrl.u32 %v841, 7
    %v843 = vsub.s32 %v840, %v842
    %v844 = vrot.slane %v816, %v843
    %v845 = vcombine.low %v823, %v830
    %v846 = vcombine.low %v837, %v844
    %v848 = vunpack.c.l.s4 1966171168
    %v849 = vunpack.c.0.s8 %v848
    %v850 = vlaneseq
    %v851 = vshrl.u32 %v850, 7
    %v852 = vsub.s32 %v849, %v851
    %v853 = vrot.slane %v845, %v852
    %v855 = vunpack.c.l.s4 1966171168
    %v856 = vunpack.c.0.s8 %v855
    %v857 = vlaneseq
    %v858 = vshrl.u32 %v857, 7
    %v859 = vsub.s32 %v856, %v858
    %v860 = vrot.slane %v846, %v859
    %v861 = vcombine.low %v853, %v860
    %863 = vmatprep.subr.mxu0 %v44
    %864 = vmatpush1.msra.mxu0 %v43
    %865 = vmatprep.subr.mxu0 %v46
    %866 = vmatpush1.msra.mxu0 %v45
    %867 = vmatprep.subr.mxu0 %v48
    %868 = vmatpush1.msra.mxu0 %v47
    %869 = vmatprep.subr.mxu0 %v50
    %870 = vmatpush1.msra.mxu0 %v49
    %871 = vmatprep.subr.mxu0 %v52
    %872 = vmatpush1.msra.mxu0 %v51
    %873 = vmatprep.subr.mxu0 %v54
    %874 = vmatpush1.msra.mxu0 %v53
    %875 = vmatprep.subr.mxu0 %v56
    %876 = vmatpush1.msra.mxu0 %v55
    %877 = vmatprep.subr.mxu0 %v58
    %878 = vmatpush1.msra.mxu0 %v57
    %879 = vmatprep.subr.mxu0 %v60
    %880 = vmatpush1.msra.mxu0 %v59
    %881 = vmatprep.subr.mxu0 %v62
    %882 = vmatpush1.msra.mxu0 %v61
    %883 = vmatprep.subr.mxu0 %v64
    %884 = vmatpush1.msra.mxu0 %v63
    %885 = vmatprep.subr.mxu0 %v66
    %886 = vmatpush1.msra.mxu0 %v65
    %887 = vmatprep.subr.mxu0 %v68
    %888 = vmatpush1.msra.mxu0 %v67
    %889 = vmatprep.subr.mxu0 %v70
    %890 = vmatpush1.msra.mxu0 %v69
    %891 = vmatprep.subr.mxu0 %v72
    %892 = vmatpush1.msra.mxu0 %v71
    %893 = vmatprep.subr.mxu0 %v74
    %894 = vmatpush1.msra.mxu0 %v73
    %895 = vmatprep.subr.mxu0 0.0
    %896 = vmatpush1.msra.mxu0 0.0
    %897 = vmatprep.subr.mxu0 0.0
    %898 = vmatpush1.msra.mxu0 0.0
    %899 = vmatprep.subr.mxu0 0.0
    %900 = vmatpush1.msra.mxu0 0.0
    %901 = vmatprep.subr.mxu0 0.0
    %902 = vmatpush1.msra.mxu0 0.0
    %903 = vmatprep.subr.mxu0 0.0
    %904 = vmatpush1.msra.mxu0 0.0
    %905 = vmatprep.subr.mxu0 0.0
    %906 = vmatpush1.msra.mxu0 0.0
    %907 = vmatprep.subr.mxu0 0.0
    %908 = vmatpush1.msra.mxu0 0.0
    %909 = vmatprep.subr.mxu0 0.0
    %910 = vmatpush1.msra.mxu0 0.0
    %911 = vmatprep.subr.mxu0 0.0
    %912 = vmatpush1.msra.mxu0 0.0
    %913 = vmatprep.subr.mxu0 0.0
    %914 = vmatpush1.msra.mxu0 0.0
    %915 = vmatprep.subr.mxu0 0.0
    %916 = vmatpush1.msra.mxu0 0.0
    %917 = vmatprep.subr.mxu0 0.0
    %918 = vmatpush1.msra.mxu0 0.0
    %919 = vmatprep.subr.mxu0 0.0
    %920 = vmatpush1.msra.mxu0 0.0
    %921 = vmatprep.subr.mxu0 0.0
    %922 = vmatpush1.msra.mxu0 0.0
    %923 = vmatprep.subr.mxu0 0.0
    %924 = vmatpush1.msra.mxu0 0.0
    %925 = vmatprep.subr.mxu0 0.0
    %926 = vmatpush1.msra.mxu0 0.0
    %927 = vmatprep.mubr.f32.mxu0 0.0
    %928 = vmatmul.mubr.f32.gmra.mrb[0].mxu0 %v861
    %v929 = vpop.f32.mrb[0].mxu0
    %v930 = vadd.f32 %v113, %v929
    %v931 = vpop.f32.mrb[0].mxu0
    %v932 = vadd.f32 %v117, %v931
    %933 = vdwg.mxu0
    %v935 = vcombine.high %v930, %v930
    %v937 = vunpack.c.l.s4 1966171168
    %v938 = vunpack.c.0.s8 %v937
    %v939 = vlaneseq
    %v940 = vshrl.u32 %v939, 7
    %v941 = vsub.s32 %v938, %v940
    %v942 = vrot.slane %v930, %v941
    %v944 = vunpack.c.l.s4 1966171168
    %v945 = vunpack.c.0.s8 %v944
    %v946 = vlaneseq
    %v947 = vshrl.u32 %v946, 7
    %v948 = vsub.s32 %v945, %v947
    %v949 = vrot.slane %v935, %v948
    %v950 = vcombine.high %v942, %v942
    %v951 = vcombine.high %v949, %v949
    %v953 = vunpack.c.l.s4 1966171168
    %v954 = vunpack.c.0.s8 %v953
    %v955 = vlaneseq
    %v956 = vshrl.u32 %v955, 7
    %v957 = vsub.s32 %v954, %v956
    %v958 = vrot.slane %v942, %v957
    %v960 = vunpack.c.l.s4 1966171168
    %v961 = vunpack.c.0.s8 %v960
    %v962 = vlaneseq
    %v963 = vshrl.u32 %v962, 7
    %v964 = vsub.s32 %v961, %v963
    %v965 = vrot.slane %v949, %v964
    %v967 = vunpack.c.l.s4 1966171168
    %v968 = vunpack.c.0.s8 %v967
    %v969 = vlaneseq
    %v970 = vshrl.u32 %v969, 7
    %v971 = vsub.s32 %v968, %v970
    %v972 = vrot.slane %v950, %v971
    %v974 = vunpack.c.l.s4 1966171168
    %v975 = vunpack.c.0.s8 %v974
    %v976 = vlaneseq
    %v977 = vshrl.u32 %v976, 7
    %v978 = vsub.s32 %v975, %v977
    %v979 = vrot.slane %v951, %v978
    %v980 = vcombine.high %v958, %v958
    %v981 = vcombine.high %v965, %v965
    %v982 = vcombine.high %v972, %v972
    %v983 = vcombine.high %v979, %v979
    %v992 = vadd.f32 %v790, %v958
    %v993 = vadd.f32 %v792, %v972
    %v994 = vadd.f32 %v794, %v980
    %v995 = vadd.f32 %v796, %v982
    %v996 = vadd.f32 %v798, %v965
    %v997 = vadd.f32 %v800, %v979
    %v998 = vadd.f32 %v802, %v981
    %v999 = vadd.f32 %v804, %v983
    %v1000 = vxor.u32 %v992, 2147483648
    %v1001 = vxor.u32 %v993, 2147483648
    %v1002 = vxor.u32 %v994, 2147483648
    %v1003 = vxor.u32 %v995, 2147483648
    %v1004 = vxor.u32 %v996, 2147483648
    %v1005 = vxor.u32 %v997, 2147483648
    %v1006 = vxor.u32 %v998, 2147483648
    %v1007 = vxor.u32 %v999, 2147483648
    %v1008 = vmul.f32 %v1000, 1.442695
    %v1009 = vpow.pop %v1008
    %v1010 = vmul.f32 %v1001, 1.442695
    %v1011 = vpow.pop %v1010
    %v1012 = vmul.f32 %v1002, 1.442695
    %v1013 = vpow.pop %v1012
    %v1014 = vmul.f32 %v1003, 1.442695
    %v1015 = vpow.pop %v1014
    %v1016 = vmul.f32 %v1004, 1.442695
    %v1017 = vpow.pop %v1016
    %v1018 = vmul.f32 %v1005, 1.442695
    %v1019 = vpow.pop %v1018
    %v1020 = vmul.f32 %v1006, 1.442695
    %v1021 = vpow.pop %v1020
    %v1022 = vmul.f32 %v1007, 1.442695
    %v1023 = vpow.pop %v1022
    %v1024 = vadd.f32 %v1009, 1.0
    %v1025 = vadd.f32 %v1011, 1.0
    %v1026 = vadd.f32 %v1013, 1.0
    %v1027 = vadd.f32 %v1015, 1.0
    %v1028 = vadd.f32 %v1017, 1.0
    %v1029 = vadd.f32 %v1019, 1.0
    %v1030 = vadd.f32 %v1021, 1.0
    %v1031 = vadd.f32 %v1023, 1.0
    %v1032 = vrcp.pop %v1024
    %v1033 = vmul.f32 1.0, %v1032
    %v1034 = vrcp.pop %v1025
    %v1035 = vmul.f32 1.0, %v1034
    %v1036 = vrcp.pop %v1026
    %v1037 = vmul.f32 1.0, %v1036
    %v1038 = vrcp.pop %v1027
    %v1039 = vmul.f32 1.0, %v1038
    %v1040 = vrcp.pop %v1028
    %v1041 = vmul.f32 1.0, %v1040
    %v1042 = vrcp.pop %v1029
    %v1043 = vmul.f32 1.0, %v1042
    %v1044 = vrcp.pop %v1030
    %v1045 = vmul.f32 1.0, %v1044
    %v1046 = vrcp.pop %v1031
    %v1047 = vmul.f32 1.0, %v1046
    %v1056 = vrot.slane %v790, 1
    %v1057 = vrot.slane %v792, 1
    %v1058 = vrot.slane %v794, 1
    %v1059 = vrot.slane %v796, 1
    %v1060 = vrot.slane %v798, 1
    %v1061 = vrot.slane %v800, 1
    %v1062 = vrot.slane %v802, 1
    %v1063 = vrot.slane %v804, 1
    %v1073 = vcombine.high %v932, %v932
    %v1075 = vunpack.c.l.s4 1966171168
    %v1076 = vunpack.c.0.s8 %v1075
    %v1077 = vlaneseq
    %v1078 = vshrl.u32 %v1077, 7
    %v1079 = vsub.s32 %v1076, %v1078
    %v1080 = vrot.slane %v932, %v1079
    %v1082 = vunpack.c.l.s4 1966171168
    %v1083 = vunpack.c.0.s8 %v1082
    %v1084 = vlaneseq
    %v1085 = vshrl.u32 %v1084, 7
    %v1086 = vsub.s32 %v1083, %v1085
    %v1087 = vrot.slane %v1073, %v1086
    %v1088 = vcombine.high %v1080, %v1080
    %v1089 = vcombine.high %v1087, %v1087
    %v1091 = vunpack.c.l.s4 1966171168
    %v1092 = vunpack.c.0.s8 %v1091
    %v1093 = vlaneseq
    %v1094 = vshrl.u32 %v1093, 7
    %v1095 = vsub.s32 %v1092, %v1094
    %v1096 = vrot.slane %v1080, %v1095
    %v1098 = vunpack.c.l.s4 1966171168
    %v1099 = vunpack.c.0.s8 %v1098
    %v1100 = vlaneseq
    %v1101 = vshrl.u32 %v1100, 7
    %v1102 = vsub.s32 %v1099, %v1101
    %v1103 = vrot.slane %v1087, %v1102
    %v1105 = vunpack.c.l.s4 1966171168
    %v1106 = vunpack.c.0.s8 %v1105
    %v1107 = vlaneseq
    %v1108 = vshrl.u32 %v1107, 7
    %v1109 = vsub.s32 %v1106, %v1108
    %v1110 = vrot.slane %v1088, %v1109
    %v1112 = vunpack.c.l.s4 1966171168
    %v1113 = vunpack.c.0.s8 %v1112
    %v1114 = vlaneseq
    %v1115 = vshrl.u32 %v1114, 7
    %v1116 = vsub.s32 %v1113, %v1115
    %v1117 = vrot.slane %v1089, %v1116
    %v1118 = vcombine.high %v1096, %v1096
    %v1119 = vcombine.high %v1103, %v1103
    %v1120 = vcombine.high %v1110, %v1110
    %v1121 = vcombine.high %v1117, %v1117
    %v1130 = vadd.f32 %v1056, %v1096
    %v1131 = vadd.f32 %v1057, %v1110
    %v1132 = vadd.f32 %v1058, %v1118
    %v1133 = vadd.f32 %v1059, %v1120
    %v1134 = vadd.f32 %v1060, %v1103
    %v1135 = vadd.f32 %v1061, %v1117
    %v1136 = vadd.f32 %v1062, %v1119
    %v1137 = vadd.f32 %v1063, %v1121
    %v1138 = vxor.u32 %v1130, 2147483648
    %v1139 = vxor.u32 %v1131, 2147483648
    %v1140 = vxor.u32 %v1132, 2147483648
    %v1141 = vxor.u32 %v1133, 2147483648
    %v1142 = vxor.u32 %v1134, 2147483648
    %v1143 = vxor.u32 %v1135, 2147483648
    %v1144 = vxor.u32 %v1136, 2147483648
    %v1145 = vxor.u32 %v1137, 2147483648
    %v1146 = vmul.f32 %v1138, 1.442695
    %v1147 = vpow.pop %v1146
    %v1148 = vmul.f32 %v1139, 1.442695
    %v1149 = vpow.pop %v1148
    %v1150 = vmul.f32 %v1140, 1.442695
    %v1151 = vpow.pop %v1150
    %v1152 = vmul.f32 %v1141, 1.442695
    %v1153 = vpow.pop %v1152
    %v1154 = vmul.f32 %v1142, 1.442695
    %v1155 = vpow.pop %v1154
    %v1156 = vmul.f32 %v1143, 1.442695
    %v1157 = vpow.pop %v1156
    %v1158 = vmul.f32 %v1144, 1.442695
    %v1159 = vpow.pop %v1158
    %v1160 = vmul.f32 %v1145, 1.442695
    %v1161 = vpow.pop %v1160
    %v1162 = vadd.f32 %v1147, 1.0
    %v1163 = vadd.f32 %v1149, 1.0
    %v1164 = vadd.f32 %v1151, 1.0
    %v1165 = vadd.f32 %v1153, 1.0
    %v1166 = vadd.f32 %v1155, 1.0
    %v1167 = vadd.f32 %v1157, 1.0
    %v1168 = vadd.f32 %v1159, 1.0
    %v1169 = vadd.f32 %v1161, 1.0
    %v1170 = vrcp.pop %v1162
    %v1171 = vmul.f32 1.0, %v1170
    %v1172 = vrcp.pop %v1163
    %v1173 = vmul.f32 1.0, %v1172
    %v1174 = vrcp.pop %v1164
    %v1175 = vmul.f32 1.0, %v1174
    %v1176 = vrcp.pop %v1165
    %v1177 = vmul.f32 1.0, %v1176
    %v1178 = vrcp.pop %v1166
    %v1179 = vmul.f32 1.0, %v1178
    %v1180 = vrcp.pop %v1167
    %v1181 = vmul.f32 1.0, %v1180
    %v1182 = vrcp.pop %v1168
    %v1183 = vmul.f32 1.0, %v1182
    %v1184 = vrcp.pop %v1169
    %v1185 = vmul.f32 1.0, %v1184
    %v1186 = vmul.f32 %v1171, %v773
    %v1187 = vmul.f32 %v1173, %v774
    %v1188 = vmul.f32 %v1175, %v775
    %v1189 = vmul.f32 %v1177, %v776
    %v1190 = vmul.f32 %v1179, %v777
    %v1191 = vmul.f32 %v1181, %v778
    %v1192 = vmul.f32 %v1183, %v779
    %v1193 = vmul.f32 %v1185, %v780
    %v1202 = vcombine.low %v1186, %v1187
    %v1203 = vcombine.low %v1188, %v1189
    %v1204 = vcombine.low %v1190, %v1191
    %v1205 = vcombine.low %v1192, %v1193
    %v1207 = vunpack.c.l.s4 1966171168
    %v1208 = vunpack.c.0.s8 %v1207
    %v1209 = vlaneseq
    %v1210 = vshrl.u32 %v1209, 7
    %v1211 = vsub.s32 %v1208, %v1210
    %v1212 = vrot.slane %v1202, %v1211
    %v1214 = vunpack.c.l.s4 1966171168
    %v1215 = vunpack.c.0.s8 %v1214
    %v1216 = vlaneseq
    %v1217 = vshrl.u32 %v1216, 7
    %v1218 = vsub.s32 %v1215, %v1217
    %v1219 = vrot.slane %v1203, %v1218
    %v1221 = vunpack.c.l.s4 1966171168
    %v1222 = vunpack.c.0.s8 %v1221
    %v1223 = vlaneseq
    %v1224 = vshrl.u32 %v1223, 7
    %v1225 = vsub.s32 %v1222, %v1224
    %v1226 = vrot.slane %v1204, %v1225
    %v1228 = vunpack.c.l.s4 1966171168
    %v1229 = vunpack.c.0.s8 %v1228
    %v1230 = vlaneseq
    %v1231 = vshrl.u32 %v1230, 7
    %v1232 = vsub.s32 %v1229, %v1231
    %v1233 = vrot.slane %v1205, %v1232
    %v1234 = vcombine.low %v1212, %v1219
    %v1235 = vcombine.low %v1226, %v1233
    %v1237 = vunpack.c.l.s4 1966171168
    %v1238 = vunpack.c.0.s8 %v1237
    %v1239 = vlaneseq
    %v1240 = vshrl.u32 %v1239, 7
    %v1241 = vsub.s32 %v1238, %v1240
    %v1242 = vrot.slane %v1234, %v1241
    %v1244 = vunpack.c.l.s4 1966171168
    %v1245 = vunpack.c.0.s8 %v1244
    %v1246 = vlaneseq
    %v1247 = vshrl.u32 %v1246, 7
    %v1248 = vsub.s32 %v1245, %v1247
    %v1249 = vrot.slane %v1235, %v1248
    %v1250 = vcombine.low %v1242, %v1249
    %1252 = vmatprep.subr.mxu0 0.0
    %1253 = vmatpush1.msra.mxu0 %v75
    %1254 = vmatprep.subr.mxu0 0.0
    %1255 = vmatpush1.msra.mxu0 %v76
    %1256 = vmatprep.subr.mxu0 0.0
    %1257 = vmatpush1.msra.mxu0 %v77
    %1258 = vmatprep.subr.mxu0 0.0
    %1259 = vmatpush1.msra.mxu0 %v78
    %1260 = vmatprep.subr.mxu0 0.0
    %1261 = vmatpush1.msra.mxu0 %v79
    %1262 = vmatprep.subr.mxu0 0.0
    %1263 = vmatpush1.msra.mxu0 %v80
    %1264 = vmatprep.subr.mxu0 0.0
    %1265 = vmatpush1.msra.mxu0 %v81
    %1266 = vmatprep.subr.mxu0 0.0
    %1267 = vmatpush1.msra.mxu0 %v82
    %1268 = vmatprep.subr.mxu0 0.0
    %1269 = vmatpush1.msra.mxu0 %v83
    %1270 = vmatprep.subr.mxu0 0.0
    %1271 = vmatpush1.msra.mxu0 %v84
    %1272 = vmatprep.subr.mxu0 0.0
    %1273 = vmatpush1.msra.mxu0 %v85
    %1274 = vmatprep.subr.mxu0 0.0
    %1275 = vmatpush1.msra.mxu0 %v86
    %1276 = vmatprep.subr.mxu0 0.0
    %1277 = vmatpush1.msra.mxu0 %v87
    %1278 = vmatprep.subr.mxu0 0.0
    %1279 = vmatpush1.msra.mxu0 %v88
    %1280 = vmatprep.subr.mxu0 0.0
    %1281 = vmatpush1.msra.mxu0 %v89
    %1282 = vmatprep.subr.mxu0 0.0
    %1283 = vmatpush1.msra.mxu0 %v90
    %1284 = vmatprep.subr.mxu0 0.0
    %1285 = vmatpush1.msra.mxu0 0.0
    %1286 = vmatprep.subr.mxu0 0.0
    %1287 = vmatpush1.msra.mxu0 0.0
    %1288 = vmatprep.subr.mxu0 0.0
    %1289 = vmatpush1.msra.mxu0 0.0
    %1290 = vmatprep.subr.mxu0 0.0
    %1291 = vmatpush1.msra.mxu0 0.0
    %1292 = vmatprep.subr.mxu0 0.0
    %1293 = vmatpush1.msra.mxu0 0.0
    %1294 = vmatprep.subr.mxu0 0.0
    %1295 = vmatpush1.msra.mxu0 0.0
    %1296 = vmatprep.subr.mxu0 0.0
    %1297 = vmatpush1.msra.mxu0 0.0
    %1298 = vmatprep.subr.mxu0 0.0
    %1299 = vmatpush1.msra.mxu0 0.0
    %1300 = vmatprep.subr.mxu0 0.0
    %1301 = vmatpush1.msra.mxu0 0.0
    %1302 = vmatprep.subr.mxu0 0.0
    %1303 = vmatpush1.msra.mxu0 0.0
    %1304 = vmatprep.subr.mxu0 0.0
    %1305 = vmatpush1.msra.mxu0 0.0
    %1306 = vmatprep.subr.mxu0 0.0
    %1307 = vmatpush1.msra.mxu0 0.0
    %1308 = vmatprep.subr.mxu0 0.0
    %1309 = vmatpush1.msra.mxu0 0.0
    %1310 = vmatprep.subr.mxu0 0.0
    %1311 = vmatpush1.msra.mxu0 0.0
    %1312 = vmatprep.subr.mxu0 0.0
    %1313 = vmatpush1.msra.mxu0 0.0
    %1314 = vmatprep.subr.mxu0 0.0
    %1315 = vmatpush1.msra.mxu0 0.0
    %1316 = vmatprep.mubr.f32.mxu0 0.0
    %1317 = vmatmul.mubr.f32.gmra.mrb[0].mxu0 %v1250
    %v1318 = vpop.f32.mrb[0].mxu0
    %v1319 = vadd.f32 %v513, %v1318
    %v1320 = vpop.f32.mrb[0].mxu0
    %1321 = vdwg.mxu0
    %v1322 = vrot.slane %v790, 2
    %v1323 = vrot.slane %v792, 2
    %v1324 = vrot.slane %v794, 2
    %v1325 = vrot.slane %v796, 2
    %v1326 = vrot.slane %v798, 2
    %v1327 = vrot.slane %v800, 2
    %v1328 = vrot.slane %v802, 2
    %v1329 = vrot.slane %v804, 2
    %v1339 = vcombine.high %v1319, %v1319
    %v1341 = vunpack.c.l.s4 1966171168
    %v1342 = vunpack.c.0.s8 %v1341
    %v1343 = vlaneseq
    %v1344 = vshrl.u32 %v1343, 7
    %v1345 = vsub.s32 %v1342, %v1344
    %v1346 = vrot.slane %v1319, %v1345
    %v1348 = vunpack.c.l.s4 1966171168
    %v1349 = vunpack.c.0.s8 %v1348
    %v1350 = vlaneseq
    %v1351 = vshrl.u32 %v1350, 7
    %v1352 = vsub.s32 %v1349, %v1351
    %v1353 = vrot.slane %v1339, %v1352
    %v1354 = vcombine.high %v1346, %v1346
    %v1355 = vcombine.high %v1353, %v1353
    %v1357 = vunpack.c.l.s4 1966171168
    %v1358 = vunpack.c.0.s8 %v1357
    %v1359 = vlaneseq
    %v1360 = vshrl.u32 %v1359, 7
    %v1361 = vsub.s32 %v1358, %v1360
    %v1362 = vrot.slane %v1346, %v1361
    %v1364 = vunpack.c.l.s4 1966171168
    %v1365 = vunpack.c.0.s8 %v1364
    %v1366 = vlaneseq
    %v1367 = vshrl.u32 %v1366, 7
    %v1368 = vsub.s32 %v1365, %v1367
    %v1369 = vrot.slane %v1353, %v1368
    %v1371 = vunpack.c.l.s4 1966171168
    %v1372 = vunpack.c.0.s8 %v1371
    %v1373 = vlaneseq
    %v1374 = vshrl.u32 %v1373, 7
    %v1375 = vsub.s32 %v1372, %v1374
    %v1376 = vrot.slane %v1354, %v1375
    %v1378 = vunpack.c.l.s4 1966171168
    %v1379 = vunpack.c.0.s8 %v1378
    %v1380 = vlaneseq
    %v1381 = vshrl.u32 %v1380, 7
    %v1382 = vsub.s32 %v1379, %v1381
    %v1383 = vrot.slane %v1355, %v1382
    %v1384 = vcombine.high %v1362, %v1362
    %v1385 = vcombine.high %v1369, %v1369
    %v1386 = vcombine.high %v1376, %v1376
    %v1387 = vcombine.high %v1383, %v1383
    %v1396 = vadd.f32 %v1322, %v1362
    %v1397 = vadd.f32 %v1323, %v1376
    %v1398 = vadd.f32 %v1324, %v1384
    %v1399 = vadd.f32 %v1325, %v1386
    %v1400 = vadd.f32 %v1326, %v1369
    %v1401 = vadd.f32 %v1327, %v1383
    %v1402 = vadd.f32 %v1328, %v1385
    %v1403 = vadd.f32 %v1329, %v1387
    %v1404 = vtanh.pop %v1396
    %v1405 = vtanh.pop %v1397
    %v1406 = vtanh.pop %v1398
    %v1407 = vtanh.pop %v1399
    %v1408 = vtanh.pop %v1400
    %v1409 = vtanh.pop %v1401
    %v1410 = vtanh.pop %v1402
    %v1411 = vtanh.pop %v1403
    %v1412 = vmul.f32 %v1033, %v773
    %v1413 = vmul.f32 %v1035, %v774
    %v1414 = vmul.f32 %v1037, %v775
    %v1415 = vmul.f32 %v1039, %v776
    %v1416 = vmul.f32 %v1041, %v777
    %v1417 = vmul.f32 %v1043, %v778
    %v1418 = vmul.f32 %v1045, %v779
    %v1419 = vmul.f32 %v1047, %v780
    %v1420 = vsub.f32 1.0, %v1033
    %v1421 = vsub.f32 1.0, %v1035
    %v1422 = vsub.f32 1.0, %v1037
    %v1423 = vsub.f32 1.0, %v1039
    %v1424 = vsub.f32 1.0, %v1041
    %v1425 = vsub.f32 1.0, %v1043
    %v1426 = vsub.f32 1.0, %v1045
    %v1427 = vsub.f32 1.0, %v1047
    %v1428 = vmul.f32 %v1420, %v1404
    %v1429 = vmul.f32 %v1421, %v1405
    %v1430 = vmul.f32 %v1422, %v1406
    %v1431 = vmul.f32 %v1423, %v1407
    %v1432 = vmul.f32 %v1424, %v1408
    %v1433 = vmul.f32 %v1425, %v1409
    %v1434 = vmul.f32 %v1426, %v1410
    %v1435 = vmul.f32 %v1427, %v1411
    %v1436 = vadd.f32 %v1412, %v1428
    %v1437 = vadd.f32 %v1413, %v1429
    %v1438 = vadd.f32 %v1414, %v1430
    %v1439 = vadd.f32 %v1415, %v1431
    %v1440 = vadd.f32 %v1416, %v1432
    %v1441 = vadd.f32 %v1417, %v1433
    %v1442 = vadd.f32 %v1418, %v1434
    %v1443 = vadd.f32 %v1419, %v1435
    %v1444 = vmax.f32 %v1436, -5.0
    %v1445 = vmax.f32 %v1437, -5.0
    %v1446 = vmax.f32 %v1438, -5.0
    %v1447 = vmax.f32 %v1439, -5.0
    %v1448 = vmax.f32 %v1440, -5.0
    %v1449 = vmax.f32 %v1441, -5.0
    %v1450 = vmax.f32 %v1442, -5.0
    %v1451 = vmax.f32 %v1443, -5.0
    %v1452 = vmin.f32 %v1444, 5.0
    %v1453 = vmin.f32 %v1445, 5.0
    %v1454 = vmin.f32 %v1446, 5.0
    %v1455 = vmin.f32 %v1447, 5.0
    %v1456 = vmin.f32 %v1448, 5.0
    %v1457 = vmin.f32 %v1449, 5.0
    %v1458 = vmin.f32 %v1450, 5.0
    %v1459 = vmin.f32 %v1451, 5.0
    %1460 = vst [vmem:[%s6 + $0x1] sm:$0x1] %v1452
    %1461 = vst [vmem:[%s6 + $0x9] sm:$0x1] %v1453
    %1462 = vst [vmem:[%s6 + $0x11] sm:$0x1] %v1454
    %1463 = vst [vmem:[%s6 + $0x19] sm:$0x1] %v1455
    %1464 = vst [vmem:[%s6 + $0x21] sm:$0x1] %v1456
    %1465 = vst [vmem:[%s6 + $0x29] sm:$0x1] %v1457
    %1466 = vst [vmem:[%s6 + $0x31] sm:$0x1] %v1458
    %1467 = vst [vmem:[%s6 + $0x39] sm:$0x1] %v1459
    %s1468 = scalar_lea.vmem %s0, 2
    %v1469 = vld [vmem:[%s1468] ss:$8 sm:$0x7]
    %s1470 = scalar_lea.vmem %s0, 26
    %v1471 = vld [vmem:[%s1470] ss:$8 sm:$0x7]
    %s1472 = scalar_lea.vmem %s0, 50
    %v1473 = vld [vmem:[%s1472] ss:$8 sm:$0x7]
    %s1474 = scalar_lea.vmem %s0, 74
    %v1475 = vld [vmem:[%s1474] ss:$8 sm:$0x7]
    %s1476 = scalar_lea.vmem %s0, 98
    %v1477 = vld [vmem:[%s1476] ss:$8 sm:$0x7]
    %s1478 = scalar_lea.vmem %s0, 122
    %v1479 = vld [vmem:[%s1478] ss:$8 sm:$0x7]
    %s1480 = scalar_lea.vmem %s0, 146
    %v1481 = vld [vmem:[%s1480] ss:$8 sm:$0x7]
    %s1482 = scalar_lea.vmem %s0, 170
    %v1483 = vld [vmem:[%s1482] ss:$8 sm:$0x7]
    %v1492 = vcombine.low %v1452, %v1453
    %v1493 = vcombine.low %v1454, %v1455
    %v1494 = vcombine.low %v1456, %v1457
    %v1495 = vcombine.low %v1458, %v1459
    %v1497 = vunpack.c.l.s4 1966171168
    %v1498 = vunpack.c.0.s8 %v1497
    %v1499 = vlaneseq
    %v1500 = vshrl.u32 %v1499, 7
    %v1501 = vsub.s32 %v1498, %v1500
    %v1502 = vrot.slane %v1492, %v1501
    %v1504 = vunpack.c.l.s4 1966171168
    %v1505 = vunpack.c.0.s8 %v1504
    %v1506 = vlaneseq
    %v1507 = vshrl.u32 %v1506, 7
    %v1508 = vsub.s32 %v1505, %v1507
    %v1509 = vrot.slane %v1493, %v1508
    %v1511 = vunpack.c.l.s4 1966171168
    %v1512 = vunpack.c.0.s8 %v1511
    %v1513 = vlaneseq
    %v1514 = vshrl.u32 %v1513, 7
    %v1515 = vsub.s32 %v1512, %v1514
    %v1516 = vrot.slane %v1494, %v1515
    %v1518 = vunpack.c.l.s4 1966171168
    %v1519 = vunpack.c.0.s8 %v1518
    %v1520 = vlaneseq
    %v1521 = vshrl.u32 %v1520, 7
    %v1522 = vsub.s32 %v1519, %v1521
    %v1523 = vrot.slane %v1495, %v1522
    %v1524 = vcombine.low %v1502, %v1509
    %v1525 = vcombine.low %v1516, %v1523
    %v1527 = vunpack.c.l.s4 1966171168
    %v1528 = vunpack.c.0.s8 %v1527
    %v1529 = vlaneseq
    %v1530 = vshrl.u32 %v1529, 7
    %v1531 = vsub.s32 %v1528, %v1530
    %v1532 = vrot.slane %v1524, %v1531
    %v1534 = vunpack.c.l.s4 1966171168
    %v1535 = vunpack.c.0.s8 %v1534
    %v1536 = vlaneseq
    %v1537 = vshrl.u32 %v1536, 7
    %v1538 = vsub.s32 %v1535, %v1537
    %v1539 = vrot.slane %v1525, %v1538
    %v1540 = vcombine.low %v1532, %v1539
    %1542 = vmatprep.subr.mxu0 %v44
    %1543 = vmatpush1.msra.mxu0 %v43
    %1544 = vmatprep.subr.mxu0 %v46
    %1545 = vmatpush1.msra.mxu0 %v45
    %1546 = vmatprep.subr.mxu0 %v48
    %1547 = vmatpush1.msra.mxu0 %v47
    %1548 = vmatprep.subr.mxu0 %v50
    %1549 = vmatpush1.msra.mxu0 %v49
    %1550 = vmatprep.subr.mxu0 %v52
    %1551 = vmatpush1.msra.mxu0 %v51
    %1552 = vmatprep.subr.mxu0 %v54
    %1553 = vmatpush1.msra.mxu0 %v53
    %1554 = vmatprep.subr.mxu0 %v56
    %1555 = vmatpush1.msra.mxu0 %v55
    %1556 = vmatprep.subr.mxu0 %v58
    %1557 = vmatpush1.msra.mxu0 %v57
    %1558 = vmatprep.subr.mxu0 %v60
    %1559 = vmatpush1.msra.mxu0 %v59
    %1560 = vmatprep.subr.mxu0 %v62
    %1561 = vmatpush1.msra.mxu0 %v61
    %1562 = vmatprep.subr.mxu0 %v64
    %1563 = vmatpush1.msra.mxu0 %v63
    %1564 = vmatprep.subr.mxu0 %v66
    %1565 = vmatpush1.msra.mxu0 %v65
    %1566 = vmatprep.subr.mxu0 %v68
    %1567 = vmatpush1.msra.mxu0 %v67
    %1568 = vmatprep.subr.mxu0 %v70
    %1569 = vmatpush1.msra.mxu0 %v69
    %1570 = vmatprep.subr.mxu0 %v72
    %1571 = vmatpush1.msra.mxu0 %v71
    %1572 = vmatprep.subr.mxu0 %v74
    %1573 = vmatpush1.msra.mxu0 %v73
    %1574 = vmatprep.subr.mxu0 0.0
    %1575 = vmatpush1.msra.mxu0 0.0
    %1576 = vmatprep.subr.mxu0 0.0
    %1577 = vmatpush1.msra.mxu0 0.0
    %1578 = vmatprep.subr.mxu0 0.0
    %1579 = vmatpush1.msra.mxu0 0.0
    %1580 = vmatprep.subr.mxu0 0.0
    %1581 = vmatpush1.msra.mxu0 0.0
    %1582 = vmatprep.subr.mxu0 0.0
    %1583 = vmatpush1.msra.mxu0 0.0
    %1584 = vmatprep.subr.mxu0 0.0
    %1585 = vmatpush1.msra.mxu0 0.0
    %1586 = vmatprep.subr.mxu0 0.0
    %1587 = vmatpush1.msra.mxu0 0.0
    %1588 = vmatprep.subr.mxu0 0.0
    %1589 = vmatpush1.msra.mxu0 0.0
    %1590 = vmatprep.subr.mxu0 0.0
    %1591 = vmatpush1.msra.mxu0 0.0
    %1592 = vmatprep.subr.mxu0 0.0
    %1593 = vmatpush1.msra.mxu0 0.0
    %1594 = vmatprep.subr.mxu0 0.0
    %1595 = vmatpush1.msra.mxu0 0.0
    %1596 = vmatprep.subr.mxu0 0.0
    %1597 = vmatpush1.msra.mxu0 0.0
    %1598 = vmatprep.subr.mxu0 0.0
    %1599 = vmatpush1.msra.mxu0 0.0
    %1600 = vmatprep.subr.mxu0 0.0
    %1601 = vmatpush1.msra.mxu0 0.0
    %1602 = vmatprep.subr.mxu0 0.0
    %1603 = vmatpush1.msra.mxu0 0.0
    %1604 = vmatprep.subr.mxu0 0.0
    %1605 = vmatpush1.msra.mxu0 0.0
    %1606 = vmatprep.mubr.f32.mxu0 0.0
    %1607 = vmatmul.mubr.f32.gmra.mrb[0].mxu0 %v1540
    %v1608 = vpop.f32.mrb[0].mxu0
    %v1609 = vadd.f32 %v113, %v1608
    %v1610 = vpop.f32.mrb[0].mxu0
    %v1611 = vadd.f32 %v117, %v1610
    %1612 = vdwg.mxu0
    %v1614 = vcombine.high %v1609, %v1609
    %v1616 = vunpack.c.l.s4 1966171168
    %v1617 = vunpack.c.0.s8 %v1616
    %v1618 = vlaneseq
    %v1619 = vshrl.u32 %v1618, 7
    %v1620 = vsub.s32 %v1617, %v1619
    %v1621 = vrot.slane %v1609, %v1620
    %v1623 = vunpack.c.l.s4 1966171168
    %v1624 = vunpack.c.0.s8 %v1623
    %v1625 = vlaneseq
    %v1626 = vshrl.u32 %v1625, 7
    %v1627 = vsub.s32 %v1624, %v1626
    %v1628 = vrot.slane %v1614, %v1627
    %v1629 = vcombine.high %v1621, %v1621
    %v1630 = vcombine.high %v1628, %v1628
    %v1632 = vunpack.c.l.s4 1966171168
    %v1633 = vunpack.c.0.s8 %v1632
    %v1634 = vlaneseq
    %v1635 = vshrl.u32 %v1634, 7
    %v1636 = vsub.s32 %v1633, %v1635
    %v1637 = vrot.slane %v1621, %v1636
    %v1639 = vunpack.c.l.s4 1966171168
    %v1640 = vunpack.c.0.s8 %v1639
    %v1641 = vlaneseq
    %v1642 = vshrl.u32 %v1641, 7
    %v1643 = vsub.s32 %v1640, %v1642
    %v1644 = vrot.slane %v1628, %v1643
    %v1646 = vunpack.c.l.s4 1966171168
    %v1647 = vunpack.c.0.s8 %v1646
    %v1648 = vlaneseq
    %v1649 = vshrl.u32 %v1648, 7
    %v1650 = vsub.s32 %v1647, %v1649
    %v1651 = vrot.slane %v1629, %v1650
    %v1653 = vunpack.c.l.s4 1966171168
    %v1654 = vunpack.c.0.s8 %v1653
    %v1655 = vlaneseq
    %v1656 = vshrl.u32 %v1655, 7
    %v1657 = vsub.s32 %v1654, %v1656
    %v1658 = vrot.slane %v1630, %v1657
    %v1659 = vcombine.high %v1637, %v1637
    %v1660 = vcombine.high %v1644, %v1644
    %v1661 = vcombine.high %v1651, %v1651
    %v1662 = vcombine.high %v1658, %v1658
    %v1671 = vadd.f32 %v1469, %v1637
    %v1672 = vadd.f32 %v1471, %v1651
    %v1673 = vadd.f32 %v1473, %v1659
    %v1674 = vadd.f32 %v1475, %v1661
    %v1675 = vadd.f32 %v1477, %v1644
    %v1676 = vadd.f32 %v1479, %v1658
    %v1677 = vadd.f32 %v1481, %v1660
    %v1678 = vadd.f32 %v1483, %v1662
    %v1679 = vxor.u32 %v1671, 2147483648
    %v1680 = vxor.u32 %v1672, 2147483648
    %v1681 = vxor.u32 %v1673, 2147483648
    %v1682 = vxor.u32 %v1674, 2147483648
    %v1683 = vxor.u32 %v1675, 2147483648
    %v1684 = vxor.u32 %v1676, 2147483648
    %v1685 = vxor.u32 %v1677, 2147483648
    %v1686 = vxor.u32 %v1678, 2147483648
    %v1687 = vmul.f32 %v1679, 1.442695
    %v1688 = vpow.pop %v1687
    %v1689 = vmul.f32 %v1680, 1.442695
    %v1690 = vpow.pop %v1689
    %v1691 = vmul.f32 %v1681, 1.442695
    %v1692 = vpow.pop %v1691
    %v1693 = vmul.f32 %v1682, 1.442695
    %v1694 = vpow.pop %v1693
    %v1695 = vmul.f32 %v1683, 1.442695
    %v1696 = vpow.pop %v1695
    %v1697 = vmul.f32 %v1684, 1.442695
    %v1698 = vpow.pop %v1697
    %v1699 = vmul.f32 %v1685, 1.442695
    %v1700 = vpow.pop %v1699
    %v1701 = vmul.f32 %v1686, 1.442695
    %v1702 = vpow.pop %v1701
    %v1703 = vadd.f32 %v1688, 1.0
    %v1704 = vadd.f32 %v1690, 1.0
    %v1705 = vadd.f32 %v1692, 1.0
    %v1706 = vadd.f32 %v1694, 1.0
    %v1707 = vadd.f32 %v1696, 1.0
    %v1708 = vadd.f32 %v1698, 1.0
    %v1709 = vadd.f32 %v1700, 1.0
    %v1710 = vadd.f32 %v1702, 1.0
    %v1711 = vrcp.pop %v1703
    %v1712 = vmul.f32 1.0, %v1711
    %v1713 = vrcp.pop %v1704
    %v1714 = vmul.f32 1.0, %v1713
    %v1715 = vrcp.pop %v1705
    %v1716 = vmul.f32 1.0, %v1715
    %v1717 = vrcp.pop %v1706
    %v1718 = vmul.f32 1.0, %v1717
    %v1719 = vrcp.pop %v1707
    %v1720 = vmul.f32 1.0, %v1719
    %v1721 = vrcp.pop %v1708
    %v1722 = vmul.f32 1.0, %v1721
    %v1723 = vrcp.pop %v1709
    %v1724 = vmul.f32 1.0, %v1723
    %v1725 = vrcp.pop %v1710
    %v1726 = vmul.f32 1.0, %v1725
    %v1735 = vrot.slane %v1469, 1
    %v1736 = vrot.slane %v1471, 1
    %v1737 = vrot.slane %v1473, 1
    %v1738 = vrot.slane %v1475, 1
    %v1739 = vrot.slane %v1477, 1
    %v1740 = vrot.slane %v1479, 1
    %v1741 = vrot.slane %v1481, 1
    %v1742 = vrot.slane %v1483, 1
    %v1752 = vcombine.high %v1611, %v1611
    %v1754 = vunpack.c.l.s4 1966171168
    %v1755 = vunpack.c.0.s8 %v1754
    %v1756 = vlaneseq
    %v1757 = vshrl.u32 %v1756, 7
    %v1758 = vsub.s32 %v1755, %v1757
    %v1759 = vrot.slane %v1611, %v1758
    %v1761 = vunpack.c.l.s4 1966171168
    %v1762 = vunpack.c.0.s8 %v1761
    %v1763 = vlaneseq
    %v1764 = vshrl.u32 %v1763, 7
    %v1765 = vsub.s32 %v1762, %v1764
    %v1766 = vrot.slane %v1752, %v1765
    %v1767 = vcombine.high %v1759, %v1759
    %v1768 = vcombine.high %v1766, %v1766
    %v1770 = vunpack.c.l.s4 1966171168
    %v1771 = vunpack.c.0.s8 %v1770
    %v1772 = vlaneseq
    %v1773 = vshrl.u32 %v1772, 7
    %v1774 = vsub.s32 %v1771, %v1773
    %v1775 = vrot.slane %v1759, %v1774
    %v1777 = vunpack.c.l.s4 1966171168
    %v1778 = vunpack.c.0.s8 %v1777
    %v1779 = vlaneseq
    %v1780 = vshrl.u32 %v1779, 7
    %v1781 = vsub.s32 %v1778, %v1780
    %v1782 = vrot.slane %v1766, %v1781
    %v1784 = vunpack.c.l.s4 1966171168
    %v1785 = vunpack.c.0.s8 %v1784
    %v1786 = vlaneseq
    %v1787 = vshrl.u32 %v1786, 7
    %v1788 = vsub.s32 %v1785, %v1787
    %v1789 = vrot.slane %v1767, %v1788
    %v1791 = vunpack.c.l.s4 1966171168
    %v1792 = vunpack.c.0.s8 %v1791
    %v1793 = vlaneseq
    %v1794 = vshrl.u32 %v1793, 7
    %v1795 = vsub.s32 %v1792, %v1794
    %v1796 = vrot.slane %v1768, %v1795
    %v1797 = vcombine.high %v1775, %v1775
    %v1798 = vcombine.high %v1782, %v1782
    %v1799 = vcombine.high %v1789, %v1789
    %v1800 = vcombine.high %v1796, %v1796
    %v1809 = vadd.f32 %v1735, %v1775
    %v1810 = vadd.f32 %v1736, %v1789
    %v1811 = vadd.f32 %v1737, %v1797
    %v1812 = vadd.f32 %v1738, %v1799
    %v1813 = vadd.f32 %v1739, %v1782
    %v1814 = vadd.f32 %v1740, %v1796
    %v1815 = vadd.f32 %v1741, %v1798
    %v1816 = vadd.f32 %v1742, %v1800
    %v1817 = vxor.u32 %v1809, 2147483648
    %v1818 = vxor.u32 %v1810, 2147483648
    %v1819 = vxor.u32 %v1811, 2147483648
    %v1820 = vxor.u32 %v1812, 2147483648
    %v1821 = vxor.u32 %v1813, 2147483648
    %v1822 = vxor.u32 %v1814, 2147483648
    %v1823 = vxor.u32 %v1815, 2147483648
    %v1824 = vxor.u32 %v1816, 2147483648
    %v1825 = vmul.f32 %v1817, 1.442695
    %v1826 = vpow.pop %v1825
    %v1827 = vmul.f32 %v1818, 1.442695
    %v1828 = vpow.pop %v1827
    %v1829 = vmul.f32 %v1819, 1.442695
    %v1830 = vpow.pop %v1829
    %v1831 = vmul.f32 %v1820, 1.442695
    %v1832 = vpow.pop %v1831
    %v1833 = vmul.f32 %v1821, 1.442695
    %v1834 = vpow.pop %v1833
    %v1835 = vmul.f32 %v1822, 1.442695
    %v1836 = vpow.pop %v1835
    %v1837 = vmul.f32 %v1823, 1.442695
    %v1838 = vpow.pop %v1837
    %v1839 = vmul.f32 %v1824, 1.442695
    %v1840 = vpow.pop %v1839
    %v1841 = vadd.f32 %v1826, 1.0
    %v1842 = vadd.f32 %v1828, 1.0
    %v1843 = vadd.f32 %v1830, 1.0
    %v1844 = vadd.f32 %v1832, 1.0
    %v1845 = vadd.f32 %v1834, 1.0
    %v1846 = vadd.f32 %v1836, 1.0
    %v1847 = vadd.f32 %v1838, 1.0
    %v1848 = vadd.f32 %v1840, 1.0
    %v1849 = vrcp.pop %v1841
    %v1850 = vmul.f32 1.0, %v1849
    %v1851 = vrcp.pop %v1842
    %v1852 = vmul.f32 1.0, %v1851
    %v1853 = vrcp.pop %v1843
    %v1854 = vmul.f32 1.0, %v1853
    %v1855 = vrcp.pop %v1844
    %v1856 = vmul.f32 1.0, %v1855
    %v1857 = vrcp.pop %v1845
    %v1858 = vmul.f32 1.0, %v1857
    %v1859 = vrcp.pop %v1846
    %v1860 = vmul.f32 1.0, %v1859
    %v1861 = vrcp.pop %v1847
    %v1862 = vmul.f32 1.0, %v1861
    %v1863 = vrcp.pop %v1848
    %v1864 = vmul.f32 1.0, %v1863
    %v1865 = vmul.f32 %v1850, %v1452
    %v1866 = vmul.f32 %v1852, %v1453
    %v1867 = vmul.f32 %v1854, %v1454
    %v1868 = vmul.f32 %v1856, %v1455
    %v1869 = vmul.f32 %v1858, %v1456
    %v1870 = vmul.f32 %v1860, %v1457
    %v1871 = vmul.f32 %v1862, %v1458
    %v1872 = vmul.f32 %v1864, %v1459
    %v1881 = vcombine.low %v1865, %v1866
    %v1882 = vcombine.low %v1867, %v1868
    %v1883 = vcombine.low %v1869, %v1870
    %v1884 = vcombine.low %v1871, %v1872
    %v1886 = vunpack.c.l.s4 1966171168
    %v1887 = vunpack.c.0.s8 %v1886
    %v1888 = vlaneseq
    %v1889 = vshrl.u32 %v1888, 7
    %v1890 = vsub.s32 %v1887, %v1889
    %v1891 = vrot.slane %v1881, %v1890
    %v1893 = vunpack.c.l.s4 1966171168
    %v1894 = vunpack.c.0.s8 %v1893
    %v1895 = vlaneseq
    %v1896 = vshrl.u32 %v1895, 7
    %v1897 = vsub.s32 %v1894, %v1896
    %v1898 = vrot.slane %v1882, %v1897
    %v1900 = vunpack.c.l.s4 1966171168
    %v1901 = vunpack.c.0.s8 %v1900
    %v1902 = vlaneseq
    %v1903 = vshrl.u32 %v1902, 7
    %v1904 = vsub.s32 %v1901, %v1903
    %v1905 = vrot.slane %v1883, %v1904
    %v1907 = vunpack.c.l.s4 1966171168
    %v1908 = vunpack.c.0.s8 %v1907
    %v1909 = vlaneseq
    %v1910 = vshrl.u32 %v1909, 7
    %v1911 = vsub.s32 %v1908, %v1910
    %v1912 = vrot.slane %v1884, %v1911
    %v1913 = vcombine.low %v1891, %v1898
    %v1914 = vcombine.low %v1905, %v1912
    %v1916 = vunpack.c.l.s4 1966171168
    %v1917 = vunpack.c.0.s8 %v1916
    %v1918 = vlaneseq
    %v1919 = vshrl.u32 %v1918, 7
    %v1920 = vsub.s32 %v1917, %v1919
    %v1921 = vrot.slane %v1913, %v1920
    %v1923 = vunpack.c.l.s4 1966171168
    %v1924 = vunpack.c.0.s8 %v1923
    %v1925 = vlaneseq
    %v1926 = vshrl.u32 %v1925, 7
    %v1927 = vsub.s32 %v1924, %v1926
    %v1928 = vrot.slane %v1914, %v1927
    %v1929 = vcombine.low %v1921, %v1928
    %1931 = vmatprep.subr.mxu0 0.0
    %1932 = vmatpush1.msra.mxu0 %v75
    %1933 = vmatprep.subr.mxu0 0.0
    %1934 = vmatpush1.msra.mxu0 %v76
    %1935 = vmatprep.subr.mxu0 0.0
    %1936 = vmatpush1.msra.mxu0 %v77
    %1937 = vmatprep.subr.mxu0 0.0
    %1938 = vmatpush1.msra.mxu0 %v78
    %1939 = vmatprep.subr.mxu0 0.0
    %1940 = vmatpush1.msra.mxu0 %v79
    %1941 = vmatprep.subr.mxu0 0.0
    %1942 = vmatpush1.msra.mxu0 %v80
    %1943 = vmatprep.subr.mxu0 0.0
    %1944 = vmatpush1.msra.mxu0 %v81
    %1945 = vmatprep.subr.mxu0 0.0
    %1946 = vmatpush1.msra.mxu0 %v82
    %1947 = vmatprep.subr.mxu0 0.0
    %1948 = vmatpush1.msra.mxu0 %v83
    %1949 = vmatprep.subr.mxu0 0.0
    %1950 = vmatpush1.msra.mxu0 %v84
    %1951 = vmatprep.subr.mxu0 0.0
    %1952 = vmatpush1.msra.mxu0 %v85
    %1953 = vmatprep.subr.mxu0 0.0
    %1954 = vmatpush1.msra.mxu0 %v86
    %1955 = vmatprep.subr.mxu0 0.0
    %1956 = vmatpush1.msra.mxu0 %v87
    %1957 = vmatprep.subr.mxu0 0.0
    %1958 = vmatpush1.msra.mxu0 %v88
    %1959 = vmatprep.subr.mxu0 0.0
    %1960 = vmatpush1.msra.mxu0 %v89
    %1961 = vmatprep.subr.mxu0 0.0
    %1962 = vmatpush1.msra.mxu0 %v90
    %1963 = vmatprep.subr.mxu0 0.0
    %1964 = vmatpush1.msra.mxu0 0.0
    %1965 = vmatprep.subr.mxu0 0.0
    %1966 = vmatpush1.msra.mxu0 0.0
    %1967 = vmatprep.subr.mxu0 0.0
    %1968 = vmatpush1.msra.mxu0 0.0
    %1969 = vmatprep.subr.mxu0 0.0
    %1970 = vmatpush1.msra.mxu0 0.0
    %1971 = vmatprep.subr.mxu0 0.0
    %1972 = vmatpush1.msra.mxu0 0.0
    %1973 = vmatprep.subr.mxu0 0.0
    %1974 = vmatpush1.msra.mxu0 0.0
    %1975 = vmatprep.subr.mxu0 0.0
    %1976 = vmatpush1.msra.mxu0 0.0
    %1977 = vmatprep.subr.mxu0 0.0
    %1978 = vmatpush1.msra.mxu0 0.0
    %1979 = vmatprep.subr.mxu0 0.0
    %1980 = vmatpush1.msra.mxu0 0.0
    %1981 = vmatprep.subr.mxu0 0.0
    %1982 = vmatpush1.msra.mxu0 0.0
    %1983 = vmatprep.subr.mxu0 0.0
    %1984 = vmatpush1.msra.mxu0 0.0
    %1985 = vmatprep.subr.mxu0 0.0
    %1986 = vmatpush1.msra.mxu0 0.0
    %1987 = vmatprep.subr.mxu0 0.0
    %1988 = vmatpush1.msra.mxu0 0.0
    %1989 = vmatprep.subr.mxu0 0.0
    %1990 = vmatpush1.msra.mxu0 0.0
    %1991 = vmatprep.subr.mxu0 0.0
    %1992 = vmatpush1.msra.mxu0 0.0
    %1993 = vmatprep.subr.mxu0 0.0
    %1994 = vmatpush1.msra.mxu0 0.0
    %1995 = vmatprep.mubr.f32.mxu0 0.0
    %1996 = vmatmul.mubr.f32.gmra.mrb[0].mxu0 %v1929
    %v1997 = vpop.f32.mrb[0].mxu0
    %v1998 = vadd.f32 %v513, %v1997
    %v1999 = vpop.f32.mrb[0].mxu0
    %2000 = vdwg.mxu0
    %v2001 = vrot.slane %v1469, 2
    %v2002 = vrot.slane %v1471, 2
    %v2003 = vrot.slane %v1473, 2
    %v2004 = vrot.slane %v1475, 2
    %v2005 = vrot.slane %v1477, 2
    %v2006 = vrot.slane %v1479, 2
    %v2007 = vrot.slane %v1481, 2
    %v2008 = vrot.slane %v1483, 2
    %v2018 = vcombine.high %v1998, %v1998
    %v2020 = vunpack.c.l.s4 1966171168
    %v2021 = vunpack.c.0.s8 %v2020
    %v2022 = vlaneseq
    %v2023 = vshrl.u32 %v2022, 7
    %v2024 = vsub.s32 %v2021, %v2023
    %v2025 = vrot.slane %v1998, %v2024
    %v2027 = vunpack.c.l.s4 1966171168
    %v2028 = vunpack.c.0.s8 %v2027
    %v2029 = vlaneseq
    %v2030 = vshrl.u32 %v2029, 7
    %v2031 = vsub.s32 %v2028, %v2030
    %v2032 = vrot.slane %v2018, %v2031
    %v2033 = vcombine.high %v2025, %v2025
    %v2034 = vcombine.high %v2032, %v2032
    %v2036 = vunpack.c.l.s4 1966171168
    %v2037 = vunpack.c.0.s8 %v2036
    %v2038 = vlaneseq
    %v2039 = vshrl.u32 %v2038, 7
    %v2040 = vsub.s32 %v2037, %v2039
    %v2041 = vrot.slane %v2025, %v2040
    %v2043 = vunpack.c.l.s4 1966171168
    %v2044 = vunpack.c.0.s8 %v2043
    %v2045 = vlaneseq
    %v2046 = vshrl.u32 %v2045, 7
    %v2047 = vsub.s32 %v2044, %v2046
    %v2048 = vrot.slane %v2032, %v2047
    %v2050 = vunpack.c.l.s4 1966171168
    %v2051 = vunpack.c.0.s8 %v2050
    %v2052 = vlaneseq
    %v2053 = vshrl.u32 %v2052, 7
    %v2054 = vsub.s32 %v2051, %v2053
    %v2055 = vrot.slane %v2033, %v2054
    %v2057 = vunpack.c.l.s4 1966171168
    %v2058 = vunpack.c.0.s8 %v2057
    %v2059 = vlaneseq
    %v2060 = vshrl.u32 %v2059, 7
    %v2061 = vsub.s32 %v2058, %v2060
    %v2062 = vrot.slane %v2034, %v2061
    %v2063 = vcombine.high %v2041, %v2041
    %v2064 = vcombine.high %v2048, %v2048
    %v2065 = vcombine.high %v2055, %v2055
    %v2066 = vcombine.high %v2062, %v2062
    %v2075 = vadd.f32 %v2001, %v2041
    %v2076 = vadd.f32 %v2002, %v2055
    %v2077 = vadd.f32 %v2003, %v2063
    %v2078 = vadd.f32 %v2004, %v2065
    %v2079 = vadd.f32 %v2005, %v2048
    %v2080 = vadd.f32 %v2006, %v2062
    %v2081 = vadd.f32 %v2007, %v2064
    %v2082 = vadd.f32 %v2008, %v2066
    %v2083 = vtanh.pop %v2075
    %v2084 = vtanh.pop %v2076
    %v2085 = vtanh.pop %v2077
    %v2086 = vtanh.pop %v2078
    %v2087 = vtanh.pop %v2079
    %v2088 = vtanh.pop %v2080
    %v2089 = vtanh.pop %v2081
    %v2090 = vtanh.pop %v2082
    %v2091 = vmul.f32 %v1712, %v1452
    %v2092 = vmul.f32 %v1714, %v1453
    %v2093 = vmul.f32 %v1716, %v1454
    %v2094 = vmul.f32 %v1718, %v1455
    %v2095 = vmul.f32 %v1720, %v1456
    %v2096 = vmul.f32 %v1722, %v1457
    %v2097 = vmul.f32 %v1724, %v1458
    %v2098 = vmul.f32 %v1726, %v1459
    %v2099 = vsub.f32 1.0, %v1712
    %v2100 = vsub.f32 1.0, %v1714
    %v2101 = vsub.f32 1.0, %v1716
    %v2102 = vsub.f32 1.0, %v1718
    %v2103 = vsub.f32 1.0, %v1720
    %v2104 = vsub.f32 1.0, %v1722
    %v2105 = vsub.f32 1.0, %v1724
    %v2106 = vsub.f32 1.0, %v1726
    %v2107 = vmul.f32 %v2099, %v2083
    %v2108 = vmul.f32 %v2100, %v2084
    %v2109 = vmul.f32 %v2101, %v2085
    %v2110 = vmul.f32 %v2102, %v2086
    %v2111 = vmul.f32 %v2103, %v2087
    %v2112 = vmul.f32 %v2104, %v2088
    %v2113 = vmul.f32 %v2105, %v2089
    %v2114 = vmul.f32 %v2106, %v2090
    %v2115 = vadd.f32 %v2091, %v2107
    %v2116 = vadd.f32 %v2092, %v2108
    %v2117 = vadd.f32 %v2093, %v2109
    %v2118 = vadd.f32 %v2094, %v2110
    %v2119 = vadd.f32 %v2095, %v2111
    %v2120 = vadd.f32 %v2096, %v2112
    %v2121 = vadd.f32 %v2097, %v2113
    %v2122 = vadd.f32 %v2098, %v2114
    %v2123 = vmax.f32 %v2115, -5.0
    %v2124 = vmax.f32 %v2116, -5.0
    %v2125 = vmax.f32 %v2117, -5.0
    %v2126 = vmax.f32 %v2118, -5.0
    %v2127 = vmax.f32 %v2119, -5.0
    %v2128 = vmax.f32 %v2120, -5.0
    %v2129 = vmax.f32 %v2121, -5.0
    %v2130 = vmax.f32 %v2122, -5.0
    %v2131 = vmin.f32 %v2123, 5.0
    %v2132 = vmin.f32 %v2124, 5.0
    %v2133 = vmin.f32 %v2125, 5.0
    %v2134 = vmin.f32 %v2126, 5.0
    %v2135 = vmin.f32 %v2127, 5.0
    %v2136 = vmin.f32 %v2128, 5.0
    %v2137 = vmin.f32 %v2129, 5.0
    %v2138 = vmin.f32 %v2130, 5.0
    %2139 = vst [vmem:[%s6 + $0x2] sm:$0x1] %v2131
    %2140 = vst [vmem:[%s6 + $0xa] sm:$0x1] %v2132
    %2141 = vst [vmem:[%s6 + $0x12] sm:$0x1] %v2133
    %2142 = vst [vmem:[%s6 + $0x1a] sm:$0x1] %v2134
    %2143 = vst [vmem:[%s6 + $0x22] sm:$0x1] %v2135
    %2144 = vst [vmem:[%s6 + $0x2a] sm:$0x1] %v2136
    %2145 = vst [vmem:[%s6 + $0x32] sm:$0x1] %v2137
    %2146 = vst [vmem:[%s6 + $0x3a] sm:$0x1] %v2138
    %s2147 = scalar_lea.vmem %s0, 3
    %v2148 = vld [vmem:[%s2147] ss:$8 sm:$0x7]
    %s2149 = scalar_lea.vmem %s0, 27
    %v2150 = vld [vmem:[%s2149] ss:$8 sm:$0x7]
    %s2151 = scalar_lea.vmem %s0, 51
    %v2152 = vld [vmem:[%s2151] ss:$8 sm:$0x7]
    %s2153 = scalar_lea.vmem %s0, 75
    %v2154 = vld [vmem:[%s2153] ss:$8 sm:$0x7]
    %s2155 = scalar_lea.vmem %s0, 99
    %v2156 = vld [vmem:[%s2155] ss:$8 sm:$0x7]
    %s2157 = scalar_lea.vmem %s0, 123
    %v2158 = vld [vmem:[%s2157] ss:$8 sm:$0x7]
    %s2159 = scalar_lea.vmem %s0, 147
    %v2160 = vld [vmem:[%s2159] ss:$8 sm:$0x7]
    %s2161 = scalar_lea.vmem %s0, 171
    %v2162 = vld [vmem:[%s2161] ss:$8 sm:$0x7]
    %v2171 = vcombine.low %v2131, %v2132
    %v2172 = vcombine.low %v2133, %v2134
    %v2173 = vcombine.low %v2135, %v2136
    %v2174 = vcombine.low %v2137, %v2138
    %v2176 = vunpack.c.l.s4 1966171168
    %v2177 = vunpack.c.0.s8 %v2176
    %v2178 = vlaneseq
    %v2179 = vshrl.u32 %v2178, 7
    %v2180 = vsub.s32 %v2177, %v2179
    %v2181 = vrot.slane %v2171, %v2180
    %v2183 = vunpack.c.l.s4 1966171168
    %v2184 = vunpack.c.0.s8 %v2183
    %v2185 = vlaneseq
    %v2186 = vshrl.u32 %v2185, 7
    %v2187 = vsub.s32 %v2184, %v2186
    %v2188 = vrot.slane %v2172, %v2187
    %v2190 = vunpack.c.l.s4 1966171168
    %v2191 = vunpack.c.0.s8 %v2190
    %v2192 = vlaneseq
    %v2193 = vshrl.u32 %v2192, 7
    %v2194 = vsub.s32 %v2191, %v2193
    %v2195 = vrot.slane %v2173, %v2194
    %v2197 = vunpack.c.l.s4 1966171168
    %v2198 = vunpack.c.0.s8 %v2197
    %v2199 = vlaneseq
    %v2200 = vshrl.u32 %v2199, 7
    %v2201 = vsub.s32 %v2198, %v2200
    %v2202 = vrot.slane %v2174, %v2201
    %v2203 = vcombine.low %v2181, %v2188
    %v2204 = vcombine.low %v2195, %v2202
    %v2206 = vunpack.c.l.s4 1966171168
    %v2207 = vunpack.c.0.s8 %v2206
    %v2208 = vlaneseq
    %v2209 = vshrl.u32 %v2208, 7
    %v2210 = vsub.s32 %v2207, %v2209
    %v2211 = vrot.slane %v2203, %v2210
    %v2213 = vunpack.c.l.s4 1966171168
    %v2214 = vunpack.c.0.s8 %v2213
    %v2215 = vlaneseq
    %v2216 = vshrl.u32 %v2215, 7
    %v2217 = vsub.s32 %v2214, %v2216
    %v2218 = vrot.slane %v2204, %v2217
    %v2219 = vcombine.low %v2211, %v2218
    %2221 = vmatprep.subr.mxu0 %v44
    %2222 = vmatpush1.msra.mxu0 %v43
    %2223 = vmatprep.subr.mxu0 %v46
    %2224 = vmatpush1.msra.mxu0 %v45
    %2225 = vmatprep.subr.mxu0 %v48
    %2226 = vmatpush1.msra.mxu0 %v47
    %2227 = vmatprep.subr.mxu0 %v50
    %2228 = vmatpush1.msra.mxu0 %v49
    %2229 = vmatprep.subr.mxu0 %v52
    %2230 = vmatpush1.msra.mxu0 %v51
    %2231 = vmatprep.subr.mxu0 %v54
    %2232 = vmatpush1.msra.mxu0 %v53
    %2233 = vmatprep.subr.mxu0 %v56
    %2234 = vmatpush1.msra.mxu0 %v55
    %2235 = vmatprep.subr.mxu0 %v58
    %2236 = vmatpush1.msra.mxu0 %v57
    %2237 = vmatprep.subr.mxu0 %v60
    %2238 = vmatpush1.msra.mxu0 %v59
    %2239 = vmatprep.subr.mxu0 %v62
    %2240 = vmatpush1.msra.mxu0 %v61
    %2241 = vmatprep.subr.mxu0 %v64
    %2242 = vmatpush1.msra.mxu0 %v63
    %2243 = vmatprep.subr.mxu0 %v66
    %2244 = vmatpush1.msra.mxu0 %v65
    %2245 = vmatprep.subr.mxu0 %v68
    %2246 = vmatpush1.msra.mxu0 %v67
    %2247 = vmatprep.subr.mxu0 %v70
    %2248 = vmatpush1.msra.mxu0 %v69
    %2249 = vmatprep.subr.mxu0 %v72
    %2250 = vmatpush1.msra.mxu0 %v71
    %2251 = vmatprep.subr.mxu0 %v74
    %2252 = vmatpush1.msra.mxu0 %v73
    %2253 = vmatprep.subr.mxu0 0.0
    %2254 = vmatpush1.msra.mxu0 0.0
    %2255 = vmatprep.subr.mxu0 0.0
    %2256 = vmatpush1.msra.mxu0 0.0
    %2257 = vmatprep.subr.mxu0 0.0
    %2258 = vmatpush1.msra.mxu0 0.0
    %2259 = vmatprep.subr.mxu0 0.0
    %2260 = vmatpush1.msra.mxu0 0.0
    %2261 = vmatprep.subr.mxu0 0.0
    %2262 = vmatpush1.msra.mxu0 0.0
    %2263 = vmatprep.subr.mxu0 0.0
    %2264 = vmatpush1.msra.mxu0 0.0
    %2265 = vmatprep.subr.mxu0 0.0
    %2266 = vmatpush1.msra.mxu0 0.0
    %2267 = vmatprep.subr.mxu0 0.0
    %2268 = vmatpush1.msra.mxu0 0.0
    %2269 = vmatprep.subr.mxu0 0.0
    %2270 = vmatpush1.msra.mxu0 0.0
    %2271 = vmatprep.subr.mxu0 0.0
    %2272 = vmatpush1.msra.mxu0 0.0
    %2273 = vmatprep.subr.mxu0 0.0
    %2274 = vmatpush1.msra.mxu0 0.0
    %2275 = vmatprep.subr.mxu0 0.0
    %2276 = vmatpush1.msra.mxu0 0.0
    %2277 = vmatprep.subr.mxu0 0.0
    %2278 = vmatpush1.msra.mxu0 0.0
    %2279 = vmatprep.subr.mxu0 0.0
    %2280 = vmatpush1.msra.mxu0 0.0
    %2281 = vmatprep.subr.mxu0 0.0
    %2282 = vmatpush1.msra.mxu0 0.0
    %2283 = vmatprep.subr.mxu0 0.0
    %2284 = vmatpush1.msra.mxu0 0.0
    %2285 = vmatprep.mubr.f32.mxu0 0.0
    %2286 = vmatmul.mubr.f32.gmra.mrb[0].mxu0 %v2219
    %v2287 = vpop.f32.mrb[0].mxu0
    %v2288 = vadd.f32 %v113, %v2287
    %v2289 = vpop.f32.mrb[0].mxu0
    %v2290 = vadd.f32 %v117, %v2289
    %2291 = vdwg.mxu0
    %v2293 = vcombine.high %v2288, %v2288
    %v2295 = vunpack.c.l.s4 1966171168
    %v2296 = vunpack.c.0.s8 %v2295
    %v2297 = vlaneseq
    %v2298 = vshrl.u32 %v2297, 7
    %v2299 = vsub.s32 %v2296, %v2298
    %v2300 = vrot.slane %v2288, %v2299
    %v2302 = vunpack.c.l.s4 1966171168
    %v2303 = vunpack.c.0.s8 %v2302
    %v2304 = vlaneseq
    %v2305 = vshrl.u32 %v2304, 7
    %v2306 = vsub.s32 %v2303, %v2305
    %v2307 = vrot.slane %v2293, %v2306
    %v2308 = vcombine.high %v2300, %v2300
    %v2309 = vcombine.high %v2307, %v2307
    %v2311 = vunpack.c.l.s4 1966171168
    %v2312 = vunpack.c.0.s8 %v2311
    %v2313 = vlaneseq
    %v2314 = vshrl.u32 %v2313, 7
    %v2315 = vsub.s32 %v2312, %v2314
    %v2316 = vrot.slane %v2300, %v2315
    %v2318 = vunpack.c.l.s4 1966171168
    %v2319 = vunpack.c.0.s8 %v2318
    %v2320 = vlaneseq
    %v2321 = vshrl.u32 %v2320, 7
    %v2322 = vsub.s32 %v2319, %v2321
    %v2323 = vrot.slane %v2307, %v2322
    %v2325 = vunpack.c.l.s4 1966171168
    %v2326 = vunpack.c.0.s8 %v2325
    %v2327 = vlaneseq
    %v2328 = vshrl.u32 %v2327, 7
    %v2329 = vsub.s32 %v2326, %v2328
    %v2330 = vrot.slane %v2308, %v2329
    %v2332 = vunpack.c.l.s4 1966171168
    %v2333 = vunpack.c.0.s8 %v2332
    %v2334 = vlaneseq
    %v2335 = vshrl.u32 %v2334, 7
    %v2336 = vsub.s32 %v2333, %v2335
    %v2337 = vrot.slane %v2309, %v2336
    %v2338 = vcombine.high %v2316, %v2316
    %v2339 = vcombine.high %v2323, %v2323
    %v2340 = vcombine.high %v2330, %v2330
    %v2341 = vcombine.high %v2337, %v2337
    %v2350 = vadd.f32 %v2148, %v2316
    %v2351 = vadd.f32 %v2150, %v2330
    %v2352 = vadd.f32 %v2152, %v2338
    %v2353 = vadd.f32 %v2154, %v2340
    %v2354 = vadd.f32 %v2156, %v2323
    %v2355 = vadd.f32 %v2158, %v2337
    %v2356 = vadd.f32 %v2160, %v2339
    %v2357 = vadd.f32 %v2162, %v2341
    %v2358 = vxor.u32 %v2350, 2147483648
    %v2359 = vxor.u32 %v2351, 2147483648
    %v2360 = vxor.u32 %v2352, 2147483648
    %v2361 = vxor.u32 %v2353, 2147483648
    %v2362 = vxor.u32 %v2354, 2147483648
    %v2363 = vxor.u32 %v2355, 2147483648
    %v2364 = vxor.u32 %v2356, 2147483648
    %v2365 = vxor.u32 %v2357, 2147483648
    %v2366 = vmul.f32 %v2358, 1.442695
    %v2367 = vpow.pop %v2366
    %v2368 = vmul.f32 %v2359, 1.442695
    %v2369 = vpow.pop %v2368
    %v2370 = vmul.f32 %v2360, 1.442695
    %v2371 = vpow.pop %v2370
    %v2372 = vmul.f32 %v2361, 1.442695
    %v2373 = vpow.pop %v2372
    %v2374 = vmul.f32 %v2362, 1.442695
    %v2375 = vpow.pop %v2374
    %v2376 = vmul.f32 %v2363, 1.442695
    %v2377 = vpow.pop %v2376
    %v2378 = vmul.f32 %v2364, 1.442695
    %v2379 = vpow.pop %v2378
    %v2380 = vmul.f32 %v2365, 1.442695
    %v2381 = vpow.pop %v2380
    %v2382 = vadd.f32 %v2367, 1.0
    %v2383 = vadd.f32 %v2369, 1.0
    %v2384 = vadd.f32 %v2371, 1.0
    %v2385 = vadd.f32 %v2373, 1.0
    %v2386 = vadd.f32 %v2375, 1.0
    %v2387 = vadd.f32 %v2377, 1.0
    %v2388 = vadd.f32 %v2379, 1.0
    %v2389 = vadd.f32 %v2381, 1.0
    %v2390 = vrcp.pop %v2382
    %v2391 = vmul.f32 1.0, %v2390
    %v2392 = vrcp.pop %v2383
    %v2393 = vmul.f32 1.0, %v2392
    %v2394 = vrcp.pop %v2384
    %v2395 = vmul.f32 1.0, %v2394
    %v2396 = vrcp.pop %v2385
    %v2397 = vmul.f32 1.0, %v2396
    %v2398 = vrcp.pop %v2386
    %v2399 = vmul.f32 1.0, %v2398
    %v2400 = vrcp.pop %v2387
    %v2401 = vmul.f32 1.0, %v2400
    %v2402 = vrcp.pop %v2388
    %v2403 = vmul.f32 1.0, %v2402
    %v2404 = vrcp.pop %v2389
    %v2405 = vmul.f32 1.0, %v2404
    %v2414 = vrot.slane %v2148, 1
    %v2415 = vrot.slane %v2150, 1
    %v2416 = vrot.slane %v2152, 1
    %v2417 = vrot.slane %v2154, 1
    %v2418 = vrot.slane %v2156, 1
    %v2419 = vrot.slane %v2158, 1
    %v2420 = vrot.slane %v2160, 1
    %v2421 = vrot.slane %v2162, 1
    %v2431 = vcombine.high %v2290, %v2290
    %v2433 = vunpack.c.l.s4 1966171168
    %v2434 = vunpack.c.0.s8 %v2433
    %v2435 = vlaneseq
    %v2436 = vshrl.u32 %v2435, 7
    %v2437 = vsub.s32 %v2434, %v2436
    %v2438 = vrot.slane %v2290, %v2437
    %v2440 = vunpack.c.l.s4 1966171168
    %v2441 = vunpack.c.0.s8 %v2440
    %v2442 = vlaneseq
    %v2443 = vshrl.u32 %v2442, 7
    %v2444 = vsub.s32 %v2441, %v2443
    %v2445 = vrot.slane %v2431, %v2444
    %v2446 = vcombine.high %v2438, %v2438
    %v2447 = vcombine.high %v2445, %v2445
    %v2449 = vunpack.c.l.s4 1966171168
    %v2450 = vunpack.c.0.s8 %v2449
    %v2451 = vlaneseq
    %v2452 = vshrl.u32 %v2451, 7
    %v2453 = vsub.s32 %v2450, %v2452
    %v2454 = vrot.slane %v2438, %v2453
    %v2456 = vunpack.c.l.s4 1966171168
    %v2457 = vunpack.c.0.s8 %v2456
    %v2458 = vlaneseq
    %v2459 = vshrl.u32 %v2458, 7
    %v2460 = vsub.s32 %v2457, %v2459
    %v2461 = vrot.slane %v2445, %v2460
    %v2463 = vunpack.c.l.s4 1966171168
    %v2464 = vunpack.c.0.s8 %v2463
    %v2465 = vlaneseq
    %v2466 = vshrl.u32 %v2465, 7
    %v2467 = vsub.s32 %v2464, %v2466
    %v2468 = vrot.slane %v2446, %v2467
    %v2470 = vunpack.c.l.s4 1966171168
    %v2471 = vunpack.c.0.s8 %v2470
    %v2472 = vlaneseq
    %v2473 = vshrl.u32 %v2472, 7
    %v2474 = vsub.s32 %v2471, %v2473
    %v2475 = vrot.slane %v2447, %v2474
    %v2476 = vcombine.high %v2454, %v2454
    %v2477 = vcombine.high %v2461, %v2461
    %v2478 = vcombine.high %v2468, %v2468
    %v2479 = vcombine.high %v2475, %v2475
    %v2488 = vadd.f32 %v2414, %v2454
    %v2489 = vadd.f32 %v2415, %v2468
    %v2490 = vadd.f32 %v2416, %v2476
    %v2491 = vadd.f32 %v2417, %v2478
    %v2492 = vadd.f32 %v2418, %v2461
    %v2493 = vadd.f32 %v2419, %v2475
    %v2494 = vadd.f32 %v2420, %v2477
    %v2495 = vadd.f32 %v2421, %v2479
    %v2496 = vxor.u32 %v2488, 2147483648
    %v2497 = vxor.u32 %v2489, 2147483648
    %v2498 = vxor.u32 %v2490, 2147483648
    %v2499 = vxor.u32 %v2491, 2147483648
    %v2500 = vxor.u32 %v2492, 2147483648
    %v2501 = vxor.u32 %v2493, 2147483648
    %v2502 = vxor.u32 %v2494, 2147483648
    %v2503 = vxor.u32 %v2495, 2147483648
    %v2504 = vmul.f32 %v2496, 1.442695
    %v2505 = vpow.pop %v2504
    %v2506 = vmul.f32 %v2497, 1.442695
    %v2507 = vpow.pop %v2506
    %v2508 = vmul.f32 %v2498, 1.442695
    %v2509 = vpow.pop %v2508
    %v2510 = vmul.f32 %v2499, 1.442695
    %v2511 = vpow.pop %v2510
    %v2512 = vmul.f32 %v2500, 1.442695
    %v2513 = vpow.pop %v2512
    %v2514 = vmul.f32 %v2501, 1.442695
    %v2515 = vpow.pop %v2514
    %v2516 = vmul.f32 %v2502, 1.442695
    %v2517 = vpow.pop %v2516
    %v2518 = vmul.f32 %v2503, 1.442695
    %v2519 = vpow.pop %v2518
    %v2520 = vadd.f32 %v2505, 1.0
    %v2521 = vadd.f32 %v2507, 1.0
    %v2522 = vadd.f32 %v2509, 1.0
    %v2523 = vadd.f32 %v2511, 1.0
    %v2524 = vadd.f32 %v2513, 1.0
    %v2525 = vadd.f32 %v2515, 1.0
    %v2526 = vadd.f32 %v2517, 1.0
    %v2527 = vadd.f32 %v2519, 1.0
    %v2528 = vrcp.pop %v2520
    %v2529 = vmul.f32 1.0, %v2528
    %v2530 = vrcp.pop %v2521
    %v2531 = vmul.f32 1.0, %v2530
    %v2532 = vrcp.pop %v2522
    %v2533 = vmul.f32 1.0, %v2532
    %v2534 = vrcp.pop %v2523
    %v2535 = vmul.f32 1.0, %v2534
    %v2536 = vrcp.pop %v2524
    %v2537 = vmul.f32 1.0, %v2536
    %v2538 = vrcp.pop %v2525
    %v2539 = vmul.f32 1.0, %v2538
    %v2540 = vrcp.pop %v2526
    %v2541 = vmul.f32 1.0, %v2540
    %v2542 = vrcp.pop %v2527
    %v2543 = vmul.f32 1.0, %v2542
    %v2544 = vmul.f32 %v2529, %v2131
    %v2545 = vmul.f32 %v2531, %v2132
    %v2546 = vmul.f32 %v2533, %v2133
    %v2547 = vmul.f32 %v2535, %v2134
    %v2548 = vmul.f32 %v2537, %v2135
    %v2549 = vmul.f32 %v2539, %v2136
    %v2550 = vmul.f32 %v2541, %v2137
    %v2551 = vmul.f32 %v2543, %v2138
    %v2560 = vcombine.low %v2544, %v2545
    %v2561 = vcombine.low %v2546, %v2547
    %v2562 = vcombine.low %v2548, %v2549
    %v2563 = vcombine.low %v2550, %v2551
    %v2565 = vunpack.c.l.s4 1966171168
    %v2566 = vunpack.c.0.s8 %v2565
    %v2567 = vlaneseq
    %v2568 = vshrl.u32 %v2567, 7
    %v2569 = vsub.s32 %v2566, %v2568
    %v2570 = vrot.slane %v2560, %v2569
    %v2572 = vunpack.c.l.s4 1966171168
    %v2573 = vunpack.c.0.s8 %v2572
    %v2574 = vlaneseq
    %v2575 = vshrl.u32 %v2574, 7
    %v2576 = vsub.s32 %v2573, %v2575
    %v2577 = vrot.slane %v2561, %v2576
    %v2579 = vunpack.c.l.s4 1966171168
    %v2580 = vunpack.c.0.s8 %v2579
    %v2581 = vlaneseq
    %v2582 = vshrl.u32 %v2581, 7
    %v2583 = vsub.s32 %v2580, %v2582
    %v2584 = vrot.slane %v2562, %v2583
    %v2586 = vunpack.c.l.s4 1966171168
    %v2587 = vunpack.c.0.s8 %v2586
    %v2588 = vlaneseq
    %v2589 = vshrl.u32 %v2588, 7
    %v2590 = vsub.s32 %v2587, %v2589
    %v2591 = vrot.slane %v2563, %v2590
    %v2592 = vcombine.low %v2570, %v2577
    %v2593 = vcombine.low %v2584, %v2591
    %v2595 = vunpack.c.l.s4 1966171168
    %v2596 = vunpack.c.0.s8 %v2595
    %v2597 = vlaneseq
    %v2598 = vshrl.u32 %v2597, 7
    %v2599 = vsub.s32 %v2596, %v2598
    %v2600 = vrot.slane %v2592, %v2599
    %v2602 = vunpack.c.l.s4 1966171168
    %v2603 = vunpack.c.0.s8 %v2602
    %v2604 = vlaneseq
    %v2605 = vshrl.u32 %v2604, 7
    %v2606 = vsub.s32 %v2603, %v2605
    %v2607 = vrot.slane %v2593, %v2606
    %v2608 = vcombine.low %v2600, %v2607
    %2610 = vmatprep.subr.mxu0 0.0
    %2611 = vmatpush1.msra.mxu0 %v75
    %2612 = vmatprep.subr.mxu0 0.0
    %2613 = vmatpush1.msra.mxu0 %v76
    %2614 = vmatprep.subr.mxu0 0.0
    %2615 = vmatpush1.msra.mxu0 %v77
    %2616 = vmatprep.subr.mxu0 0.0
    %2617 = vmatpush1.msra.mxu0 %v78
    %2618 = vmatprep.subr.mxu0 0.0
    %2619 = vmatpush1.msra.mxu0 %v79
    %2620 = vmatprep.subr.mxu0 0.0
    %2621 = vmatpush1.msra.mxu0 %v80
    %2622 = vmatprep.subr.mxu0 0.0
    %2623 = vmatpush1.msra.mxu0 %v81
    %2624 = vmatprep.subr.mxu0 0.0
    %2625 = vmatpush1.msra.mxu0 %v82
    %2626 = vmatprep.subr.mxu0 0.0
    %2627 = vmatpush1.msra.mxu0 %v83
    %2628 = vmatprep.subr.mxu0 0.0
    %2629 = vmatpush1.msra.mxu0 %v84
    %2630 = vmatprep.subr.mxu0 0.0
    %2631 = vmatpush1.msra.mxu0 %v85
    %2632 = vmatprep.subr.mxu0 0.0
    %2633 = vmatpush1.msra.mxu0 %v86
    %2634 = vmatprep.subr.mxu0 0.0
    %2635 = vmatpush1.msra.mxu0 %v87
    %2636 = vmatprep.subr.mxu0 0.0
    %2637 = vmatpush1.msra.mxu0 %v88
    %2638 = vmatprep.subr.mxu0 0.0
    %2639 = vmatpush1.msra.mxu0 %v89
    %2640 = vmatprep.subr.mxu0 0.0
    %2641 = vmatpush1.msra.mxu0 %v90
    %2642 = vmatprep.subr.mxu0 0.0
    %2643 = vmatpush1.msra.mxu0 0.0
    %2644 = vmatprep.subr.mxu0 0.0
    %2645 = vmatpush1.msra.mxu0 0.0
    %2646 = vmatprep.subr.mxu0 0.0
    %2647 = vmatpush1.msra.mxu0 0.0
    %2648 = vmatprep.subr.mxu0 0.0
    %2649 = vmatpush1.msra.mxu0 0.0
    %2650 = vmatprep.subr.mxu0 0.0
    %2651 = vmatpush1.msra.mxu0 0.0
    %2652 = vmatprep.subr.mxu0 0.0
    %2653 = vmatpush1.msra.mxu0 0.0
    %2654 = vmatprep.subr.mxu0 0.0
    %2655 = vmatpush1.msra.mxu0 0.0
    %2656 = vmatprep.subr.mxu0 0.0
    %2657 = vmatpush1.msra.mxu0 0.0
    %2658 = vmatprep.subr.mxu0 0.0
    %2659 = vmatpush1.msra.mxu0 0.0
    %2660 = vmatprep.subr.mxu0 0.0
    %2661 = vmatpush1.msra.mxu0 0.0
    %2662 = vmatprep.subr.mxu0 0.0
    %2663 = vmatpush1.msra.mxu0 0.0
    %2664 = vmatprep.subr.mxu0 0.0
    %2665 = vmatpush1.msra.mxu0 0.0
    %2666 = vmatprep.subr.mxu0 0.0
    %2667 = vmatpush1.msra.mxu0 0.0
    %2668 = vmatprep.subr.mxu0 0.0
    %2669 = vmatpush1.msra.mxu0 0.0
    %2670 = vmatprep.subr.mxu0 0.0
    %2671 = vmatpush1.msra.mxu0 0.0
    %2672 = vmatprep.subr.mxu0 0.0
    %2673 = vmatpush1.msra.mxu0 0.0
    %2674 = vmatprep.mubr.f32.mxu0 0.0
    %2675 = vmatmul.mubr.f32.gmra.mrb[0].mxu0 %v2608
    %v2676 = vpop.f32.mrb[0].mxu0
    %v2677 = vadd.f32 %v513, %v2676
    %v2678 = vpop.f32.mrb[0].mxu0
    %2679 = vdwg.mxu0
    %v2680 = vrot.slane %v2148, 2
    %v2681 = vrot.slane %v2150, 2
    %v2682 = vrot.slane %v2152, 2
    %v2683 = vrot.slane %v2154, 2
    %v2684 = vrot.slane %v2156, 2
    %v2685 = vrot.slane %v2158, 2
    %v2686 = vrot.slane %v2160, 2
    %v2687 = vrot.slane %v2162, 2
    %v2697 = vcombine.high %v2677, %v2677
    %v2699 = vunpack.c.l.s4 1966171168
    %v2700 = vunpack.c.0.s8 %v2699
    %v2701 = vlaneseq
    %v2702 = vshrl.u32 %v2701, 7
    %v2703 = vsub.s32 %v2700, %v2702
    %v2704 = vrot.slane %v2677, %v2703
    %v2706 = vunpack.c.l.s4 1966171168
    %v2707 = vunpack.c.0.s8 %v2706
    %v2708 = vlaneseq
    %v2709 = vshrl.u32 %v2708, 7
    %v2710 = vsub.s32 %v2707, %v2709
    %v2711 = vrot.slane %v2697, %v2710
    %v2712 = vcombine.high %v2704, %v2704
    %v2713 = vcombine.high %v2711, %v2711
    %v2715 = vunpack.c.l.s4 1966171168
    %v2716 = vunpack.c.0.s8 %v2715
    %v2717 = vlaneseq
    %v2718 = vshrl.u32 %v2717, 7
    %v2719 = vsub.s32 %v2716, %v2718
    %v2720 = vrot.slane %v2704, %v2719
    %v2722 = vunpack.c.l.s4 1966171168
    %v2723 = vunpack.c.0.s8 %v2722
    %v2724 = vlaneseq
    %v2725 = vshrl.u32 %v2724, 7
    %v2726 = vsub.s32 %v2723, %v2725
    %v2727 = vrot.slane %v2711, %v2726
    %v2729 = vunpack.c.l.s4 1966171168
    %v2730 = vunpack.c.0.s8 %v2729
    %v2731 = vlaneseq
    %v2732 = vshrl.u32 %v2731, 7
    %v2733 = vsub.s32 %v2730, %v2732
    %v2734 = vrot.slane %v2712, %v2733
    %v2736 = vunpack.c.l.s4 1966171168
    %v2737 = vunpack.c.0.s8 %v2736
    %v2738 = vlaneseq
    %v2739 = vshrl.u32 %v2738, 7
    %v2740 = vsub.s32 %v2737, %v2739
    %v2741 = vrot.slane %v2713, %v2740
    %v2742 = vcombine.high %v2720, %v2720
    %v2743 = vcombine.high %v2727, %v2727
    %v2744 = vcombine.high %v2734, %v2734
    %v2745 = vcombine.high %v2741, %v2741
    %v2754 = vadd.f32 %v2680, %v2720
    %v2755 = vadd.f32 %v2681, %v2734
    %v2756 = vadd.f32 %v2682, %v2742
    %v2757 = vadd.f32 %v2683, %v2744
    %v2758 = vadd.f32 %v2684, %v2727
    %v2759 = vadd.f32 %v2685, %v2741
    %v2760 = vadd.f32 %v2686, %v2743
    %v2761 = vadd.f32 %v2687, %v2745
    %v2762 = vtanh.pop %v2754
    %v2763 = vtanh.pop %v2755
    %v2764 = vtanh.pop %v2756
    %v2765 = vtanh.pop %v2757
    %v2766 = vtanh.pop %v2758
    %v2767 = vtanh.pop %v2759
    %v2768 = vtanh.pop %v2760
    %v2769 = vtanh.pop %v2761
    %v2770 = vmul.f32 %v2391, %v2131
    %v2771 = vmul.f32 %v2393, %v2132
    %v2772 = vmul.f32 %v2395, %v2133
    %v2773 = vmul.f32 %v2397, %v2134
    %v2774 = vmul.f32 %v2399, %v2135
    %v2775 = vmul.f32 %v2401, %v2136
    %v2776 = vmul.f32 %v2403, %v2137
    %v2777 = vmul.f32 %v2405, %v2138
    %v2778 = vsub.f32 1.0, %v2391
    %v2779 = vsub.f32 1.0, %v2393
    %v2780 = vsub.f32 1.0, %v2395
    %v2781 = vsub.f32 1.0, %v2397
    %v2782 = vsub.f32 1.0, %v2399
    %v2783 = vsub.f32 1.0, %v2401
    %v2784 = vsub.f32 1.0, %v2403
    %v2785 = vsub.f32 1.0, %v2405
    %v2786 = vmul.f32 %v2778, %v2762
    %v2787 = vmul.f32 %v2779, %v2763
    %v2788 = vmul.f32 %v2780, %v2764
    %v2789 = vmul.f32 %v2781, %v2765
    %v2790 = vmul.f32 %v2782, %v2766
    %v2791 = vmul.f32 %v2783, %v2767
    %v2792 = vmul.f32 %v2784, %v2768
    %v2793 = vmul.f32 %v2785, %v2769
    %v2794 = vadd.f32 %v2770, %v2786
    %v2795 = vadd.f32 %v2771, %v2787
    %v2796 = vadd.f32 %v2772, %v2788
    %v2797 = vadd.f32 %v2773, %v2789
    %v2798 = vadd.f32 %v2774, %v2790
    %v2799 = vadd.f32 %v2775, %v2791
    %v2800 = vadd.f32 %v2776, %v2792
    %v2801 = vadd.f32 %v2777, %v2793
    %v2802 = vmax.f32 %v2794, -5.0
    %v2803 = vmax.f32 %v2795, -5.0
    %v2804 = vmax.f32 %v2796, -5.0
    %v2805 = vmax.f32 %v2797, -5.0
    %v2806 = vmax.f32 %v2798, -5.0
    %v2807 = vmax.f32 %v2799, -5.0
    %v2808 = vmax.f32 %v2800, -5.0
    %v2809 = vmax.f32 %v2801, -5.0
    %v2810 = vmin.f32 %v2802, 5.0
    %v2811 = vmin.f32 %v2803, 5.0
    %v2812 = vmin.f32 %v2804, 5.0
    %v2813 = vmin.f32 %v2805, 5.0
    %v2814 = vmin.f32 %v2806, 5.0
    %v2815 = vmin.f32 %v2807, 5.0
    %v2816 = vmin.f32 %v2808, 5.0
    %v2817 = vmin.f32 %v2809, 5.0
    %2818 = vst [vmem:[%s6 + $0x3] sm:$0x1] %v2810
    %2819 = vst [vmem:[%s6 + $0xb] sm:$0x1] %v2811
    %2820 = vst [vmem:[%s6 + $0x13] sm:$0x1] %v2812
    %2821 = vst [vmem:[%s6 + $0x1b] sm:$0x1] %v2813
    %2822 = vst [vmem:[%s6 + $0x23] sm:$0x1] %v2814
    %2823 = vst [vmem:[%s6 + $0x2b] sm:$0x1] %v2815
    %2824 = vst [vmem:[%s6 + $0x33] sm:$0x1] %v2816
    %2825 = vst [vmem:[%s6 + $0x3b] sm:$0x1] %v2817
    %s2826 = scalar_lea.vmem %s0, 4
    %v2827 = vld [vmem:[%s2826] ss:$8 sm:$0x7]
    %s2828 = scalar_lea.vmem %s0, 28
    %v2829 = vld [vmem:[%s2828] ss:$8 sm:$0x7]
    %s2830 = scalar_lea.vmem %s0, 52
    %v2831 = vld [vmem:[%s2830] ss:$8 sm:$0x7]
    %s2832 = scalar_lea.vmem %s0, 76
    %v2833 = vld [vmem:[%s2832] ss:$8 sm:$0x7]
    %s2834 = scalar_lea.vmem %s0, 100
    %v2835 = vld [vmem:[%s2834] ss:$8 sm:$0x7]
    %s2836 = scalar_lea.vmem %s0, 124
    %v2837 = vld [vmem:[%s2836] ss:$8 sm:$0x7]
    %s2838 = scalar_lea.vmem %s0, 148
    %v2839 = vld [vmem:[%s2838] ss:$8 sm:$0x7]
    %s2840 = scalar_lea.vmem %s0, 172
    %v2841 = vld [vmem:[%s2840] ss:$8 sm:$0x7]
    %v2850 = vcombine.low %v2810, %v2811
    %v2851 = vcombine.low %v2812, %v2813
    %v2852 = vcombine.low %v2814, %v2815
    %v2853 = vcombine.low %v2816, %v2817
    %v2855 = vunpack.c.l.s4 1966171168
    %v2856 = vunpack.c.0.s8 %v2855
    %v2857 = vlaneseq
    %v2858 = vshrl.u32 %v2857, 7
    %v2859 = vsub.s32 %v2856, %v2858
    %v2860 = vrot.slane %v2850, %v2859
    %v2862 = vunpack.c.l.s4 1966171168
    %v2863 = vunpack.c.0.s8 %v2862
    %v2864 = vlaneseq
    %v2865 = vshrl.u32 %v2864, 7
    %v2866 = vsub.s32 %v2863, %v2865
    %v2867 = vrot.slane %v2851, %v2866
    %v2869 = vunpack.c.l.s4 1966171168
    %v2870 = vunpack.c.0.s8 %v2869
    %v2871 = vlaneseq
    %v2872 = vshrl.u32 %v2871, 7
    %v2873 = vsub.s32 %v2870, %v2872
    %v2874 = vrot.slane %v2852, %v2873
    %v2876 = vunpack.c.l.s4 1966171168
    %v2877 = vunpack.c.0.s8 %v2876
    %v2878 = vlaneseq
    %v2879 = vshrl.u32 %v2878, 7
    %v2880 = vsub.s32 %v2877, %v2879
    %v2881 = vrot.slane %v2853, %v2880
    %v2882 = vcombine.low %v2860, %v2867
    %v2883 = vcombine.low %v2874, %v2881
    %v2885 = vunpack.c.l.s4 1966171168
    %v2886 = vunpack.c.0.s8 %v2885
    %v2887 = vlaneseq
    %v2888 = vshrl.u32 %v2887, 7
    %v2889 = vsub.s32 %v2886, %v2888
    %v2890 = vrot.slane %v2882, %v2889
    %v2892 = vunpack.c.l.s4 1966171168
    %v2893 = vunpack.c.0.s8 %v2892
    %v2894 = vlaneseq
    %v2895 = vshrl.u32 %v2894, 7
    %v2896 = vsub.s32 %v2893, %v2895
    %v2897 = vrot.slane %v2883, %v2896
    %v2898 = vcombine.low %v2890, %v2897
    %2900 = vmatprep.subr.mxu0 %v44
    %2901 = vmatpush1.msra.mxu0 %v43
    %2902 = vmatprep.subr.mxu0 %v46
    %2903 = vmatpush1.msra.mxu0 %v45
    %2904 = vmatprep.subr.mxu0 %v48
    %2905 = vmatpush1.msra.mxu0 %v47
    %2906 = vmatprep.subr.mxu0 %v50
    %2907 = vmatpush1.msra.mxu0 %v49
    %2908 = vmatprep.subr.mxu0 %v52
    %2909 = vmatpush1.msra.mxu0 %v51
    %2910 = vmatprep.subr.mxu0 %v54
    %2911 = vmatpush1.msra.mxu0 %v53
    %2912 = vmatprep.subr.mxu0 %v56
    %2913 = vmatpush1.msra.mxu0 %v55
    %2914 = vmatprep.subr.mxu0 %v58
    %2915 = vmatpush1.msra.mxu0 %v57
    %2916 = vmatprep.subr.mxu0 %v60
    %2917 = vmatpush1.msra.mxu0 %v59
    %2918 = vmatprep.subr.mxu0 %v62
    %2919 = vmatpush1.msra.mxu0 %v61
    %2920 = vmatprep.subr.mxu0 %v64
    %2921 = vmatpush1.msra.mxu0 %v63
    %2922 = vmatprep.subr.mxu0 %v66
    %2923 = vmatpush1.msra.mxu0 %v65
    %2924 = vmatprep.subr.mxu0 %v68
    %2925 = vmatpush1.msra.mxu0 %v67
    %2926 = vmatprep.subr.mxu0 %v70
    %2927 = vmatpush1.msra.mxu0 %v69
    %2928 = vmatprep.subr.mxu0 %v72
    %2929 = vmatpush1.msra.mxu0 %v71
    %2930 = vmatprep.subr.mxu0 %v74
    %2931 = vmatpush1.msra.mxu0 %v73
    %2932 = vmatprep.subr.mxu0 0.0
    %2933 = vmatpush1.msra.mxu0 0.0
    %2934 = vmatprep.subr.mxu0 0.0
    %2935 = vmatpush1.msra.mxu0 0.0
    %2936 = vmatprep.subr.mxu0 0.0
    %2937 = vmatpush1.msra.mxu0 0.0
    %2938 = vmatprep.subr.mxu0 0.0
    %2939 = vmatpush1.msra.mxu0 0.0
    %2940 = vmatprep.subr.mxu0 0.0
    %2941 = vmatpush1.msra.mxu0 0.0
    %2942 = vmatprep.subr.mxu0 0.0
    %2943 = vmatpush1.msra.mxu0 0.0
    %2944 = vmatprep.subr.mxu0 0.0
    %2945 = vmatpush1.msra.mxu0 0.0
    %2946 = vmatprep.subr.mxu0 0.0
    %2947 = vmatpush1.msra.mxu0 0.0
    %2948 = vmatprep.subr.mxu0 0.0
    %2949 = vmatpush1.msra.mxu0 0.0
    %2950 = vmatprep.subr.mxu0 0.0
    %2951 = vmatpush1.msra.mxu0 0.0
    %2952 = vmatprep.subr.mxu0 0.0
    %2953 = vmatpush1.msra.mxu0 0.0
    %2954 = vmatprep.subr.mxu0 0.0
    %2955 = vmatpush1.msra.mxu0 0.0
    %2956 = vmatprep.subr.mxu0 0.0
    %2957 = vmatpush1.msra.mxu0 0.0
    %2958 = vmatprep.subr.mxu0 0.0
    %2959 = vmatpush1.msra.mxu0 0.0
    %2960 = vmatprep.subr.mxu0 0.0
    %2961 = vmatpush1.msra.mxu0 0.0
    %2962 = vmatprep.subr.mxu0 0.0
    %2963 = vmatpush1.msra.mxu0 0.0
    %2964 = vmatprep.mubr.f32.mxu0 0.0
    %2965 = vmatmul.mubr.f32.gmra.mrb[0].mxu0 %v2898
    %v2966 = vpop.f32.mrb[0].mxu0
    %v2967 = vadd.f32 %v113, %v2966
    %v2968 = vpop.f32.mrb[0].mxu0
    %v2969 = vadd.f32 %v117, %v2968
    %2970 = vdwg.mxu0
    %v2972 = vcombine.high %v2967, %v2967
    %v2974 = vunpack.c.l.s4 1966171168
    %v2975 = vunpack.c.0.s8 %v2974
    %v2976 = vlaneseq
    %v2977 = vshrl.u32 %v2976, 7
    %v2978 = vsub.s32 %v2975, %v2977
    %v2979 = vrot.slane %v2967, %v2978
    %v2981 = vunpack.c.l.s4 1966171168
    %v2982 = vunpack.c.0.s8 %v2981
    %v2983 = vlaneseq
    %v2984 = vshrl.u32 %v2983, 7
    %v2985 = vsub.s32 %v2982, %v2984
    %v2986 = vrot.slane %v2972, %v2985
    %v2987 = vcombine.high %v2979, %v2979
    %v2988 = vcombine.high %v2986, %v2986
    %v2990 = vunpack.c.l.s4 1966171168
    %v2991 = vunpack.c.0.s8 %v2990
    %v2992 = vlaneseq
    %v2993 = vshrl.u32 %v2992, 7
    %v2994 = vsub.s32 %v2991, %v2993
    %v2995 = vrot.slane %v2979, %v2994
    %v2997 = vunpack.c.l.s4 1966171168
    %v2998 = vunpack.c.0.s8 %v2997
    %v2999 = vlaneseq
    %v3000 = vshrl.u32 %v2999, 7
    %v3001 = vsub.s32 %v2998, %v3000
    %v3002 = vrot.slane %v2986, %v3001
    %v3004 = vunpack.c.l.s4 1966171168
    %v3005 = vunpack.c.0.s8 %v3004
    %v3006 = vlaneseq
    %v3007 = vshrl.u32 %v3006, 7
    %v3008 = vsub.s32 %v3005, %v3007
    %v3009 = vrot.slane %v2987, %v3008
    %v3011 = vunpack.c.l.s4 1966171168
    %v3012 = vunpack.c.0.s8 %v3011
    %v3013 = vlaneseq
    %v3014 = vshrl.u32 %v3013, 7
    %v3015 = vsub.s32 %v3012, %v3014
    %v3016 = vrot.slane %v2988, %v3015
    %v3017 = vcombine.high %v2995, %v2995
    %v3018 = vcombine.high %v3002, %v3002
    %v3019 = vcombine.high %v3009, %v3009
    %v3020 = vcombine.high %v3016, %v3016
    %v3029 = vadd.f32 %v2827, %v2995
    %v3030 = vadd.f32 %v2829, %v3009
    %v3031 = vadd.f32 %v2831, %v3017
    %v3032 = vadd.f32 %v2833, %v3019
    %v3033 = vadd.f32 %v2835, %v3002
    %v3034 = vadd.f32 %v2837, %v3016
    %v3035 = vadd.f32 %v2839, %v3018
    %v3036 = vadd.f32 %v2841, %v3020
    %v3037 = vxor.u32 %v3029, 2147483648
    %v3038 = vxor.u32 %v3030, 2147483648
    %v3039 = vxor.u32 %v3031, 2147483648
    %v3040 = vxor.u32 %v3032, 2147483648
    %v3041 = vxor.u32 %v3033, 2147483648
    %v3042 = vxor.u32 %v3034, 2147483648
    %v3043 = vxor.u32 %v3035, 2147483648
    %v3044 = vxor.u32 %v3036, 2147483648
    %v3045 = vmul.f32 %v3037, 1.442695
    %v3046 = vpow.pop %v3045
    %v3047 = vmul.f32 %v3038, 1.442695
    %v3048 = vpow.pop %v3047
    %v3049 = vmul.f32 %v3039, 1.442695
    %v3050 = vpow.pop %v3049
    %v3051 = vmul.f32 %v3040, 1.442695
    %v3052 = vpow.pop %v3051
    %v3053 = vmul.f32 %v3041, 1.442695
    %v3054 = vpow.pop %v3053
    %v3055 = vmul.f32 %v3042, 1.442695
    %v3056 = vpow.pop %v3055
    %v3057 = vmul.f32 %v3043, 1.442695
    %v3058 = vpow.pop %v3057
    %v3059 = vmul.f32 %v3044, 1.442695
    %v3060 = vpow.pop %v3059
    %v3061 = vadd.f32 %v3046, 1.0
    %v3062 = vadd.f32 %v3048, 1.0
    %v3063 = vadd.f32 %v3050, 1.0
    %v3064 = vadd.f32 %v3052, 1.0
    %v3065 = vadd.f32 %v3054, 1.0
    %v3066 = vadd.f32 %v3056, 1.0
    %v3067 = vadd.f32 %v3058, 1.0
    %v3068 = vadd.f32 %v3060, 1.0
    %v3069 = vrcp.pop %v3061
    %v3070 = vmul.f32 1.0, %v3069
    %v3071 = vrcp.pop %v3062
    %v3072 = vmul.f32 1.0, %v3071
    %v3073 = vrcp.pop %v3063
    %v3074 = vmul.f32 1.0, %v3073
    %v3075 = vrcp.pop %v3064
    %v3076 = vmul.f32 1.0, %v3075
    %v3077 = vrcp.pop %v3065
    %v3078 = vmul.f32 1.0, %v3077
    %v3079 = vrcp.pop %v3066
    %v3080 = vmul.f32 1.0, %v3079
    %v3081 = vrcp.pop %v3067
    %v3082 = vmul.f32 1.0, %v3081
    %v3083 = vrcp.pop %v3068
    %v3084 = vmul.f32 1.0, %v3083
    %v3093 = vrot.slane %v2827, 1
    %v3094 = vrot.slane %v2829, 1
    %v3095 = vrot.slane %v2831, 1
    %v3096 = vrot.slane %v2833, 1
    %v3097 = vrot.slane %v2835, 1
    %v3098 = vrot.slane %v2837, 1
    %v3099 = vrot.slane %v2839, 1
    %v3100 = vrot.slane %v2841, 1
    %v3110 = vcombine.high %v2969, %v2969
    %v3112 = vunpack.c.l.s4 1966171168
    %v3113 = vunpack.c.0.s8 %v3112
    %v3114 = vlaneseq
    %v3115 = vshrl.u32 %v3114, 7
    %v3116 = vsub.s32 %v3113, %v3115
    %v3117 = vrot.slane %v2969, %v3116
    %v3119 = vunpack.c.l.s4 1966171168
    %v3120 = vunpack.c.0.s8 %v3119
    %v3121 = vlaneseq
    %v3122 = vshrl.u32 %v3121, 7
    %v3123 = vsub.s32 %v3120, %v3122
    %v3124 = vrot.slane %v3110, %v3123
    %v3125 = vcombine.high %v3117, %v3117
    %v3126 = vcombine.high %v3124, %v3124
    %v3128 = vunpack.c.l.s4 1966171168
    %v3129 = vunpack.c.0.s8 %v3128
    %v3130 = vlaneseq
    %v3131 = vshrl.u32 %v3130, 7
    %v3132 = vsub.s32 %v3129, %v3131
    %v3133 = vrot.slane %v3117, %v3132
    %v3135 = vunpack.c.l.s4 1966171168
    %v3136 = vunpack.c.0.s8 %v3135
    %v3137 = vlaneseq
    %v3138 = vshrl.u32 %v3137, 7
    %v3139 = vsub.s32 %v3136, %v3138
    %v3140 = vrot.slane %v3124, %v3139
    %v3142 = vunpack.c.l.s4 1966171168
    %v3143 = vunpack.c.0.s8 %v3142
    %v3144 = vlaneseq
    %v3145 = vshrl.u32 %v3144, 7
    %v3146 = vsub.s32 %v3143, %v3145
    %v3147 = vrot.slane %v3125, %v3146
    %v3149 = vunpack.c.l.s4 1966171168
    %v3150 = vunpack.c.0.s8 %v3149
    %v3151 = vlaneseq
    %v3152 = vshrl.u32 %v3151, 7
    %v3153 = vsub.s32 %v3150, %v3152
    %v3154 = vrot.slane %v3126, %v3153
    %v3155 = vcombine.high %v3133, %v3133
    %v3156 = vcombine.high %v3140, %v3140
    %v3157 = vcombine.high %v3147, %v3147
    %v3158 = vcombine.high %v3154, %v3154
    %v3167 = vadd.f32 %v3093, %v3133
    %v3168 = vadd.f32 %v3094, %v3147
    %v3169 = vadd.f32 %v3095, %v3155
    %v3170 = vadd.f32 %v3096, %v3157
    %v3171 = vadd.f32 %v3097, %v3140
    %v3172 = vadd.f32 %v3098, %v3154
    %v3173 = vadd.f32 %v3099, %v3156
    %v3174 = vadd.f32 %v3100, %v3158
    %v3175 = vxor.u32 %v3167, 2147483648
    %v3176 = vxor.u32 %v3168, 2147483648
    %v3177 = vxor.u32 %v3169, 2147483648
    %v3178 = vxor.u32 %v3170, 2147483648
    %v3179 = vxor.u32 %v3171, 2147483648
    %v3180 = vxor.u32 %v3172, 2147483648
    %v3181 = vxor.u32 %v3173, 2147483648
    %v3182 = vxor.u32 %v3174, 2147483648
    %v3183 = vmul.f32 %v3175, 1.442695
    %v3184 = vpow.pop %v3183
    %v3185 = vmul.f32 %v3176, 1.442695
    %v3186 = vpow.pop %v3185
    %v3187 = vmul.f32 %v3177, 1.442695
    %v3188 = vpow.pop %v3187
    %v3189 = vmul.f32 %v3178, 1.442695
    %v3190 = vpow.pop %v3189
    %v3191 = vmul.f32 %v3179, 1.442695
    %v3192 = vpow.pop %v3191
    %v3193 = vmul.f32 %v3180, 1.442695
    %v3194 = vpow.pop %v3193
    %v3195 = vmul.f32 %v3181, 1.442695
    %v3196 = vpow.pop %v3195
    %v3197 = vmul.f32 %v3182, 1.442695
    %v3198 = vpow.pop %v3197
    %v3199 = vadd.f32 %v3184, 1.0
    %v3200 = vadd.f32 %v3186, 1.0
    %v3201 = vadd.f32 %v3188, 1.0
    %v3202 = vadd.f32 %v3190, 1.0
    %v3203 = vadd.f32 %v3192, 1.0
    %v3204 = vadd.f32 %v3194, 1.0
    %v3205 = vadd.f32 %v3196, 1.0
    %v3206 = vadd.f32 %v3198, 1.0
    %v3207 = vrcp.pop %v3199
    %v3208 = vmul.f32 1.0, %v3207
    %v3209 = vrcp.pop %v3200
    %v3210 = vmul.f32 1.0, %v3209
    %v3211 = vrcp.pop %v3201
    %v3212 = vmul.f32 1.0, %v3211
    %v3213 = vrcp.pop %v3202
    %v3214 = vmul.f32 1.0, %v3213
    %v3215 = vrcp.pop %v3203
    %v3216 = vmul.f32 1.0, %v3215
    %v3217 = vrcp.pop %v3204
    %v3218 = vmul.f32 1.0, %v3217
    %v3219 = vrcp.pop %v3205
    %v3220 = vmul.f32 1.0, %v3219
    %v3221 = vrcp.pop %v3206
    %v3222 = vmul.f32 1.0, %v3221
    %v3223 = vmul.f32 %v3208, %v2810
    %v3224 = vmul.f32 %v3210, %v2811
    %v3225 = vmul.f32 %v3212, %v2812
    %v3226 = vmul.f32 %v3214, %v2813
    %v3227 = vmul.f32 %v3216, %v2814
    %v3228 = vmul.f32 %v3218, %v2815
    %v3229 = vmul.f32 %v3220, %v2816
    %v3230 = vmul.f32 %v3222, %v2817
    %v3239 = vcombine.low %v3223, %v3224
    %v3240 = vcombine.low %v3225, %v3226
    %v3241 = vcombine.low %v3227, %v3228
    %v3242 = vcombine.low %v3229, %v3230
    %v3244 = vunpack.c.l.s4 1966171168
    %v3245 = vunpack.c.0.s8 %v3244
    %v3246 = vlaneseq
    %v3247 = vshrl.u32 %v3246, 7
    %v3248 = vsub.s32 %v3245, %v3247
    %v3249 = vrot.slane %v3239, %v3248
    %v3251 = vunpack.c.l.s4 1966171168
    %v3252 = vunpack.c.0.s8 %v3251
    %v3253 = vlaneseq
    %v3254 = vshrl.u32 %v3253, 7
    %v3255 = vsub.s32 %v3252, %v3254
    %v3256 = vrot.slane %v3240, %v3255
    %v3258 = vunpack.c.l.s4 1966171168
    %v3259 = vunpack.c.0.s8 %v3258
    %v3260 = vlaneseq
    %v3261 = vshrl.u32 %v3260, 7
    %v3262 = vsub.s32 %v3259, %v3261
    %v3263 = vrot.slane %v3241, %v3262
    %v3265 = vunpack.c.l.s4 1966171168
    %v3266 = vunpack.c.0.s8 %v3265
    %v3267 = vlaneseq
    %v3268 = vshrl.u32 %v3267, 7
    %v3269 = vsub.s32 %v3266, %v3268
    %v3270 = vrot.slane %v3242, %v3269
    %v3271 = vcombine.low %v3249, %v3256
    %v3272 = vcombine.low %v3263, %v3270
    %v3274 = vunpack.c.l.s4 1966171168
    %v3275 = vunpack.c.0.s8 %v3274
    %v3276 = vlaneseq
    %v3277 = vshrl.u32 %v3276, 7
    %v3278 = vsub.s32 %v3275, %v3277
    %v3279 = vrot.slane %v3271, %v3278
    %v3281 = vunpack.c.l.s4 1966171168
    %v3282 = vunpack.c.0.s8 %v3281
    %v3283 = vlaneseq
    %v3284 = vshrl.u32 %v3283, 7
    %v3285 = vsub.s32 %v3282, %v3284
    %v3286 = vrot.slane %v3272, %v3285
    %v3287 = vcombine.low %v3279, %v3286
    %3289 = vmatprep.subr.mxu0 0.0
    %3290 = vmatpush1.msra.mxu0 %v75
    %3291 = vmatprep.subr.mxu0 0.0
    %3292 = vmatpush1.msra.mxu0 %v76
    %3293 = vmatprep.subr.mxu0 0.0
    %3294 = vmatpush1.msra.mxu0 %v77
    %3295 = vmatprep.subr.mxu0 0.0
    %3296 = vmatpush1.msra.mxu0 %v78
    %3297 = vmatprep.subr.mxu0 0.0
    %3298 = vmatpush1.msra.mxu0 %v79
    %3299 = vmatprep.subr.mxu0 0.0
    %3300 = vmatpush1.msra.mxu0 %v80
    %3301 = vmatprep.subr.mxu0 0.0
    %3302 = vmatpush1.msra.mxu0 %v81
    %3303 = vmatprep.subr.mxu0 0.0
    %3304 = vmatpush1.msra.mxu0 %v82
    %3305 = vmatprep.subr.mxu0 0.0
    %3306 = vmatpush1.msra.mxu0 %v83
    %3307 = vmatprep.subr.mxu0 0.0
    %3308 = vmatpush1.msra.mxu0 %v84
    %3309 = vmatprep.subr.mxu0 0.0
    %3310 = vmatpush1.msra.mxu0 %v85
    %3311 = vmatprep.subr.mxu0 0.0
    %3312 = vmatpush1.msra.mxu0 %v86
    %3313 = vmatprep.subr.mxu0 0.0
    %3314 = vmatpush1.msra.mxu0 %v87
    %3315 = vmatprep.subr.mxu0 0.0
    %3316 = vmatpush1.msra.mxu0 %v88
    %3317 = vmatprep.subr.mxu0 0.0
    %3318 = vmatpush1.msra.mxu0 %v89
    %3319 = vmatprep.subr.mxu0 0.0
    %3320 = vmatpush1.msra.mxu0 %v90
    %3321 = vmatprep.subr.mxu0 0.0
    %3322 = vmatpush1.msra.mxu0 0.0
    %3323 = vmatprep.subr.mxu0 0.0
    %3324 = vmatpush1.msra.mxu0 0.0
    %3325 = vmatprep.subr.mxu0 0.0
    %3326 = vmatpush1.msra.mxu0 0.0
    %3327 = vmatprep.subr.mxu0 0.0
    %3328 = vmatpush1.msra.mxu0 0.0
    %3329 = vmatprep.subr.mxu0 0.0
    %3330 = vmatpush1.msra.mxu0 0.0
    %3331 = vmatprep.subr.mxu0 0.0
    %3332 = vmatpush1.msra.mxu0 0.0
    %3333 = vmatprep.subr.mxu0 0.0
    %3334 = vmatpush1.msra.mxu0 0.0
    %3335 = vmatprep.subr.mxu0 0.0
    %3336 = vmatpush1.msra.mxu0 0.0
    %3337 = vmatprep.subr.mxu0 0.0
    %3338 = vmatpush1.msra.mxu0 0.0
    %3339 = vmatprep.subr.mxu0 0.0
    %3340 = vmatpush1.msra.mxu0 0.0
    %3341 = vmatprep.subr.mxu0 0.0
    %3342 = vmatpush1.msra.mxu0 0.0
    %3343 = vmatprep.subr.mxu0 0.0
    %3344 = vmatpush1.msra.mxu0 0.0
    %3345 = vmatprep.subr.mxu0 0.0
    %3346 = vmatpush1.msra.mxu0 0.0
    %3347 = vmatprep.subr.mxu0 0.0
    %3348 = vmatpush1.msra.mxu0 0.0
    %3349 = vmatprep.subr.mxu0 0.0
    %3350 = vmatpush1.msra.mxu0 0.0
    %3351 = vmatprep.subr.mxu0 0.0
    %3352 = vmatpush1.msra.mxu0 0.0
    %3353 = vmatprep.mubr.f32.mxu0 0.0
    %3354 = vmatmul.mubr.f32.gmra.mrb[0].mxu0 %v3287
    %v3355 = vpop.f32.mrb[0].mxu0
    %v3356 = vadd.f32 %v513, %v3355
    %v3357 = vpop.f32.mrb[0].mxu0
    %3358 = vdwg.mxu0
    %v3359 = vrot.slane %v2827, 2
    %v3360 = vrot.slane %v2829, 2
    %v3361 = vrot.slane %v2831, 2
    %v3362 = vrot.slane %v2833, 2
    %v3363 = vrot.slane %v2835, 2
    %v3364 = vrot.slane %v2837, 2
    %v3365 = vrot.slane %v2839, 2
    %v3366 = vrot.slane %v2841, 2
    %v3376 = vcombine.high %v3356, %v3356
    %v3378 = vunpack.c.l.s4 1966171168
    %v3379 = vunpack.c.0.s8 %v3378
    %v3380 = vlaneseq
    %v3381 = vshrl.u32 %v3380, 7
    %v3382 = vsub.s32 %v3379, %v3381
    %v3383 = vrot.slane %v3356, %v3382
    %v3385 = vunpack.c.l.s4 1966171168
    %v3386 = vunpack.c.0.s8 %v3385
    %v3387 = vlaneseq
    %v3388 = vshrl.u32 %v3387, 7
    %v3389 = vsub.s32 %v3386, %v3388
    %v3390 = vrot.slane %v3376, %v3389
    %v3391 = vcombine.high %v3383, %v3383
    %v3392 = vcombine.high %v3390, %v3390
    %v3394 = vunpack.c.l.s4 1966171168
    %v3395 = vunpack.c.0.s8 %v3394
    %v3396 = vlaneseq
    %v3397 = vshrl.u32 %v3396, 7
    %v3398 = vsub.s32 %v3395, %v3397
    %v3399 = vrot.slane %v3383, %v3398
    %v3401 = vunpack.c.l.s4 1966171168
    %v3402 = vunpack.c.0.s8 %v3401
    %v3403 = vlaneseq
    %v3404 = vshrl.u32 %v3403, 7
    %v3405 = vsub.s32 %v3402, %v3404
    %v3406 = vrot.slane %v3390, %v3405
    %v3408 = vunpack.c.l.s4 1966171168
    %v3409 = vunpack.c.0.s8 %v3408
    %v3410 = vlaneseq
    %v3411 = vshrl.u32 %v3410, 7
    %v3412 = vsub.s32 %v3409, %v3411
    %v3413 = vrot.slane %v3391, %v3412
    %v3415 = vunpack.c.l.s4 1966171168
    %v3416 = vunpack.c.0.s8 %v3415
    %v3417 = vlaneseq
    %v3418 = vshrl.u32 %v3417, 7
    %v3419 = vsub.s32 %v3416, %v3418
    %v3420 = vrot.slane %v3392, %v3419
    %v3421 = vcombine.high %v3399, %v3399
    %v3422 = vcombine.high %v3406, %v3406
    %v3423 = vcombine.high %v3413, %v3413
    %v3424 = vcombine.high %v3420, %v3420
    %v3433 = vadd.f32 %v3359, %v3399
    %v3434 = vadd.f32 %v3360, %v3413
    %v3435 = vadd.f32 %v3361, %v3421
    %v3436 = vadd.f32 %v3362, %v3423
    %v3437 = vadd.f32 %v3363, %v3406
    %v3438 = vadd.f32 %v3364, %v3420
    %v3439 = vadd.f32 %v3365, %v3422
    %v3440 = vadd.f32 %v3366, %v3424
    %v3441 = vtanh.pop %v3433
    %v3442 = vtanh.pop %v3434
    %v3443 = vtanh.pop %v3435
    %v3444 = vtanh.pop %v3436
    %v3445 = vtanh.pop %v3437
    %v3446 = vtanh.pop %v3438
    %v3447 = vtanh.pop %v3439
    %v3448 = vtanh.pop %v3440
    %v3449 = vmul.f32 %v3070, %v2810
    %v3450 = vmul.f32 %v3072, %v2811
    %v3451 = vmul.f32 %v3074, %v2812
    %v3452 = vmul.f32 %v3076, %v2813
    %v3453 = vmul.f32 %v3078, %v2814
    %v3454 = vmul.f32 %v3080, %v2815
    %v3455 = vmul.f32 %v3082, %v2816
    %v3456 = vmul.f32 %v3084, %v2817
    %v3457 = vsub.f32 1.0, %v3070
    %v3458 = vsub.f32 1.0, %v3072
    %v3459 = vsub.f32 1.0, %v3074
    %v3460 = vsub.f32 1.0, %v3076
    %v3461 = vsub.f32 1.0, %v3078
    %v3462 = vsub.f32 1.0, %v3080
    %v3463 = vsub.f32 1.0, %v3082
    %v3464 = vsub.f32 1.0, %v3084
    %v3465 = vmul.f32 %v3457, %v3441
    %v3466 = vmul.f32 %v3458, %v3442
    %v3467 = vmul.f32 %v3459, %v3443
    %v3468 = vmul.f32 %v3460, %v3444
    %v3469 = vmul.f32 %v3461, %v3445
    %v3470 = vmul.f32 %v3462, %v3446
    %v3471 = vmul.f32 %v3463, %v3447
    %v3472 = vmul.f32 %v3464, %v3448
    %v3473 = vadd.f32 %v3449, %v3465
    %v3474 = vadd.f32 %v3450, %v3466
    %v3475 = vadd.f32 %v3451, %v3467
    %v3476 = vadd.f32 %v3452, %v3468
    %v3477 = vadd.f32 %v3453, %v3469
    %v3478 = vadd.f32 %v3454, %v3470
    %v3479 = vadd.f32 %v3455, %v3471
    %v3480 = vadd.f32 %v3456, %v3472
    %v3481 = vmax.f32 %v3473, -5.0
    %v3482 = vmax.f32 %v3474, -5.0
    %v3483 = vmax.f32 %v3475, -5.0
    %v3484 = vmax.f32 %v3476, -5.0
    %v3485 = vmax.f32 %v3477, -5.0
    %v3486 = vmax.f32 %v3478, -5.0
    %v3487 = vmax.f32 %v3479, -5.0
    %v3488 = vmax.f32 %v3480, -5.0
    %v3489 = vmin.f32 %v3481, 5.0
    %v3490 = vmin.f32 %v3482, 5.0
    %v3491 = vmin.f32 %v3483, 5.0
    %v3492 = vmin.f32 %v3484, 5.0
    %v3493 = vmin.f32 %v3485, 5.0
    %v3494 = vmin.f32 %v3486, 5.0
    %v3495 = vmin.f32 %v3487, 5.0
    %v3496 = vmin.f32 %v3488, 5.0
    %3497 = vst [vmem:[%s6 + $0x4] sm:$0x1] %v3489
    %3498 = vst [vmem:[%s6 + $0xc] sm:$0x1] %v3490
    %3499 = vst [vmem:[%s6 + $0x14] sm:$0x1] %v3491
    %3500 = vst [vmem:[%s6 + $0x1c] sm:$0x1] %v3492
    %3501 = vst [vmem:[%s6 + $0x24] sm:$0x1] %v3493
    %3502 = vst [vmem:[%s6 + $0x2c] sm:$0x1] %v3494
    %3503 = vst [vmem:[%s6 + $0x34] sm:$0x1] %v3495
    %3504 = vst [vmem:[%s6 + $0x3c] sm:$0x1] %v3496
    %s3505 = scalar_lea.vmem %s0, 5
    %v3506 = vld [vmem:[%s3505] ss:$8 sm:$0x7]
    %s3507 = scalar_lea.vmem %s0, 29
    %v3508 = vld [vmem:[%s3507] ss:$8 sm:$0x7]
    %s3509 = scalar_lea.vmem %s0, 53
    %v3510 = vld [vmem:[%s3509] ss:$8 sm:$0x7]
    %s3511 = scalar_lea.vmem %s0, 77
    %v3512 = vld [vmem:[%s3511] ss:$8 sm:$0x7]
    %s3513 = scalar_lea.vmem %s0, 101
    %v3514 = vld [vmem:[%s3513] ss:$8 sm:$0x7]
    %s3515 = scalar_lea.vmem %s0, 125
    %v3516 = vld [vmem:[%s3515] ss:$8 sm:$0x7]
    %s3517 = scalar_lea.vmem %s0, 149
    %v3518 = vld [vmem:[%s3517] ss:$8 sm:$0x7]
    %s3519 = scalar_lea.vmem %s0, 173
    %v3520 = vld [vmem:[%s3519] ss:$8 sm:$0x7]
    %v3529 = vcombine.low %v3489, %v3490
    %v3530 = vcombine.low %v3491, %v3492
    %v3531 = vcombine.low %v3493, %v3494
    %v3532 = vcombine.low %v3495, %v3496
    %v3534 = vunpack.c.l.s4 1966171168
    %v3535 = vunpack.c.0.s8 %v3534
    %v3536 = vlaneseq
    %v3537 = vshrl.u32 %v3536, 7
    %v3538 = vsub.s32 %v3535, %v3537
    %v3539 = vrot.slane %v3529, %v3538
    %v3541 = vunpack.c.l.s4 1966171168
    %v3542 = vunpack.c.0.s8 %v3541
    %v3543 = vlaneseq
    %v3544 = vshrl.u32 %v3543, 7
    %v3545 = vsub.s32 %v3542, %v3544
    %v3546 = vrot.slane %v3530, %v3545
    %v3548 = vunpack.c.l.s4 1966171168
    %v3549 = vunpack.c.0.s8 %v3548
    %v3550 = vlaneseq
    %v3551 = vshrl.u32 %v3550, 7
    %v3552 = vsub.s32 %v3549, %v3551
    %v3553 = vrot.slane %v3531, %v3552
    %v3555 = vunpack.c.l.s4 1966171168
    %v3556 = vunpack.c.0.s8 %v3555
    %v3557 = vlaneseq
    %v3558 = vshrl.u32 %v3557, 7
    %v3559 = vsub.s32 %v3556, %v3558
    %v3560 = vrot.slane %v3532, %v3559
    %v3561 = vcombine.low %v3539, %v3546
    %v3562 = vcombine.low %v3553, %v3560
    %v3564 = vunpack.c.l.s4 1966171168
    %v3565 = vunpack.c.0.s8 %v3564
    %v3566 = vlaneseq
    %v3567 = vshrl.u32 %v3566, 7
    %v3568 = vsub.s32 %v3565, %v3567
    %v3569 = vrot.slane %v3561, %v3568
    %v3571 = vunpack.c.l.s4 1966171168
    %v3572 = vunpack.c.0.s8 %v3571
    %v3573 = vlaneseq
    %v3574 = vshrl.u32 %v3573, 7
    %v3575 = vsub.s32 %v3572, %v3574
    %v3576 = vrot.slane %v3562, %v3575
    %v3577 = vcombine.low %v3569, %v3576
    %3579 = vmatprep.subr.mxu0 %v44
    %3580 = vmatpush1.msra.mxu0 %v43
    %3581 = vmatprep.subr.mxu0 %v46
    %3582 = vmatpush1.msra.mxu0 %v45
    %3583 = vmatprep.subr.mxu0 %v48
    %3584 = vmatpush1.msra.mxu0 %v47
    %3585 = vmatprep.subr.mxu0 %v50
    %3586 = vmatpush1.msra.mxu0 %v49
    %3587 = vmatprep.subr.mxu0 %v52
    %3588 = vmatpush1.msra.mxu0 %v51
    %3589 = vmatprep.subr.mxu0 %v54
    %3590 = vmatpush1.msra.mxu0 %v53
    %3591 = vmatprep.subr.mxu0 %v56
    %3592 = vmatpush1.msra.mxu0 %v55
    %3593 = vmatprep.subr.mxu0 %v58
    %3594 = vmatpush1.msra.mxu0 %v57
    %3595 = vmatprep.subr.mxu0 %v60
    %3596 = vmatpush1.msra.mxu0 %v59
    %3597 = vmatprep.subr.mxu0 %v62
    %3598 = vmatpush1.msra.mxu0 %v61
    %3599 = vmatprep.subr.mxu0 %v64
    %3600 = vmatpush1.msra.mxu0 %v63
    %3601 = vmatprep.subr.mxu0 %v66
    %3602 = vmatpush1.msra.mxu0 %v65
    %3603 = vmatprep.subr.mxu0 %v68
    %3604 = vmatpush1.msra.mxu0 %v67
    %3605 = vmatprep.subr.mxu0 %v70
    %3606 = vmatpush1.msra.mxu0 %v69
    %3607 = vmatprep.subr.mxu0 %v72
    %3608 = vmatpush1.msra.mxu0 %v71
    %3609 = vmatprep.subr.mxu0 %v74
    %3610 = vmatpush1.msra.mxu0 %v73
    %3611 = vmatprep.subr.mxu0 0.0
    %3612 = vmatpush1.msra.mxu0 0.0
    %3613 = vmatprep.subr.mxu0 0.0
    %3614 = vmatpush1.msra.mxu0 0.0
    %3615 = vmatprep.subr.mxu0 0.0
    %3616 = vmatpush1.msra.mxu0 0.0
    %3617 = vmatprep.subr.mxu0 0.0
    %3618 = vmatpush1.msra.mxu0 0.0
    %3619 = vmatprep.subr.mxu0 0.0
    %3620 = vmatpush1.msra.mxu0 0.0
    %3621 = vmatprep.subr.mxu0 0.0
    %3622 = vmatpush1.msra.mxu0 0.0
    %3623 = vmatprep.subr.mxu0 0.0
    %3624 = vmatpush1.msra.mxu0 0.0
    %3625 = vmatprep.subr.mxu0 0.0
    %3626 = vmatpush1.msra.mxu0 0.0
    %3627 = vmatprep.subr.mxu0 0.0
    %3628 = vmatpush1.msra.mxu0 0.0
    %3629 = vmatprep.subr.mxu0 0.0
    %3630 = vmatpush1.msra.mxu0 0.0
    %3631 = vmatprep.subr.mxu0 0.0
    %3632 = vmatpush1.msra.mxu0 0.0
    %3633 = vmatprep.subr.mxu0 0.0
    %3634 = vmatpush1.msra.mxu0 0.0
    %3635 = vmatprep.subr.mxu0 0.0
    %3636 = vmatpush1.msra.mxu0 0.0
    %3637 = vmatprep.subr.mxu0 0.0
    %3638 = vmatpush1.msra.mxu0 0.0
    %3639 = vmatprep.subr.mxu0 0.0
    %3640 = vmatpush1.msra.mxu0 0.0
    %3641 = vmatprep.subr.mxu0 0.0
    %3642 = vmatpush1.msra.mxu0 0.0
    %3643 = vmatprep.mubr.f32.mxu0 0.0
    %3644 = vmatmul.mubr.f32.gmra.mrb[0].mxu0 %v3577
    %v3645 = vpop.f32.mrb[0].mxu0
    %v3646 = vadd.f32 %v113, %v3645
    %v3647 = vpop.f32.mrb[0].mxu0
    %v3648 = vadd.f32 %v117, %v3647
    %3649 = vdwg.mxu0
    %v3651 = vcombine.high %v3646, %v3646
    %v3653 = vunpack.c.l.s4 1966171168
    %v3654 = vunpack.c.0.s8 %v3653
    %v3655 = vlaneseq
    %v3656 = vshrl.u32 %v3655, 7
    %v3657 = vsub.s32 %v3654, %v3656
    %v3658 = vrot.slane %v3646, %v3657
    %v3660 = vunpack.c.l.s4 1966171168
    %v3661 = vunpack.c.0.s8 %v3660
    %v3662 = vlaneseq
    %v3663 = vshrl.u32 %v3662, 7
    %v3664 = vsub.s32 %v3661, %v3663
    %v3665 = vrot.slane %v3651, %v3664
    %v3666 = vcombine.high %v3658, %v3658
    %v3667 = vcombine.high %v3665, %v3665
    %v3669 = vunpack.c.l.s4 1966171168
    %v3670 = vunpack.c.0.s8 %v3669
    %v3671 = vlaneseq
    %v3672 = vshrl.u32 %v3671, 7
    %v3673 = vsub.s32 %v3670, %v3672
    %v3674 = vrot.slane %v3658, %v3673
    %v3676 = vunpack.c.l.s4 1966171168
    %v3677 = vunpack.c.0.s8 %v3676
    %v3678 = vlaneseq
    %v3679 = vshrl.u32 %v3678, 7
    %v3680 = vsub.s32 %v3677, %v3679
    %v3681 = vrot.slane %v3665, %v3680
    %v3683 = vunpack.c.l.s4 1966171168
    %v3684 = vunpack.c.0.s8 %v3683
    %v3685 = vlaneseq
    %v3686 = vshrl.u32 %v3685, 7
    %v3687 = vsub.s32 %v3684, %v3686
    %v3688 = vrot.slane %v3666, %v3687
    %v3690 = vunpack.c.l.s4 1966171168
    %v3691 = vunpack.c.0.s8 %v3690
    %v3692 = vlaneseq
    %v3693 = vshrl.u32 %v3692, 7
    %v3694 = vsub.s32 %v3691, %v3693
    %v3695 = vrot.slane %v3667, %v3694
    %v3696 = vcombine.high %v3674, %v3674
    %v3697 = vcombine.high %v3681, %v3681
    %v3698 = vcombine.high %v3688, %v3688
    %v3699 = vcombine.high %v3695, %v3695
    %v3708 = vadd.f32 %v3506, %v3674
    %v3709 = vadd.f32 %v3508, %v3688
    %v3710 = vadd.f32 %v3510, %v3696
    %v3711 = vadd.f32 %v3512, %v3698
    %v3712 = vadd.f32 %v3514, %v3681
    %v3713 = vadd.f32 %v3516, %v3695
    %v3714 = vadd.f32 %v3518, %v3697
    %v3715 = vadd.f32 %v3520, %v3699
    %v3716 = vxor.u32 %v3708, 2147483648
    %v3717 = vxor.u32 %v3709, 2147483648
    %v3718 = vxor.u32 %v3710, 2147483648
    %v3719 = vxor.u32 %v3711, 2147483648
    %v3720 = vxor.u32 %v3712, 2147483648
    %v3721 = vxor.u32 %v3713, 2147483648
    %v3722 = vxor.u32 %v3714, 2147483648
    %v3723 = vxor.u32 %v3715, 2147483648
    %v3724 = vmul.f32 %v3716, 1.442695
    %v3725 = vpow.pop %v3724
    %v3726 = vmul.f32 %v3717, 1.442695
    %v3727 = vpow.pop %v3726
    %v3728 = vmul.f32 %v3718, 1.442695
    %v3729 = vpow.pop %v3728
    %v3730 = vmul.f32 %v3719, 1.442695
    %v3731 = vpow.pop %v3730
    %v3732 = vmul.f32 %v3720, 1.442695
    %v3733 = vpow.pop %v3732
    %v3734 = vmul.f32 %v3721, 1.442695
    %v3735 = vpow.pop %v3734
    %v3736 = vmul.f32 %v3722, 1.442695
    %v3737 = vpow.pop %v3736
    %v3738 = vmul.f32 %v3723, 1.442695
    %v3739 = vpow.pop %v3738
    %v3740 = vadd.f32 %v3725, 1.0
    %v3741 = vadd.f32 %v3727, 1.0
    %v3742 = vadd.f32 %v3729, 1.0
    %v3743 = vadd.f32 %v3731, 1.0
    %v3744 = vadd.f32 %v3733, 1.0
    %v3745 = vadd.f32 %v3735, 1.0
    %v3746 = vadd.f32 %v3737, 1.0
    %v3747 = vadd.f32 %v3739, 1.0
    %v3748 = vrcp.pop %v3740
    %v3749 = vmul.f32 1.0, %v3748
    %v3750 = vrcp.pop %v3741
    %v3751 = vmul.f32 1.0, %v3750
    %v3752 = vrcp.pop %v3742
    %v3753 = vmul.f32 1.0, %v3752
    %v3754 = vrcp.pop %v3743
    %v3755 = vmul.f32 1.0, %v3754
    %v3756 = vrcp.pop %v3744
    %v3757 = vmul.f32 1.0, %v3756
    %v3758 = vrcp.pop %v3745
    %v3759 = vmul.f32 1.0, %v3758
    %v3760 = vrcp.pop %v3746
    %v3761 = vmul.f32 1.0, %v3760
    %v3762 = vrcp.pop %v3747
    %v3763 = vmul.f32 1.0, %v3762
    %v3772 = vrot.slane %v3506, 1
    %v3773 = vrot.slane %v3508, 1
    %v3774 = vrot.slane %v3510, 1
    %v3775 = vrot.slane %v3512, 1
    %v3776 = vrot.slane %v3514, 1
    %v3777 = vrot.slane %v3516, 1
    %v3778 = vrot.slane %v3518, 1
    %v3779 = vrot.slane %v3520, 1
    %v3789 = vcombine.high %v3648, %v3648
    %v3791 = vunpack.c.l.s4 1966171168
    %v3792 = vunpack.c.0.s8 %v3791
    %v3793 = vlaneseq
    %v3794 = vshrl.u32 %v3793, 7
    %v3795 = vsub.s32 %v3792, %v3794
    %v3796 = vrot.slane %v3648, %v3795
    %v3798 = vunpack.c.l.s4 1966171168
    %v3799 = vunpack.c.0.s8 %v3798
    %v3800 = vlaneseq
    %v3801 = vshrl.u32 %v3800, 7
    %v3802 = vsub.s32 %v3799, %v3801
    %v3803 = vrot.slane %v3789, %v3802
    %v3804 = vcombine.high %v3796, %v3796
    %v3805 = vcombine.high %v3803, %v3803
    %v3807 = vunpack.c.l.s4 1966171168
    %v3808 = vunpack.c.0.s8 %v3807
    %v3809 = vlaneseq
    %v3810 = vshrl.u32 %v3809, 7
    %v3811 = vsub.s32 %v3808, %v3810
    %v3812 = vrot.slane %v3796, %v3811
    %v3814 = vunpack.c.l.s4 1966171168
    %v3815 = vunpack.c.0.s8 %v3814
    %v3816 = vlaneseq
    %v3817 = vshrl.u32 %v3816, 7
    %v3818 = vsub.s32 %v3815, %v3817
    %v3819 = vrot.slane %v3803, %v3818
    %v3821 = vunpack.c.l.s4 1966171168
    %v3822 = vunpack.c.0.s8 %v3821
    %v3823 = vlaneseq
    %v3824 = vshrl.u32 %v3823, 7
    %v3825 = vsub.s32 %v3822, %v3824
    %v3826 = vrot.slane %v3804, %v3825
    %v3828 = vunpack.c.l.s4 1966171168
    %v3829 = vunpack.c.0.s8 %v3828
    %v3830 = vlaneseq
    %v3831 = vshrl.u32 %v3830, 7
    %v3832 = vsub.s32 %v3829, %v3831
    %v3833 = vrot.slane %v3805, %v3832
    %v3834 = vcombine.high %v3812, %v3812
    %v3835 = vcombine.high %v3819, %v3819
    %v3836 = vcombine.high %v3826, %v3826
    %v3837 = vcombine.high %v3833, %v3833
    %v3846 = vadd.f32 %v3772, %v3812
    %v3847 = vadd.f32 %v3773, %v3826
    %v3848 = vadd.f32 %v3774, %v3834
    %v3849 = vadd.f32 %v3775, %v3836
    %v3850 = vadd.f32 %v3776, %v3819
    %v3851 = vadd.f32 %v3777, %v3833
    %v3852 = vadd.f32 %v3778, %v3835
    %v3853 = vadd.f32 %v3779, %v3837
    %v3854 = vxor.u32 %v3846, 2147483648
    %v3855 = vxor.u32 %v3847, 2147483648
    %v3856 = vxor.u32 %v3848, 2147483648
    %v3857 = vxor.u32 %v3849, 2147483648
    %v3858 = vxor.u32 %v3850, 2147483648
    %v3859 = vxor.u32 %v3851, 2147483648
    %v3860 = vxor.u32 %v3852, 2147483648
    %v3861 = vxor.u32 %v3853, 2147483648
    %v3862 = vmul.f32 %v3854, 1.442695
    %v3863 = vpow.pop %v3862
    %v3864 = vmul.f32 %v3855, 1.442695
    %v3865 = vpow.pop %v3864
    %v3866 = vmul.f32 %v3856, 1.442695
    %v3867 = vpow.pop %v3866
    %v3868 = vmul.f32 %v3857, 1.442695
    %v3869 = vpow.pop %v3868
    %v3870 = vmul.f32 %v3858, 1.442695
    %v3871 = vpow.pop %v3870
    %v3872 = vmul.f32 %v3859, 1.442695
    %v3873 = vpow.pop %v3872
    %v3874 = vmul.f32 %v3860, 1.442695
    %v3875 = vpow.pop %v3874
    %v3876 = vmul.f32 %v3861, 1.442695
    %v3877 = vpow.pop %v3876
    %v3878 = vadd.f32 %v3863, 1.0
    %v3879 = vadd.f32 %v3865, 1.0
    %v3880 = vadd.f32 %v3867, 1.0
    %v3881 = vadd.f32 %v3869, 1.0
    %v3882 = vadd.f32 %v3871, 1.0
    %v3883 = vadd.f32 %v3873, 1.0
    %v3884 = vadd.f32 %v3875, 1.0
    %v3885 = vadd.f32 %v3877, 1.0
    %v3886 = vrcp.pop %v3878
    %v3887 = vmul.f32 1.0, %v3886
    %v3888 = vrcp.pop %v3879
    %v3889 = vmul.f32 1.0, %v3888
    %v3890 = vrcp.pop %v3880
    %v3891 = vmul.f32 1.0, %v3890
    %v3892 = vrcp.pop %v3881
    %v3893 = vmul.f32 1.0, %v3892
    %v3894 = vrcp.pop %v3882
    %v3895 = vmul.f32 1.0, %v3894
    %v3896 = vrcp.pop %v3883
    %v3897 = vmul.f32 1.0, %v3896
    %v3898 = vrcp.pop %v3884
    %v3899 = vmul.f32 1.0, %v3898
    %v3900 = vrcp.pop %v3885
    %v3901 = vmul.f32 1.0, %v3900
    %v3902 = vmul.f32 %v3887, %v3489
    %v3903 = vmul.f32 %v3889, %v3490
    %v3904 = vmul.f32 %v3891, %v3491
    %v3905 = vmul.f32 %v3893, %v3492
    %v3906 = vmul.f32 %v3895, %v3493
    %v3907 = vmul.f32 %v3897, %v3494
    %v3908 = vmul.f32 %v3899, %v3495
    %v3909 = vmul.f32 %v3901, %v3496
    %v3918 = vcombine.low %v3902, %v3903
    %v3919 = vcombine.low %v3904, %v3905
    %v3920 = vcombine.low %v3906, %v3907
    %v3921 = vcombine.low %v3908, %v3909
    %v3923 = vunpack.c.l.s4 1966171168
    %v3924 = vunpack.c.0.s8 %v3923
    %v3925 = vlaneseq
    %v3926 = vshrl.u32 %v3925, 7
    %v3927 = vsub.s32 %v3924, %v3926
    %v3928 = vrot.slane %v3918, %v3927
    %v3930 = vunpack.c.l.s4 1966171168
    %v3931 = vunpack.c.0.s8 %v3930
    %v3932 = vlaneseq
    %v3933 = vshrl.u32 %v3932, 7
    %v3934 = vsub.s32 %v3931, %v3933
    %v3935 = vrot.slane %v3919, %v3934
    %v3937 = vunpack.c.l.s4 1966171168
    %v3938 = vunpack.c.0.s8 %v3937
    %v3939 = vlaneseq
    %v3940 = vshrl.u32 %v3939, 7
    %v3941 = vsub.s32 %v3938, %v3940
    %v3942 = vrot.slane %v3920, %v3941
    %v3944 = vunpack.c.l.s4 1966171168
    %v3945 = vunpack.c.0.s8 %v3944
    %v3946 = vlaneseq
    %v3947 = vshrl.u32 %v3946, 7
    %v3948 = vsub.s32 %v3945, %v3947
    %v3949 = vrot.slane %v3921, %v3948
    %v3950 = vcombine.low %v3928, %v3935
    %v3951 = vcombine.low %v3942, %v3949
    %v3953 = vunpack.c.l.s4 1966171168
    %v3954 = vunpack.c.0.s8 %v3953
    %v3955 = vlaneseq
    %v3956 = vshrl.u32 %v3955, 7
    %v3957 = vsub.s32 %v3954, %v3956
    %v3958 = vrot.slane %v3950, %v3957
    %v3960 = vunpack.c.l.s4 1966171168
    %v3961 = vunpack.c.0.s8 %v3960
    %v3962 = vlaneseq
    %v3963 = vshrl.u32 %v3962, 7
    %v3964 = vsub.s32 %v3961, %v3963
    %v3965 = vrot.slane %v3951, %v3964
    %v3966 = vcombine.low %v3958, %v3965
    %3968 = vmatprep.subr.mxu0 0.0
    %3969 = vmatpush1.msra.mxu0 %v75
    %3970 = vmatprep.subr.mxu0 0.0
    %3971 = vmatpush1.msra.mxu0 %v76
    %3972 = vmatprep.subr.mxu0 0.0
    %3973 = vmatpush1.msra.mxu0 %v77
    %3974 = vmatprep.subr.mxu0 0.0
    %3975 = vmatpush1.msra.mxu0 %v78
    %3976 = vmatprep.subr.mxu0 0.0
    %3977 = vmatpush1.msra.mxu0 %v79
    %3978 = vmatprep.subr.mxu0 0.0
    %3979 = vmatpush1.msra.mxu0 %v80
    %3980 = vmatprep.subr.mxu0 0.0
    %3981 = vmatpush1.msra.mxu0 %v81
    %3982 = vmatprep.subr.mxu0 0.0
    %3983 = vmatpush1.msra.mxu0 %v82
    %3984 = vmatprep.subr.mxu0 0.0
    %3985 = vmatpush1.msra.mxu0 %v83
    %3986 = vmatprep.subr.mxu0 0.0
    %3987 = vmatpush1.msra.mxu0 %v84
    %3988 = vmatprep.subr.mxu0 0.0
    %3989 = vmatpush1.msra.mxu0 %v85
    %3990 = vmatprep.subr.mxu0 0.0
    %3991 = vmatpush1.msra.mxu0 %v86
    %3992 = vmatprep.subr.mxu0 0.0
    %3993 = vmatpush1.msra.mxu0 %v87
    %3994 = vmatprep.subr.mxu0 0.0
    %3995 = vmatpush1.msra.mxu0 %v88
    %3996 = vmatprep.subr.mxu0 0.0
    %3997 = vmatpush1.msra.mxu0 %v89
    %3998 = vmatprep.subr.mxu0 0.0
    %3999 = vmatpush1.msra.mxu0 %v90
    %4000 = vmatprep.subr.mxu0 0.0
    %4001 = vmatpush1.msra.mxu0 0.0
    %4002 = vmatprep.subr.mxu0 0.0
    %4003 = vmatpush1.msra.mxu0 0.0
    %4004 = vmatprep.subr.mxu0 0.0
    %4005 = vmatpush1.msra.mxu0 0.0
    %4006 = vmatprep.subr.mxu0 0.0
    %4007 = vmatpush1.msra.mxu0 0.0
    %4008 = vmatprep.subr.mxu0 0.0
    %4009 = vmatpush1.msra.mxu0 0.0
    %4010 = vmatprep.subr.mxu0 0.0
    %4011 = vmatpush1.msra.mxu0 0.0
    %4012 = vmatprep.subr.mxu0 0.0
    %4013 = vmatpush1.msra.mxu0 0.0
    %4014 = vmatprep.subr.mxu0 0.0
    %4015 = vmatpush1.msra.mxu0 0.0
    %4016 = vmatprep.subr.mxu0 0.0
    %4017 = vmatpush1.msra.mxu0 0.0
    %4018 = vmatprep.subr.mxu0 0.0
    %4019 = vmatpush1.msra.mxu0 0.0
    %4020 = vmatprep.subr.mxu0 0.0
    %4021 = vmatpush1.msra.mxu0 0.0
    %4022 = vmatprep.subr.mxu0 0.0
    %4023 = vmatpush1.msra.mxu0 0.0
    %4024 = vmatprep.subr.mxu0 0.0
    %4025 = vmatpush1.msra.mxu0 0.0
    %4026 = vmatprep.subr.mxu0 0.0
    %4027 = vmatpush1.msra.mxu0 0.0
    %4028 = vmatprep.subr.mxu0 0.0
    %4029 = vmatpush1.msra.mxu0 0.0
    %4030 = vmatprep.subr.mxu0 0.0
    %4031 = vmatpush1.msra.mxu0 0.0
    %4032 = vmatprep.mubr.f32.mxu0 0.0
    %4033 = vmatmul.mubr.f32.gmra.mrb[0].mxu0 %v3966
    %v4034 = vpop.f32.mrb[0].mxu0
    %v4035 = vadd.f32 %v513, %v4034
    %v4036 = vpop.f32.mrb[0].mxu0
    %4037 = vdwg.mxu0
    %v4038 = vrot.slane %v3506, 2
    %v4039 = vrot.slane %v3508, 2
    %v4040 = vrot.slane %v3510, 2
    %v4041 = vrot.slane %v3512, 2
    %v4042 = vrot.slane %v3514, 2
    %v4043 = vrot.slane %v3516, 2
    %v4044 = vrot.slane %v3518, 2
    %v4045 = vrot.slane %v3520, 2
    %v4055 = vcombine.high %v4035, %v4035
    %v4057 = vunpack.c.l.s4 1966171168
    %v4058 = vunpack.c.0.s8 %v4057
    %v4059 = vlaneseq
    %v4060 = vshrl.u32 %v4059, 7
    %v4061 = vsub.s32 %v4058, %v4060
    %v4062 = vrot.slane %v4035, %v4061
    %v4064 = vunpack.c.l.s4 1966171168
    %v4065 = vunpack.c.0.s8 %v4064
    %v4066 = vlaneseq
    %v4067 = vshrl.u32 %v4066, 7
    %v4068 = vsub.s32 %v4065, %v4067
    %v4069 = vrot.slane %v4055, %v4068
    %v4070 = vcombine.high %v4062, %v4062
    %v4071 = vcombine.high %v4069, %v4069
    %v4073 = vunpack.c.l.s4 1966171168
    %v4074 = vunpack.c.0.s8 %v4073
    %v4075 = vlaneseq
    %v4076 = vshrl.u32 %v4075, 7
    %v4077 = vsub.s32 %v4074, %v4076
    %v4078 = vrot.slane %v4062, %v4077
    %v4080 = vunpack.c.l.s4 1966171168
    %v4081 = vunpack.c.0.s8 %v4080
    %v4082 = vlaneseq
    %v4083 = vshrl.u32 %v4082, 7
    %v4084 = vsub.s32 %v4081, %v4083
    %v4085 = vrot.slane %v4069, %v4084
    %v4087 = vunpack.c.l.s4 1966171168
    %v4088 = vunpack.c.0.s8 %v4087
    %v4089 = vlaneseq
    %v4090 = vshrl.u32 %v4089, 7
    %v4091 = vsub.s32 %v4088, %v4090
    %v4092 = vrot.slane %v4070, %v4091
    %v4094 = vunpack.c.l.s4 1966171168
    %v4095 = vunpack.c.0.s8 %v4094
    %v4096 = vlaneseq
    %v4097 = vshrl.u32 %v4096, 7
    %v4098 = vsub.s32 %v4095, %v4097
    %v4099 = vrot.slane %v4071, %v4098
    %v4100 = vcombine.high %v4078, %v4078
    %v4101 = vcombine.high %v4085, %v4085
    %v4102 = vcombine.high %v4092, %v4092
    %v4103 = vcombine.high %v4099, %v4099
    %v4112 = vadd.f32 %v4038, %v4078
    %v4113 = vadd.f32 %v4039, %v4092
    %v4114 = vadd.f32 %v4040, %v4100
    %v4115 = vadd.f32 %v4041, %v4102
    %v4116 = vadd.f32 %v4042, %v4085
    %v4117 = vadd.f32 %v4043, %v4099
    %v4118 = vadd.f32 %v4044, %v4101
    %v4119 = vadd.f32 %v4045, %v4103
    %v4120 = vtanh.pop %v4112
    %v4121 = vtanh.pop %v4113
    %v4122 = vtanh.pop %v4114
    %v4123 = vtanh.pop %v4115
    %v4124 = vtanh.pop %v4116
    %v4125 = vtanh.pop %v4117
    %v4126 = vtanh.pop %v4118
    %v4127 = vtanh.pop %v4119
    %v4128 = vmul.f32 %v3749, %v3489
    %v4129 = vmul.f32 %v3751, %v3490
    %v4130 = vmul.f32 %v3753, %v3491
    %v4131 = vmul.f32 %v3755, %v3492
    %v4132 = vmul.f32 %v3757, %v3493
    %v4133 = vmul.f32 %v3759, %v3494
    %v4134 = vmul.f32 %v3761, %v3495
    %v4135 = vmul.f32 %v3763, %v3496
    %v4136 = vsub.f32 1.0, %v3749
    %v4137 = vsub.f32 1.0, %v3751
    %v4138 = vsub.f32 1.0, %v3753
    %v4139 = vsub.f32 1.0, %v3755
    %v4140 = vsub.f32 1.0, %v3757
    %v4141 = vsub.f32 1.0, %v3759
    %v4142 = vsub.f32 1.0, %v3761
    %v4143 = vsub.f32 1.0, %v3763
    %v4144 = vmul.f32 %v4136, %v4120
    %v4145 = vmul.f32 %v4137, %v4121
    %v4146 = vmul.f32 %v4138, %v4122
    %v4147 = vmul.f32 %v4139, %v4123
    %v4148 = vmul.f32 %v4140, %v4124
    %v4149 = vmul.f32 %v4141, %v4125
    %v4150 = vmul.f32 %v4142, %v4126
    %v4151 = vmul.f32 %v4143, %v4127
    %v4152 = vadd.f32 %v4128, %v4144
    %v4153 = vadd.f32 %v4129, %v4145
    %v4154 = vadd.f32 %v4130, %v4146
    %v4155 = vadd.f32 %v4131, %v4147
    %v4156 = vadd.f32 %v4132, %v4148
    %v4157 = vadd.f32 %v4133, %v4149
    %v4158 = vadd.f32 %v4134, %v4150
    %v4159 = vadd.f32 %v4135, %v4151
    %v4160 = vmax.f32 %v4152, -5.0
    %v4161 = vmax.f32 %v4153, -5.0
    %v4162 = vmax.f32 %v4154, -5.0
    %v4163 = vmax.f32 %v4155, -5.0
    %v4164 = vmax.f32 %v4156, -5.0
    %v4165 = vmax.f32 %v4157, -5.0
    %v4166 = vmax.f32 %v4158, -5.0
    %v4167 = vmax.f32 %v4159, -5.0
    %v4168 = vmin.f32 %v4160, 5.0
    %v4169 = vmin.f32 %v4161, 5.0
    %v4170 = vmin.f32 %v4162, 5.0
    %v4171 = vmin.f32 %v4163, 5.0
    %v4172 = vmin.f32 %v4164, 5.0
    %v4173 = vmin.f32 %v4165, 5.0
    %v4174 = vmin.f32 %v4166, 5.0
    %v4175 = vmin.f32 %v4167, 5.0
    %4176 = vst [vmem:[%s6 + $0x5] sm:$0x1] %v4168
    %4177 = vst [vmem:[%s6 + $0xd] sm:$0x1] %v4169
    %4178 = vst [vmem:[%s6 + $0x15] sm:$0x1] %v4170
    %4179 = vst [vmem:[%s6 + $0x1d] sm:$0x1] %v4171
    %4180 = vst [vmem:[%s6 + $0x25] sm:$0x1] %v4172
    %4181 = vst [vmem:[%s6 + $0x2d] sm:$0x1] %v4173
    %4182 = vst [vmem:[%s6 + $0x35] sm:$0x1] %v4174
    %4183 = vst [vmem:[%s6 + $0x3d] sm:$0x1] %v4175
    %s4184 = scalar_lea.vmem %s0, 6
    %v4185 = vld [vmem:[%s4184] ss:$8 sm:$0x7]
    %s4186 = scalar_lea.vmem %s0, 30
    %v4187 = vld [vmem:[%s4186] ss:$8 sm:$0x7]
    %s4188 = scalar_lea.vmem %s0, 54
    %v4189 = vld [vmem:[%s4188] ss:$8 sm:$0x7]
    %s4190 = scalar_lea.vmem %s0, 78
    %v4191 = vld [vmem:[%s4190] ss:$8 sm:$0x7]
    %s4192 = scalar_lea.vmem %s0, 102
    %v4193 = vld [vmem:[%s4192] ss:$8 sm:$0x7]
    %s4194 = scalar_lea.vmem %s0, 126
    %v4195 = vld [vmem:[%s4194] ss:$8 sm:$0x7]
    %s4196 = scalar_lea.vmem %s0, 150
    %v4197 = vld [vmem:[%s4196] ss:$8 sm:$0x7]
    %s4198 = scalar_lea.vmem %s0, 174
    %v4199 = vld [vmem:[%s4198] ss:$8 sm:$0x7]
    %v4208 = vcombine.low %v4168, %v4169
    %v4209 = vcombine.low %v4170, %v4171
    %v4210 = vcombine.low %v4172, %v4173
    %v4211 = vcombine.low %v4174, %v4175
    %v4213 = vunpack.c.l.s4 1966171168
    %v4214 = vunpack.c.0.s8 %v4213
    %v4215 = vlaneseq
    %v4216 = vshrl.u32 %v4215, 7
    %v4217 = vsub.s32 %v4214, %v4216
    %v4218 = vrot.slane %v4208, %v4217
    %v4220 = vunpack.c.l.s4 1966171168
    %v4221 = vunpack.c.0.s8 %v4220
    %v4222 = vlaneseq
    %v4223 = vshrl.u32 %v4222, 7
    %v4224 = vsub.s32 %v4221, %v4223
    %v4225 = vrot.slane %v4209, %v4224
    %v4227 = vunpack.c.l.s4 1966171168
    %v4228 = vunpack.c.0.s8 %v4227
    %v4229 = vlaneseq
    %v4230 = vshrl.u32 %v4229, 7
    %v4231 = vsub.s32 %v4228, %v4230
    %v4232 = vrot.slane %v4210, %v4231
    %v4234 = vunpack.c.l.s4 1966171168
    %v4235 = vunpack.c.0.s8 %v4234
    %v4236 = vlaneseq
    %v4237 = vshrl.u32 %v4236, 7
    %v4238 = vsub.s32 %v4235, %v4237
    %v4239 = vrot.slane %v4211, %v4238
    %v4240 = vcombine.low %v4218, %v4225
    %v4241 = vcombine.low %v4232, %v4239
    %v4243 = vunpack.c.l.s4 1966171168
    %v4244 = vunpack.c.0.s8 %v4243
    %v4245 = vlaneseq
    %v4246 = vshrl.u32 %v4245, 7
    %v4247 = vsub.s32 %v4244, %v4246
    %v4248 = vrot.slane %v4240, %v4247
    %v4250 = vunpack.c.l.s4 1966171168
    %v4251 = vunpack.c.0.s8 %v4250
    %v4252 = vlaneseq
    %v4253 = vshrl.u32 %v4252, 7
    %v4254 = vsub.s32 %v4251, %v4253
    %v4255 = vrot.slane %v4241, %v4254
    %v4256 = vcombine.low %v4248, %v4255
    %4258 = vmatprep.subr.mxu0 %v44
    %4259 = vmatpush1.msra.mxu0 %v43
    %4260 = vmatprep.subr.mxu0 %v46
    %4261 = vmatpush1.msra.mxu0 %v45
    %4262 = vmatprep.subr.mxu0 %v48
    %4263 = vmatpush1.msra.mxu0 %v47
    %4264 = vmatprep.subr.mxu0 %v50
    %4265 = vmatpush1.msra.mxu0 %v49
    %4266 = vmatprep.subr.mxu0 %v52
    %4267 = vmatpush1.msra.mxu0 %v51
    %4268 = vmatprep.subr.mxu0 %v54
    %4269 = vmatpush1.msra.mxu0 %v53
    %4270 = vmatprep.subr.mxu0 %v56
    %4271 = vmatpush1.msra.mxu0 %v55
    %4272 = vmatprep.subr.mxu0 %v58
    %4273 = vmatpush1.msra.mxu0 %v57
    %4274 = vmatprep.subr.mxu0 %v60
    %4275 = vmatpush1.msra.mxu0 %v59
    %4276 = vmatprep.subr.mxu0 %v62
    %4277 = vmatpush1.msra.mxu0 %v61
    %4278 = vmatprep.subr.mxu0 %v64
    %4279 = vmatpush1.msra.mxu0 %v63
    %4280 = vmatprep.subr.mxu0 %v66
    %4281 = vmatpush1.msra.mxu0 %v65
    %4282 = vmatprep.subr.mxu0 %v68
    %4283 = vmatpush1.msra.mxu0 %v67
    %4284 = vmatprep.subr.mxu0 %v70
    %4285 = vmatpush1.msra.mxu0 %v69
    %4286 = vmatprep.subr.mxu0 %v72
    %4287 = vmatpush1.msra.mxu0 %v71
    %4288 = vmatprep.subr.mxu0 %v74
    %4289 = vmatpush1.msra.mxu0 %v73
    %4290 = vmatprep.subr.mxu0 0.0
    %4291 = vmatpush1.msra.mxu0 0.0
    %4292 = vmatprep.subr.mxu0 0.0
    %4293 = vmatpush1.msra.mxu0 0.0
    %4294 = vmatprep.subr.mxu0 0.0
    %4295 = vmatpush1.msra.mxu0 0.0
    %4296 = vmatprep.subr.mxu0 0.0
    %4297 = vmatpush1.msra.mxu0 0.0
    %4298 = vmatprep.subr.mxu0 0.0
    %4299 = vmatpush1.msra.mxu0 0.0
    %4300 = vmatprep.subr.mxu0 0.0
    %4301 = vmatpush1.msra.mxu0 0.0
    %4302 = vmatprep.subr.mxu0 0.0
    %4303 = vmatpush1.msra.mxu0 0.0
    %4304 = vmatprep.subr.mxu0 0.0
    %4305 = vmatpush1.msra.mxu0 0.0
    %4306 = vmatprep.subr.mxu0 0.0
    %4307 = vmatpush1.msra.mxu0 0.0
    %4308 = vmatprep.subr.mxu0 0.0
    %4309 = vmatpush1.msra.mxu0 0.0
    %4310 = vmatprep.subr.mxu0 0.0
    %4311 = vmatpush1.msra.mxu0 0.0
    %4312 = vmatprep.subr.mxu0 0.0
    %4313 = vmatpush1.msra.mxu0 0.0
    %4314 = vmatprep.subr.mxu0 0.0
    %4315 = vmatpush1.msra.mxu0 0.0
    %4316 = vmatprep.subr.mxu0 0.0
    %4317 = vmatpush1.msra.mxu0 0.0
    %4318 = vmatprep.subr.mxu0 0.0
    %4319 = vmatpush1.msra.mxu0 0.0
    %4320 = vmatprep.subr.mxu0 0.0
    %4321 = vmatpush1.msra.mxu0 0.0
    %4322 = vmatprep.mubr.f32.mxu0 0.0
    %4323 = vmatmul.mubr.f32.gmra.mrb[0].mxu0 %v4256
    %v4324 = vpop.f32.mrb[0].mxu0
    %v4325 = vadd.f32 %v113, %v4324
    %v4326 = vpop.f32.mrb[0].mxu0
    %v4327 = vadd.f32 %v117, %v4326
    %4328 = vdwg.mxu0
    %v4330 = vcombine.high %v4325, %v4325
    %v4332 = vunpack.c.l.s4 1966171168
    %v4333 = vunpack.c.0.s8 %v4332
    %v4334 = vlaneseq
    %v4335 = vshrl.u32 %v4334, 7
    %v4336 = vsub.s32 %v4333, %v4335
    %v4337 = vrot.slane %v4325, %v4336
    %v4339 = vunpack.c.l.s4 1966171168
    %v4340 = vunpack.c.0.s8 %v4339
    %v4341 = vlaneseq
    %v4342 = vshrl.u32 %v4341, 7
    %v4343 = vsub.s32 %v4340, %v4342
    %v4344 = vrot.slane %v4330, %v4343
    %v4345 = vcombine.high %v4337, %v4337
    %v4346 = vcombine.high %v4344, %v4344
    %v4348 = vunpack.c.l.s4 1966171168
    %v4349 = vunpack.c.0.s8 %v4348
    %v4350 = vlaneseq
    %v4351 = vshrl.u32 %v4350, 7
    %v4352 = vsub.s32 %v4349, %v4351
    %v4353 = vrot.slane %v4337, %v4352
    %v4355 = vunpack.c.l.s4 1966171168
    %v4356 = vunpack.c.0.s8 %v4355
    %v4357 = vlaneseq
    %v4358 = vshrl.u32 %v4357, 7
    %v4359 = vsub.s32 %v4356, %v4358
    %v4360 = vrot.slane %v4344, %v4359
    %v4362 = vunpack.c.l.s4 1966171168
    %v4363 = vunpack.c.0.s8 %v4362
    %v4364 = vlaneseq
    %v4365 = vshrl.u32 %v4364, 7
    %v4366 = vsub.s32 %v4363, %v4365
    %v4367 = vrot.slane %v4345, %v4366
    %v4369 = vunpack.c.l.s4 1966171168
    %v4370 = vunpack.c.0.s8 %v4369
    %v4371 = vlaneseq
    %v4372 = vshrl.u32 %v4371, 7
    %v4373 = vsub.s32 %v4370, %v4372
    %v4374 = vrot.slane %v4346, %v4373
    %v4375 = vcombine.high %v4353, %v4353
    %v4376 = vcombine.high %v4360, %v4360
    %v4377 = vcombine.high %v4367, %v4367
    %v4378 = vcombine.high %v4374, %v4374
    %v4387 = vadd.f32 %v4185, %v4353
    %v4388 = vadd.f32 %v4187, %v4367
    %v4389 = vadd.f32 %v4189, %v4375
    %v4390 = vadd.f32 %v4191, %v4377
    %v4391 = vadd.f32 %v4193, %v4360
    %v4392 = vadd.f32 %v4195, %v4374
    %v4393 = vadd.f32 %v4197, %v4376
    %v4394 = vadd.f32 %v4199, %v4378
    %v4395 = vxor.u32 %v4387, 2147483648
    %v4396 = vxor.u32 %v4388, 2147483648
    %v4397 = vxor.u32 %v4389, 2147483648
    %v4398 = vxor.u32 %v4390, 2147483648
    %v4399 = vxor.u32 %v4391, 2147483648
    %v4400 = vxor.u32 %v4392, 2147483648
    %v4401 = vxor.u32 %v4393, 2147483648
    %v4402 = vxor.u32 %v4394, 2147483648
    %v4403 = vmul.f32 %v4395, 1.442695
    %v4404 = vpow.pop %v4403
    %v4405 = vmul.f32 %v4396, 1.442695
    %v4406 = vpow.pop %v4405
    %v4407 = vmul.f32 %v4397, 1.442695
    %v4408 = vpow.pop %v4407
    %v4409 = vmul.f32 %v4398, 1.442695
    %v4410 = vpow.pop %v4409
    %v4411 = vmul.f32 %v4399, 1.442695
    %v4412 = vpow.pop %v4411
    %v4413 = vmul.f32 %v4400, 1.442695
    %v4414 = vpow.pop %v4413
    %v4415 = vmul.f32 %v4401, 1.442695
    %v4416 = vpow.pop %v4415
    %v4417 = vmul.f32 %v4402, 1.442695
    %v4418 = vpow.pop %v4417
    %v4419 = vadd.f32 %v4404, 1.0
    %v4420 = vadd.f32 %v4406, 1.0
    %v4421 = vadd.f32 %v4408, 1.0
    %v4422 = vadd.f32 %v4410, 1.0
    %v4423 = vadd.f32 %v4412, 1.0
    %v4424 = vadd.f32 %v4414, 1.0
    %v4425 = vadd.f32 %v4416, 1.0
    %v4426 = vadd.f32 %v4418, 1.0
    %v4427 = vrcp.pop %v4419
    %v4428 = vmul.f32 1.0, %v4427
    %v4429 = vrcp.pop %v4420
    %v4430 = vmul.f32 1.0, %v4429
    %v4431 = vrcp.pop %v4421
    %v4432 = vmul.f32 1.0, %v4431
    %v4433 = vrcp.pop %v4422
    %v4434 = vmul.f32 1.0, %v4433
    %v4435 = vrcp.pop %v4423
    %v4436 = vmul.f32 1.0, %v4435
    %v4437 = vrcp.pop %v4424
    %v4438 = vmul.f32 1.0, %v4437
    %v4439 = vrcp.pop %v4425
    %v4440 = vmul.f32 1.0, %v4439
    %v4441 = vrcp.pop %v4426
    %v4442 = vmul.f32 1.0, %v4441
    %v4451 = vrot.slane %v4185, 1
    %v4452 = vrot.slane %v4187, 1
    %v4453 = vrot.slane %v4189, 1
    %v4454 = vrot.slane %v4191, 1
    %v4455 = vrot.slane %v4193, 1
    %v4456 = vrot.slane %v4195, 1
    %v4457 = vrot.slane %v4197, 1
    %v4458 = vrot.slane %v4199, 1
    %v4468 = vcombine.high %v4327, %v4327
    %v4470 = vunpack.c.l.s4 1966171168
    %v4471 = vunpack.c.0.s8 %v4470
    %v4472 = vlaneseq
    %v4473 = vshrl.u32 %v4472, 7
    %v4474 = vsub.s32 %v4471, %v4473
    %v4475 = vrot.slane %v4327, %v4474
    %v4477 = vunpack.c.l.s4 1966171168
    %v4478 = vunpack.c.0.s8 %v4477
    %v4479 = vlaneseq
    %v4480 = vshrl.u32 %v4479, 7
    %v4481 = vsub.s32 %v4478, %v4480
    %v4482 = vrot.slane %v4468, %v4481
    %v4483 = vcombine.high %v4475, %v4475
    %v4484 = vcombine.high %v4482, %v4482
    %v4486 = vunpack.c.l.s4 1966171168
    %v4487 = vunpack.c.0.s8 %v4486
    %v4488 = vlaneseq
    %v4489 = vshrl.u32 %v4488, 7
    %v4490 = vsub.s32 %v4487, %v4489
    %v4491 = vrot.slane %v4475, %v4490
    %v4493 = vunpack.c.l.s4 1966171168
    %v4494 = vunpack.c.0.s8 %v4493
    %v4495 = vlaneseq
    %v4496 = vshrl.u32 %v4495, 7
    %v4497 = vsub.s32 %v4494, %v4496
    %v4498 = vrot.slane %v4482, %v4497
    %v4500 = vunpack.c.l.s4 1966171168
    %v4501 = vunpack.c.0.s8 %v4500
    %v4502 = vlaneseq
    %v4503 = vshrl.u32 %v4502, 7
    %v4504 = vsub.s32 %v4501, %v4503
    %v4505 = vrot.slane %v4483, %v4504
    %v4507 = vunpack.c.l.s4 1966171168
    %v4508 = vunpack.c.0.s8 %v4507
    %v4509 = vlaneseq
    %v4510 = vshrl.u32 %v4509, 7
    %v4511 = vsub.s32 %v4508, %v4510
    %v4512 = vrot.slane %v4484, %v4511
    %v4513 = vcombine.high %v4491, %v4491
    %v4514 = vcombine.high %v4498, %v4498
    %v4515 = vcombine.high %v4505, %v4505
    %v4516 = vcombine.high %v4512, %v4512
    %v4525 = vadd.f32 %v4451, %v4491
    %v4526 = vadd.f32 %v4452, %v4505
    %v4527 = vadd.f32 %v4453, %v4513
    %v4528 = vadd.f32 %v4454, %v4515
    %v4529 = vadd.f32 %v4455, %v4498
    %v4530 = vadd.f32 %v4456, %v4512
    %v4531 = vadd.f32 %v4457, %v4514
    %v4532 = vadd.f32 %v4458, %v4516
    %v4533 = vxor.u32 %v4525, 2147483648
    %v4534 = vxor.u32 %v4526, 2147483648
    %v4535 = vxor.u32 %v4527, 2147483648
    %v4536 = vxor.u32 %v4528, 2147483648
    %v4537 = vxor.u32 %v4529, 2147483648
    %v4538 = vxor.u32 %v4530, 2147483648
    %v4539 = vxor.u32 %v4531, 2147483648
    %v4540 = vxor.u32 %v4532, 2147483648
    %v4541 = vmul.f32 %v4533, 1.442695
    %v4542 = vpow.pop %v4541
    %v4543 = vmul.f32 %v4534, 1.442695
    %v4544 = vpow.pop %v4543
    %v4545 = vmul.f32 %v4535, 1.442695
    %v4546 = vpow.pop %v4545
    %v4547 = vmul.f32 %v4536, 1.442695
    %v4548 = vpow.pop %v4547
    %v4549 = vmul.f32 %v4537, 1.442695
    %v4550 = vpow.pop %v4549
    %v4551 = vmul.f32 %v4538, 1.442695
    %v4552 = vpow.pop %v4551
    %v4553 = vmul.f32 %v4539, 1.442695
    %v4554 = vpow.pop %v4553
    %v4555 = vmul.f32 %v4540, 1.442695
    %v4556 = vpow.pop %v4555
    %v4557 = vadd.f32 %v4542, 1.0
    %v4558 = vadd.f32 %v4544, 1.0
    %v4559 = vadd.f32 %v4546, 1.0
    %v4560 = vadd.f32 %v4548, 1.0
    %v4561 = vadd.f32 %v4550, 1.0
    %v4562 = vadd.f32 %v4552, 1.0
    %v4563 = vadd.f32 %v4554, 1.0
    %v4564 = vadd.f32 %v4556, 1.0
    %v4565 = vrcp.pop %v4557
    %v4566 = vmul.f32 1.0, %v4565
    %v4567 = vrcp.pop %v4558
    %v4568 = vmul.f32 1.0, %v4567
    %v4569 = vrcp.pop %v4559
    %v4570 = vmul.f32 1.0, %v4569
    %v4571 = vrcp.pop %v4560
    %v4572 = vmul.f32 1.0, %v4571
    %v4573 = vrcp.pop %v4561
    %v4574 = vmul.f32 1.0, %v4573
    %v4575 = vrcp.pop %v4562
    %v4576 = vmul.f32 1.0, %v4575
    %v4577 = vrcp.pop %v4563
    %v4578 = vmul.f32 1.0, %v4577
    %v4579 = vrcp.pop %v4564
    %v4580 = vmul.f32 1.0, %v4579
    %v4581 = vmul.f32 %v4566, %v4168
    %v4582 = vmul.f32 %v4568, %v4169
    %v4583 = vmul.f32 %v4570, %v4170
    %v4584 = vmul.f32 %v4572, %v4171
    %v4585 = vmul.f32 %v4574, %v4172
    %v4586 = vmul.f32 %v4576, %v4173
    %v4587 = vmul.f32 %v4578, %v4174
    %v4588 = vmul.f32 %v4580, %v4175
    %v4597 = vcombine.low %v4581, %v4582
    %v4598 = vcombine.low %v4583, %v4584
    %v4599 = vcombine.low %v4585, %v4586
    %v4600 = vcombine.low %v4587, %v4588
    %v4602 = vunpack.c.l.s4 1966171168
    %v4603 = vunpack.c.0.s8 %v4602
    %v4604 = vlaneseq
    %v4605 = vshrl.u32 %v4604, 7
    %v4606 = vsub.s32 %v4603, %v4605
    %v4607 = vrot.slane %v4597, %v4606
    %v4609 = vunpack.c.l.s4 1966171168
    %v4610 = vunpack.c.0.s8 %v4609
    %v4611 = vlaneseq
    %v4612 = vshrl.u32 %v4611, 7
    %v4613 = vsub.s32 %v4610, %v4612
    %v4614 = vrot.slane %v4598, %v4613
    %v4616 = vunpack.c.l.s4 1966171168
    %v4617 = vunpack.c.0.s8 %v4616
    %v4618 = vlaneseq
    %v4619 = vshrl.u32 %v4618, 7
    %v4620 = vsub.s32 %v4617, %v4619
    %v4621 = vrot.slane %v4599, %v4620
    %v4623 = vunpack.c.l.s4 1966171168
    %v4624 = vunpack.c.0.s8 %v4623
    %v4625 = vlaneseq
    %v4626 = vshrl.u32 %v4625, 7
    %v4627 = vsub.s32 %v4624, %v4626
    %v4628 = vrot.slane %v4600, %v4627
    %v4629 = vcombine.low %v4607, %v4614
    %v4630 = vcombine.low %v4621, %v4628
    %v4632 = vunpack.c.l.s4 1966171168
    %v4633 = vunpack.c.0.s8 %v4632
    %v4634 = vlaneseq
    %v4635 = vshrl.u32 %v4634, 7
    %v4636 = vsub.s32 %v4633, %v4635
    %v4637 = vrot.slane %v4629, %v4636
    %v4639 = vunpack.c.l.s4 1966171168
    %v4640 = vunpack.c.0.s8 %v4639
    %v4641 = vlaneseq
    %v4642 = vshrl.u32 %v4641, 7
    %v4643 = vsub.s32 %v4640, %v4642
    %v4644 = vrot.slane %v4630, %v4643
    %v4645 = vcombine.low %v4637, %v4644
    %4647 = vmatprep.subr.mxu0 0.0
    %4648 = vmatpush1.msra.mxu0 %v75
    %4649 = vmatprep.subr.mxu0 0.0
    %4650 = vmatpush1.msra.mxu0 %v76
    %4651 = vmatprep.subr.mxu0 0.0
    %4652 = vmatpush1.msra.mxu0 %v77
    %4653 = vmatprep.subr.mxu0 0.0
    %4654 = vmatpush1.msra.mxu0 %v78
    %4655 = vmatprep.subr.mxu0 0.0
    %4656 = vmatpush1.msra.mxu0 %v79
    %4657 = vmatprep.subr.mxu0 0.0
    %4658 = vmatpush1.msra.mxu0 %v80
    %4659 = vmatprep.subr.mxu0 0.0
    %4660 = vmatpush1.msra.mxu0 %v81
    %4661 = vmatprep.subr.mxu0 0.0
    %4662 = vmatpush1.msra.mxu0 %v82
    %4663 = vmatprep.subr.mxu0 0.0
    %4664 = vmatpush1.msra.mxu0 %v83
    %4665 = vmatprep.subr.mxu0 0.0
    %4666 = vmatpush1.msra.mxu0 %v84
    %4667 = vmatprep.subr.mxu0 0.0
    %4668 = vmatpush1.msra.mxu0 %v85
    %4669 = vmatprep.subr.mxu0 0.0
    %4670 = vmatpush1.msra.mxu0 %v86
    %4671 = vmatprep.subr.mxu0 0.0
    %4672 = vmatpush1.msra.mxu0 %v87
    %4673 = vmatprep.subr.mxu0 0.0
    %4674 = vmatpush1.msra.mxu0 %v88
    %4675 = vmatprep.subr.mxu0 0.0
    %4676 = vmatpush1.msra.mxu0 %v89
    %4677 = vmatprep.subr.mxu0 0.0
    %4678 = vmatpush1.msra.mxu0 %v90
    %4679 = vmatprep.subr.mxu0 0.0
    %4680 = vmatpush1.msra.mxu0 0.0
    %4681 = vmatprep.subr.mxu0 0.0
    %4682 = vmatpush1.msra.mxu0 0.0
    %4683 = vmatprep.subr.mxu0 0.0
    %4684 = vmatpush1.msra.mxu0 0.0
    %4685 = vmatprep.subr.mxu0 0.0
    %4686 = vmatpush1.msra.mxu0 0.0
    %4687 = vmatprep.subr.mxu0 0.0
    %4688 = vmatpush1.msra.mxu0 0.0
    %4689 = vmatprep.subr.mxu0 0.0
    %4690 = vmatpush1.msra.mxu0 0.0
    %4691 = vmatprep.subr.mxu0 0.0
    %4692 = vmatpush1.msra.mxu0 0.0
    %4693 = vmatprep.subr.mxu0 0.0
    %4694 = vmatpush1.msra.mxu0 0.0
    %4695 = vmatprep.subr.mxu0 0.0
    %4696 = vmatpush1.msra.mxu0 0.0
    %4697 = vmatprep.subr.mxu0 0.0
    %4698 = vmatpush1.msra.mxu0 0.0
    %4699 = vmatprep.subr.mxu0 0.0
    %4700 = vmatpush1.msra.mxu0 0.0
    %4701 = vmatprep.subr.mxu0 0.0
    %4702 = vmatpush1.msra.mxu0 0.0
    %4703 = vmatprep.subr.mxu0 0.0
    %4704 = vmatpush1.msra.mxu0 0.0
    %4705 = vmatprep.subr.mxu0 0.0
    %4706 = vmatpush1.msra.mxu0 0.0
    %4707 = vmatprep.subr.mxu0 0.0
    %4708 = vmatpush1.msra.mxu0 0.0
    %4709 = vmatprep.subr.mxu0 0.0
    %4710 = vmatpush1.msra.mxu0 0.0
    %4711 = vmatprep.mubr.f32.mxu0 0.0
    %4712 = vmatmul.mubr.f32.gmra.mrb[0].mxu0 %v4645
    %v4713 = vpop.f32.mrb[0].mxu0
    %v4714 = vadd.f32 %v513, %v4713
    %v4715 = vpop.f32.mrb[0].mxu0
    %4716 = vdwg.mxu0
    %v4717 = vrot.slane %v4185, 2
    %v4718 = vrot.slane %v4187, 2
    %v4719 = vrot.slane %v4189, 2
    %v4720 = vrot.slane %v4191, 2
    %v4721 = vrot.slane %v4193, 2
    %v4722 = vrot.slane %v4195, 2
    %v4723 = vrot.slane %v4197, 2
    %v4724 = vrot.slane %v4199, 2
    %v4734 = vcombine.high %v4714, %v4714
    %v4736 = vunpack.c.l.s4 1966171168
    %v4737 = vunpack.c.0.s8 %v4736
    %v4738 = vlaneseq
    %v4739 = vshrl.u32 %v4738, 7
    %v4740 = vsub.s32 %v4737, %v4739
    %v4741 = vrot.slane %v4714, %v4740
    %v4743 = vunpack.c.l.s4 1966171168
    %v4744 = vunpack.c.0.s8 %v4743
    %v4745 = vlaneseq
    %v4746 = vshrl.u32 %v4745, 7
    %v4747 = vsub.s32 %v4744, %v4746
    %v4748 = vrot.slane %v4734, %v4747
    %v4749 = vcombine.high %v4741, %v4741
    %v4750 = vcombine.high %v4748, %v4748
    %v4752 = vunpack.c.l.s4 1966171168
    %v4753 = vunpack.c.0.s8 %v4752
    %v4754 = vlaneseq
    %v4755 = vshrl.u32 %v4754, 7
    %v4756 = vsub.s32 %v4753, %v4755
    %v4757 = vrot.slane %v4741, %v4756
    %v4759 = vunpack.c.l.s4 1966171168
    %v4760 = vunpack.c.0.s8 %v4759
    %v4761 = vlaneseq
    %v4762 = vshrl.u32 %v4761, 7
    %v4763 = vsub.s32 %v4760, %v4762
    %v4764 = vrot.slane %v4748, %v4763
    %v4766 = vunpack.c.l.s4 1966171168
    %v4767 = vunpack.c.0.s8 %v4766
    %v4768 = vlaneseq
    %v4769 = vshrl.u32 %v4768, 7
    %v4770 = vsub.s32 %v4767, %v4769
    %v4771 = vrot.slane %v4749, %v4770
    %v4773 = vunpack.c.l.s4 1966171168
    %v4774 = vunpack.c.0.s8 %v4773
    %v4775 = vlaneseq
    %v4776 = vshrl.u32 %v4775, 7
    %v4777 = vsub.s32 %v4774, %v4776
    %v4778 = vrot.slane %v4750, %v4777
    %v4779 = vcombine.high %v4757, %v4757
    %v4780 = vcombine.high %v4764, %v4764
    %v4781 = vcombine.high %v4771, %v4771
    %v4782 = vcombine.high %v4778, %v4778
    %v4791 = vadd.f32 %v4717, %v4757
    %v4792 = vadd.f32 %v4718, %v4771
    %v4793 = vadd.f32 %v4719, %v4779
    %v4794 = vadd.f32 %v4720, %v4781
    %v4795 = vadd.f32 %v4721, %v4764
    %v4796 = vadd.f32 %v4722, %v4778
    %v4797 = vadd.f32 %v4723, %v4780
    %v4798 = vadd.f32 %v4724, %v4782
    %v4799 = vtanh.pop %v4791
    %v4800 = vtanh.pop %v4792
    %v4801 = vtanh.pop %v4793
    %v4802 = vtanh.pop %v4794
    %v4803 = vtanh.pop %v4795
    %v4804 = vtanh.pop %v4796
    %v4805 = vtanh.pop %v4797
    %v4806 = vtanh.pop %v4798
    %v4807 = vmul.f32 %v4428, %v4168
    %v4808 = vmul.f32 %v4430, %v4169
    %v4809 = vmul.f32 %v4432, %v4170
    %v4810 = vmul.f32 %v4434, %v4171
    %v4811 = vmul.f32 %v4436, %v4172
    %v4812 = vmul.f32 %v4438, %v4173
    %v4813 = vmul.f32 %v4440, %v4174
    %v4814 = vmul.f32 %v4442, %v4175
    %v4815 = vsub.f32 1.0, %v4428
    %v4816 = vsub.f32 1.0, %v4430
    %v4817 = vsub.f32 1.0, %v4432
    %v4818 = vsub.f32 1.0, %v4434
    %v4819 = vsub.f32 1.0, %v4436
    %v4820 = vsub.f32 1.0, %v4438
    %v4821 = vsub.f32 1.0, %v4440
    %v4822 = vsub.f32 1.0, %v4442
    %v4823 = vmul.f32 %v4815, %v4799
    %v4824 = vmul.f32 %v4816, %v4800
    %v4825 = vmul.f32 %v4817, %v4801
    %v4826 = vmul.f32 %v4818, %v4802
    %v4827 = vmul.f32 %v4819, %v4803
    %v4828 = vmul.f32 %v4820, %v4804
    %v4829 = vmul.f32 %v4821, %v4805
    %v4830 = vmul.f32 %v4822, %v4806
    %v4831 = vadd.f32 %v4807, %v4823
    %v4832 = vadd.f32 %v4808, %v4824
    %v4833 = vadd.f32 %v4809, %v4825
    %v4834 = vadd.f32 %v4810, %v4826
    %v4835 = vadd.f32 %v4811, %v4827
    %v4836 = vadd.f32 %v4812, %v4828
    %v4837 = vadd.f32 %v4813, %v4829
    %v4838 = vadd.f32 %v4814, %v4830
    %v4839 = vmax.f32 %v4831, -5.0
    %v4840 = vmax.f32 %v4832, -5.0
    %v4841 = vmax.f32 %v4833, -5.0
    %v4842 = vmax.f32 %v4834, -5.0
    %v4843 = vmax.f32 %v4835, -5.0
    %v4844 = vmax.f32 %v4836, -5.0
    %v4845 = vmax.f32 %v4837, -5.0
    %v4846 = vmax.f32 %v4838, -5.0
    %v4847 = vmin.f32 %v4839, 5.0
    %v4848 = vmin.f32 %v4840, 5.0
    %v4849 = vmin.f32 %v4841, 5.0
    %v4850 = vmin.f32 %v4842, 5.0
    %v4851 = vmin.f32 %v4843, 5.0
    %v4852 = vmin.f32 %v4844, 5.0
    %v4853 = vmin.f32 %v4845, 5.0
    %v4854 = vmin.f32 %v4846, 5.0
    %4855 = vst [vmem:[%s6 + $0x6] sm:$0x1] %v4847
    %4856 = vst [vmem:[%s6 + $0xe] sm:$0x1] %v4848
    %4857 = vst [vmem:[%s6 + $0x16] sm:$0x1] %v4849
    %4858 = vst [vmem:[%s6 + $0x1e] sm:$0x1] %v4850
    %4859 = vst [vmem:[%s6 + $0x26] sm:$0x1] %v4851
    %4860 = vst [vmem:[%s6 + $0x2e] sm:$0x1] %v4852
    %4861 = vst [vmem:[%s6 + $0x36] sm:$0x1] %v4853
    %4862 = vst [vmem:[%s6 + $0x3e] sm:$0x1] %v4854
    %s4863 = scalar_lea.vmem %s0, 7
    %v4864 = vld [vmem:[%s4863] ss:$8 sm:$0x7]
    %s4865 = scalar_lea.vmem %s0, 31
    %v4866 = vld [vmem:[%s4865] ss:$8 sm:$0x7]
    %s4867 = scalar_lea.vmem %s0, 55
    %v4868 = vld [vmem:[%s4867] ss:$8 sm:$0x7]
    %s4869 = scalar_lea.vmem %s0, 79
    %v4870 = vld [vmem:[%s4869] ss:$8 sm:$0x7]
    %s4871 = scalar_lea.vmem %s0, 103
    %v4872 = vld [vmem:[%s4871] ss:$8 sm:$0x7]
    %s4873 = scalar_lea.vmem %s0, 127
    %v4874 = vld [vmem:[%s4873] ss:$8 sm:$0x7]
    %s4875 = scalar_lea.vmem %s0, 151
    %v4876 = vld [vmem:[%s4875] ss:$8 sm:$0x7]
    %s4877 = scalar_lea.vmem %s0, 175
    %v4878 = vld [vmem:[%s4877] ss:$8 sm:$0x7]
    %v4887 = vcombine.low %v4847, %v4848
    %v4888 = vcombine.low %v4849, %v4850
    %v4889 = vcombine.low %v4851, %v4852
    %v4890 = vcombine.low %v4853, %v4854
    %v4892 = vunpack.c.l.s4 1966171168
    %v4893 = vunpack.c.0.s8 %v4892
    %v4894 = vlaneseq
    %v4895 = vshrl.u32 %v4894, 7
    %v4896 = vsub.s32 %v4893, %v4895
    %v4897 = vrot.slane %v4887, %v4896
    %v4899 = vunpack.c.l.s4 1966171168
    %v4900 = vunpack.c.0.s8 %v4899
    %v4901 = vlaneseq
    %v4902 = vshrl.u32 %v4901, 7
    %v4903 = vsub.s32 %v4900, %v4902
    %v4904 = vrot.slane %v4888, %v4903
    %v4906 = vunpack.c.l.s4 1966171168
    %v4907 = vunpack.c.0.s8 %v4906
    %v4908 = vlaneseq
    %v4909 = vshrl.u32 %v4908, 7
    %v4910 = vsub.s32 %v4907, %v4909
    %v4911 = vrot.slane %v4889, %v4910
    %v4913 = vunpack.c.l.s4 1966171168
    %v4914 = vunpack.c.0.s8 %v4913
    %v4915 = vlaneseq
    %v4916 = vshrl.u32 %v4915, 7
    %v4917 = vsub.s32 %v4914, %v4916
    %v4918 = vrot.slane %v4890, %v4917
    %v4919 = vcombine.low %v4897, %v4904
    %v4920 = vcombine.low %v4911, %v4918
    %v4922 = vunpack.c.l.s4 1966171168
    %v4923 = vunpack.c.0.s8 %v4922
    %v4924 = vlaneseq
    %v4925 = vshrl.u32 %v4924, 7
    %v4926 = vsub.s32 %v4923, %v4925
    %v4927 = vrot.slane %v4919, %v4926
    %v4929 = vunpack.c.l.s4 1966171168
    %v4930 = vunpack.c.0.s8 %v4929
    %v4931 = vlaneseq
    %v4932 = vshrl.u32 %v4931, 7
    %v4933 = vsub.s32 %v4930, %v4932
    %v4934 = vrot.slane %v4920, %v4933
    %v4935 = vcombine.low %v4927, %v4934
    %4937 = vmatprep.subr.mxu0 %v44
    %4938 = vmatpush1.msra.mxu0 %v43
    %4939 = vmatprep.subr.mxu0 %v46
    %4940 = vmatpush1.msra.mxu0 %v45
    %4941 = vmatprep.subr.mxu0 %v48
    %4942 = vmatpush1.msra.mxu0 %v47
    %4943 = vmatprep.subr.mxu0 %v50
    %4944 = vmatpush1.msra.mxu0 %v49
    %4945 = vmatprep.subr.mxu0 %v52
    %4946 = vmatpush1.msra.mxu0 %v51
    %4947 = vmatprep.subr.mxu0 %v54
    %4948 = vmatpush1.msra.mxu0 %v53
    %4949 = vmatprep.subr.mxu0 %v56
    %4950 = vmatpush1.msra.mxu0 %v55
    %4951 = vmatprep.subr.mxu0 %v58
    %4952 = vmatpush1.msra.mxu0 %v57
    %4953 = vmatprep.subr.mxu0 %v60
    %4954 = vmatpush1.msra.mxu0 %v59
    %4955 = vmatprep.subr.mxu0 %v62
    %4956 = vmatpush1.msra.mxu0 %v61
    %4957 = vmatprep.subr.mxu0 %v64
    %4958 = vmatpush1.msra.mxu0 %v63
    %4959 = vmatprep.subr.mxu0 %v66
    %4960 = vmatpush1.msra.mxu0 %v65
    %4961 = vmatprep.subr.mxu0 %v68
    %4962 = vmatpush1.msra.mxu0 %v67
    %4963 = vmatprep.subr.mxu0 %v70
    %4964 = vmatpush1.msra.mxu0 %v69
    %4965 = vmatprep.subr.mxu0 %v72
    %4966 = vmatpush1.msra.mxu0 %v71
    %4967 = vmatprep.subr.mxu0 %v74
    %4968 = vmatpush1.msra.mxu0 %v73
    %4969 = vmatprep.subr.mxu0 0.0
    %4970 = vmatpush1.msra.mxu0 0.0
    %4971 = vmatprep.subr.mxu0 0.0
    %4972 = vmatpush1.msra.mxu0 0.0
    %4973 = vmatprep.subr.mxu0 0.0
    %4974 = vmatpush1.msra.mxu0 0.0
    %4975 = vmatprep.subr.mxu0 0.0
    %4976 = vmatpush1.msra.mxu0 0.0
    %4977 = vmatprep.subr.mxu0 0.0
    %4978 = vmatpush1.msra.mxu0 0.0
    %4979 = vmatprep.subr.mxu0 0.0
    %4980 = vmatpush1.msra.mxu0 0.0
    %4981 = vmatprep.subr.mxu0 0.0
    %4982 = vmatpush1.msra.mxu0 0.0
    %4983 = vmatprep.subr.mxu0 0.0
    %4984 = vmatpush1.msra.mxu0 0.0
    %4985 = vmatprep.subr.mxu0 0.0
    %4986 = vmatpush1.msra.mxu0 0.0
    %4987 = vmatprep.subr.mxu0 0.0
    %4988 = vmatpush1.msra.mxu0 0.0
    %4989 = vmatprep.subr.mxu0 0.0
    %4990 = vmatpush1.msra.mxu0 0.0
    %4991 = vmatprep.subr.mxu0 0.0
    %4992 = vmatpush1.msra.mxu0 0.0
    %4993 = vmatprep.subr.mxu0 0.0
    %4994 = vmatpush1.msra.mxu0 0.0
    %4995 = vmatprep.subr.mxu0 0.0
    %4996 = vmatpush1.msra.mxu0 0.0
    %4997 = vmatprep.subr.mxu0 0.0
    %4998 = vmatpush1.msra.mxu0 0.0
    %4999 = vmatprep.subr.mxu0 0.0
    %5000 = vmatpush1.msra.mxu0 0.0
    %5001 = vmatprep.mubr.f32.mxu0 0.0
    %5002 = vmatmul.mubr.f32.gmra.mrb[0].mxu0 %v4935
    %v5003 = vpop.f32.mrb[0].mxu0
    %v5004 = vadd.f32 %v113, %v5003
    %v5005 = vpop.f32.mrb[0].mxu0
    %v5006 = vadd.f32 %v117, %v5005
    %5007 = vdwg.mxu0
    %v5009 = vcombine.high %v5004, %v5004
    %v5011 = vunpack.c.l.s4 1966171168
    %v5012 = vunpack.c.0.s8 %v5011
    %v5013 = vlaneseq
    %v5014 = vshrl.u32 %v5013, 7
    %v5015 = vsub.s32 %v5012, %v5014
    %v5016 = vrot.slane %v5004, %v5015
    %v5018 = vunpack.c.l.s4 1966171168
    %v5019 = vunpack.c.0.s8 %v5018
    %v5020 = vlaneseq
    %v5021 = vshrl.u32 %v5020, 7
    %v5022 = vsub.s32 %v5019, %v5021
    %v5023 = vrot.slane %v5009, %v5022
    %v5024 = vcombine.high %v5016, %v5016
    %v5025 = vcombine.high %v5023, %v5023
    %v5027 = vunpack.c.l.s4 1966171168
    %v5028 = vunpack.c.0.s8 %v5027
    %v5029 = vlaneseq
    %v5030 = vshrl.u32 %v5029, 7
    %v5031 = vsub.s32 %v5028, %v5030
    %v5032 = vrot.slane %v5016, %v5031
    %v5034 = vunpack.c.l.s4 1966171168
    %v5035 = vunpack.c.0.s8 %v5034
    %v5036 = vlaneseq
    %v5037 = vshrl.u32 %v5036, 7
    %v5038 = vsub.s32 %v5035, %v5037
    %v5039 = vrot.slane %v5023, %v5038
    %v5041 = vunpack.c.l.s4 1966171168
    %v5042 = vunpack.c.0.s8 %v5041
    %v5043 = vlaneseq
    %v5044 = vshrl.u32 %v5043, 7
    %v5045 = vsub.s32 %v5042, %v5044
    %v5046 = vrot.slane %v5024, %v5045
    %v5048 = vunpack.c.l.s4 1966171168
    %v5049 = vunpack.c.0.s8 %v5048
    %v5050 = vlaneseq
    %v5051 = vshrl.u32 %v5050, 7
    %v5052 = vsub.s32 %v5049, %v5051
    %v5053 = vrot.slane %v5025, %v5052
    %v5054 = vcombine.high %v5032, %v5032
    %v5055 = vcombine.high %v5039, %v5039
    %v5056 = vcombine.high %v5046, %v5046
    %v5057 = vcombine.high %v5053, %v5053
    %v5066 = vadd.f32 %v4864, %v5032
    %v5067 = vadd.f32 %v4866, %v5046
    %v5068 = vadd.f32 %v4868, %v5054
    %v5069 = vadd.f32 %v4870, %v5056
    %v5070 = vadd.f32 %v4872, %v5039
    %v5071 = vadd.f32 %v4874, %v5053
    %v5072 = vadd.f32 %v4876, %v5055
    %v5073 = vadd.f32 %v4878, %v5057
    %v5074 = vxor.u32 %v5066, 2147483648
    %v5075 = vxor.u32 %v5067, 2147483648
    %v5076 = vxor.u32 %v5068, 2147483648
    %v5077 = vxor.u32 %v5069, 2147483648
    %v5078 = vxor.u32 %v5070, 2147483648
    %v5079 = vxor.u32 %v5071, 2147483648
    %v5080 = vxor.u32 %v5072, 2147483648
    %v5081 = vxor.u32 %v5073, 2147483648
    %v5082 = vmul.f32 %v5074, 1.442695
    %v5083 = vpow.pop %v5082
    %v5084 = vmul.f32 %v5075, 1.442695
    %v5085 = vpow.pop %v5084
    %v5086 = vmul.f32 %v5076, 1.442695
    %v5087 = vpow.pop %v5086
    %v5088 = vmul.f32 %v5077, 1.442695
    %v5089 = vpow.pop %v5088
    %v5090 = vmul.f32 %v5078, 1.442695
    %v5091 = vpow.pop %v5090
    %v5092 = vmul.f32 %v5079, 1.442695
    %v5093 = vpow.pop %v5092
    %v5094 = vmul.f32 %v5080, 1.442695
    %v5095 = vpow.pop %v5094
    %v5096 = vmul.f32 %v5081, 1.442695
    %v5097 = vpow.pop %v5096
    %v5098 = vadd.f32 %v5083, 1.0
    %v5099 = vadd.f32 %v5085, 1.0
    %v5100 = vadd.f32 %v5087, 1.0
    %v5101 = vadd.f32 %v5089, 1.0
    %v5102 = vadd.f32 %v5091, 1.0
    %v5103 = vadd.f32 %v5093, 1.0
    %v5104 = vadd.f32 %v5095, 1.0
    %v5105 = vadd.f32 %v5097, 1.0
    %v5106 = vrcp.pop %v5098
    %v5107 = vmul.f32 1.0, %v5106
    %v5108 = vrcp.pop %v5099
    %v5109 = vmul.f32 1.0, %v5108
    %v5110 = vrcp.pop %v5100
    %v5111 = vmul.f32 1.0, %v5110
    %v5112 = vrcp.pop %v5101
    %v5113 = vmul.f32 1.0, %v5112
    %v5114 = vrcp.pop %v5102
    %v5115 = vmul.f32 1.0, %v5114
    %v5116 = vrcp.pop %v5103
    %v5117 = vmul.f32 1.0, %v5116
    %v5118 = vrcp.pop %v5104
    %v5119 = vmul.f32 1.0, %v5118
    %v5120 = vrcp.pop %v5105
    %v5121 = vmul.f32 1.0, %v5120
    %v5130 = vrot.slane %v4864, 1
    %v5131 = vrot.slane %v4866, 1
    %v5132 = vrot.slane %v4868, 1
    %v5133 = vrot.slane %v4870, 1
    %v5134 = vrot.slane %v4872, 1
    %v5135 = vrot.slane %v4874, 1
    %v5136 = vrot.slane %v4876, 1
    %v5137 = vrot.slane %v4878, 1
    %v5147 = vcombine.high %v5006, %v5006
    %v5149 = vunpack.c.l.s4 1966171168
    %v5150 = vunpack.c.0.s8 %v5149
    %v5151 = vlaneseq
    %v5152 = vshrl.u32 %v5151, 7
    %v5153 = vsub.s32 %v5150, %v5152
    %v5154 = vrot.slane %v5006, %v5153
    %v5156 = vunpack.c.l.s4 1966171168
    %v5157 = vunpack.c.0.s8 %v5156
    %v5158 = vlaneseq
    %v5159 = vshrl.u32 %v5158, 7
    %v5160 = vsub.s32 %v5157, %v5159
    %v5161 = vrot.slane %v5147, %v5160
    %v5162 = vcombine.high %v5154, %v5154
    %v5163 = vcombine.high %v5161, %v5161
    %v5165 = vunpack.c.l.s4 1966171168
    %v5166 = vunpack.c.0.s8 %v5165
    %v5167 = vlaneseq
    %v5168 = vshrl.u32 %v5167, 7
    %v5169 = vsub.s32 %v5166, %v5168
    %v5170 = vrot.slane %v5154, %v5169
    %v5172 = vunpack.c.l.s4 1966171168
    %v5173 = vunpack.c.0.s8 %v5172
    %v5174 = vlaneseq
    %v5175 = vshrl.u32 %v5174, 7
    %v5176 = vsub.s32 %v5173, %v5175
    %v5177 = vrot.slane %v5161, %v5176
    %v5179 = vunpack.c.l.s4 1966171168
    %v5180 = vunpack.c.0.s8 %v5179
    %v5181 = vlaneseq
    %v5182 = vshrl.u32 %v5181, 7
    %v5183 = vsub.s32 %v5180, %v5182
    %v5184 = vrot.slane %v5162, %v5183
    %v5186 = vunpack.c.l.s4 1966171168
    %v5187 = vunpack.c.0.s8 %v5186
    %v5188 = vlaneseq
    %v5189 = vshrl.u32 %v5188, 7
    %v5190 = vsub.s32 %v5187, %v5189
    %v5191 = vrot.slane %v5163, %v5190
    %v5192 = vcombine.high %v5170, %v5170
    %v5193 = vcombine.high %v5177, %v5177
    %v5194 = vcombine.high %v5184, %v5184
    %v5195 = vcombine.high %v5191, %v5191
    %v5204 = vadd.f32 %v5130, %v5170
    %v5205 = vadd.f32 %v5131, %v5184
    %v5206 = vadd.f32 %v5132, %v5192
    %v5207 = vadd.f32 %v5133, %v5194
    %v5208 = vadd.f32 %v5134, %v5177
    %v5209 = vadd.f32 %v5135, %v5191
    %v5210 = vadd.f32 %v5136, %v5193
    %v5211 = vadd.f32 %v5137, %v5195
    %v5212 = vxor.u32 %v5204, 2147483648
    %v5213 = vxor.u32 %v5205, 2147483648
    %v5214 = vxor.u32 %v5206, 2147483648
    %v5215 = vxor.u32 %v5207, 2147483648
    %v5216 = vxor.u32 %v5208, 2147483648
    %v5217 = vxor.u32 %v5209, 2147483648
    %v5218 = vxor.u32 %v5210, 2147483648
    %v5219 = vxor.u32 %v5211, 2147483648
    %v5220 = vmul.f32 %v5212, 1.442695
    %v5221 = vpow.pop %v5220
    %v5222 = vmul.f32 %v5213, 1.442695
    %v5223 = vpow.pop %v5222
    %v5224 = vmul.f32 %v5214, 1.442695
    %v5225 = vpow.pop %v5224
    %v5226 = vmul.f32 %v5215, 1.442695
    %v5227 = vpow.pop %v5226
    %v5228 = vmul.f32 %v5216, 1.442695
    %v5229 = vpow.pop %v5228
    %v5230 = vmul.f32 %v5217, 1.442695
    %v5231 = vpow.pop %v5230
    %v5232 = vmul.f32 %v5218, 1.442695
    %v5233 = vpow.pop %v5232
    %v5234 = vmul.f32 %v5219, 1.442695
    %v5235 = vpow.pop %v5234
    %v5236 = vadd.f32 %v5221, 1.0
    %v5237 = vadd.f32 %v5223, 1.0
    %v5238 = vadd.f32 %v5225, 1.0
    %v5239 = vadd.f32 %v5227, 1.0
    %v5240 = vadd.f32 %v5229, 1.0
    %v5241 = vadd.f32 %v5231, 1.0
    %v5242 = vadd.f32 %v5233, 1.0
    %v5243 = vadd.f32 %v5235, 1.0
    %v5244 = vrcp.pop %v5236
    %v5245 = vmul.f32 1.0, %v5244
    %v5246 = vrcp.pop %v5237
    %v5247 = vmul.f32 1.0, %v5246
    %v5248 = vrcp.pop %v5238
    %v5249 = vmul.f32 1.0, %v5248
    %v5250 = vrcp.pop %v5239
    %v5251 = vmul.f32 1.0, %v5250
    %v5252 = vrcp.pop %v5240
    %v5253 = vmul.f32 1.0, %v5252
    %v5254 = vrcp.pop %v5241
    %v5255 = vmul.f32 1.0, %v5254
    %v5256 = vrcp.pop %v5242
    %v5257 = vmul.f32 1.0, %v5256
    %v5258 = vrcp.pop %v5243
    %v5259 = vmul.f32 1.0, %v5258
    %v5260 = vmul.f32 %v5245, %v4847
    %v5261 = vmul.f32 %v5247, %v4848
    %v5262 = vmul.f32 %v5249, %v4849
    %v5263 = vmul.f32 %v5251, %v4850
    %v5264 = vmul.f32 %v5253, %v4851
    %v5265 = vmul.f32 %v5255, %v4852
    %v5266 = vmul.f32 %v5257, %v4853
    %v5267 = vmul.f32 %v5259, %v4854
    %v5276 = vcombine.low %v5260, %v5261
    %v5277 = vcombine.low %v5262, %v5263
    %v5278 = vcombine.low %v5264, %v5265
    %v5279 = vcombine.low %v5266, %v5267
    %v5281 = vunpack.c.l.s4 1966171168
    %v5282 = vunpack.c.0.s8 %v5281
    %v5283 = vlaneseq
    %v5284 = vshrl.u32 %v5283, 7
    %v5285 = vsub.s32 %v5282, %v5284
    %v5286 = vrot.slane %v5276, %v5285
    %v5288 = vunpack.c.l.s4 1966171168
    %v5289 = vunpack.c.0.s8 %v5288
    %v5290 = vlaneseq
    %v5291 = vshrl.u32 %v5290, 7
    %v5292 = vsub.s32 %v5289, %v5291
    %v5293 = vrot.slane %v5277, %v5292
    %v5295 = vunpack.c.l.s4 1966171168
    %v5296 = vunpack.c.0.s8 %v5295
    %v5297 = vlaneseq
    %v5298 = vshrl.u32 %v5297, 7
    %v5299 = vsub.s32 %v5296, %v5298
    %v5300 = vrot.slane %v5278, %v5299
    %v5302 = vunpack.c.l.s4 1966171168
    %v5303 = vunpack.c.0.s8 %v5302
    %v5304 = vlaneseq
    %v5305 = vshrl.u32 %v5304, 7
    %v5306 = vsub.s32 %v5303, %v5305
    %v5307 = vrot.slane %v5279, %v5306
    %v5308 = vcombine.low %v5286, %v5293
    %v5309 = vcombine.low %v5300, %v5307
    %v5311 = vunpack.c.l.s4 1966171168
    %v5312 = vunpack.c.0.s8 %v5311
    %v5313 = vlaneseq
    %v5314 = vshrl.u32 %v5313, 7
    %v5315 = vsub.s32 %v5312, %v5314
    %v5316 = vrot.slane %v5308, %v5315
    %v5318 = vunpack.c.l.s4 1966171168
    %v5319 = vunpack.c.0.s8 %v5318
    %v5320 = vlaneseq
    %v5321 = vshrl.u32 %v5320, 7
    %v5322 = vsub.s32 %v5319, %v5321
    %v5323 = vrot.slane %v5309, %v5322
    %v5324 = vcombine.low %v5316, %v5323
    %5326 = vmatprep.subr.mxu0 0.0
    %5327 = vmatpush1.msra.mxu0 %v75
    %5328 = vmatprep.subr.mxu0 0.0
    %5329 = vmatpush1.msra.mxu0 %v76
    %5330 = vmatprep.subr.mxu0 0.0
    %5331 = vmatpush1.msra.mxu0 %v77
    %5332 = vmatprep.subr.mxu0 0.0
    %5333 = vmatpush1.msra.mxu0 %v78
    %5334 = vmatprep.subr.mxu0 0.0
    %5335 = vmatpush1.msra.mxu0 %v79
    %5336 = vmatprep.subr.mxu0 0.0
    %5337 = vmatpush1.msra.mxu0 %v80
    %5338 = vmatprep.subr.mxu0 0.0
    %5339 = vmatpush1.msra.mxu0 %v81
    %5340 = vmatprep.subr.mxu0 0.0
    %5341 = vmatpush1.msra.mxu0 %v82
    %5342 = vmatprep.subr.mxu0 0.0
    %5343 = vmatpush1.msra.mxu0 %v83
    %5344 = vmatprep.subr.mxu0 0.0
    %5345 = vmatpush1.msra.mxu0 %v84
    %5346 = vmatprep.subr.mxu0 0.0
    %5347 = vmatpush1.msra.mxu0 %v85
    %5348 = vmatprep.subr.mxu0 0.0
    %5349 = vmatpush1.msra.mxu0 %v86
    %5350 = vmatprep.subr.mxu0 0.0
    %5351 = vmatpush1.msra.mxu0 %v87
    %5352 = vmatprep.subr.mxu0 0.0
    %5353 = vmatpush1.msra.mxu0 %v88
    %5354 = vmatprep.subr.mxu0 0.0
    %5355 = vmatpush1.msra.mxu0 %v89
    %5356 = vmatprep.subr.mxu0 0.0
    %5357 = vmatpush1.msra.mxu0 %v90
    %5358 = vmatprep.subr.mxu0 0.0
    %5359 = vmatpush1.msra.mxu0 0.0
    %5360 = vmatprep.subr.mxu0 0.0
    %5361 = vmatpush1.msra.mxu0 0.0
    %5362 = vmatprep.subr.mxu0 0.0
    %5363 = vmatpush1.msra.mxu0 0.0
    %5364 = vmatprep.subr.mxu0 0.0
    %5365 = vmatpush1.msra.mxu0 0.0
    %5366 = vmatprep.subr.mxu0 0.0
    %5367 = vmatpush1.msra.mxu0 0.0
    %5368 = vmatprep.subr.mxu0 0.0
    %5369 = vmatpush1.msra.mxu0 0.0
    %5370 = vmatprep.subr.mxu0 0.0
    %5371 = vmatpush1.msra.mxu0 0.0
    %5372 = vmatprep.subr.mxu0 0.0
    %5373 = vmatpush1.msra.mxu0 0.0
    %5374 = vmatprep.subr.mxu0 0.0
    %5375 = vmatpush1.msra.mxu0 0.0
    %5376 = vmatprep.subr.mxu0 0.0
    %5377 = vmatpush1.msra.mxu0 0.0
    %5378 = vmatprep.subr.mxu0 0.0
    %5379 = vmatpush1.msra.mxu0 0.0
    %5380 = vmatprep.subr.mxu0 0.0
    %5381 = vmatpush1.msra.mxu0 0.0
    %5382 = vmatprep.subr.mxu0 0.0
    %5383 = vmatpush1.msra.mxu0 0.0
    %5384 = vmatprep.subr.mxu0 0.0
    %5385 = vmatpush1.msra.mxu0 0.0
    %5386 = vmatprep.subr.mxu0 0.0
    %5387 = vmatpush1.msra.mxu0 0.0
    %5388 = vmatprep.subr.mxu0 0.0
    %5389 = vmatpush1.msra.mxu0 0.0
    %5390 = vmatprep.mubr.f32.mxu0 0.0
    %5391 = vmatmul.mubr.f32.gmra.mrb[0].mxu0 %v5324
    %v5392 = vpop.f32.mrb[0].mxu0
    %v5393 = vadd.f32 %v513, %v5392
    %v5394 = vpop.f32.mrb[0].mxu0
    %5395 = vdwg.mxu0
    %v5396 = vrot.slane %v4864, 2
    %v5397 = vrot.slane %v4866, 2
    %v5398 = vrot.slane %v4868, 2
    %v5399 = vrot.slane %v4870, 2
    %v5400 = vrot.slane %v4872, 2
    %v5401 = vrot.slane %v4874, 2
    %v5402 = vrot.slane %v4876, 2
    %v5403 = vrot.slane %v4878, 2
    %v5413 = vcombine.high %v5393, %v5393
    %v5415 = vunpack.c.l.s4 1966171168
    %v5416 = vunpack.c.0.s8 %v5415
    %v5417 = vlaneseq
    %v5418 = vshrl.u32 %v5417, 7
    %v5419 = vsub.s32 %v5416, %v5418
    %v5420 = vrot.slane %v5393, %v5419
    %v5422 = vunpack.c.l.s4 1966171168
    %v5423 = vunpack.c.0.s8 %v5422
    %v5424 = vlaneseq
    %v5425 = vshrl.u32 %v5424, 7
    %v5426 = vsub.s32 %v5423, %v5425
    %v5427 = vrot.slane %v5413, %v5426
    %v5428 = vcombine.high %v5420, %v5420
    %v5429 = vcombine.high %v5427, %v5427
    %v5431 = vunpack.c.l.s4 1966171168
    %v5432 = vunpack.c.0.s8 %v5431
    %v5433 = vlaneseq
    %v5434 = vshrl.u32 %v5433, 7
    %v5435 = vsub.s32 %v5432, %v5434
    %v5436 = vrot.slane %v5420, %v5435
    %v5438 = vunpack.c.l.s4 1966171168
    %v5439 = vunpack.c.0.s8 %v5438
    %v5440 = vlaneseq
    %v5441 = vshrl.u32 %v5440, 7
    %v5442 = vsub.s32 %v5439, %v5441
    %v5443 = vrot.slane %v5427, %v5442
    %v5445 = vunpack.c.l.s4 1966171168
    %v5446 = vunpack.c.0.s8 %v5445
    %v5447 = vlaneseq
    %v5448 = vshrl.u32 %v5447, 7
    %v5449 = vsub.s32 %v5446, %v5448
    %v5450 = vrot.slane %v5428, %v5449
    %v5452 = vunpack.c.l.s4 1966171168
    %v5453 = vunpack.c.0.s8 %v5452
    %v5454 = vlaneseq
    %v5455 = vshrl.u32 %v5454, 7
    %v5456 = vsub.s32 %v5453, %v5455
    %v5457 = vrot.slane %v5429, %v5456
    %v5458 = vcombine.high %v5436, %v5436
    %v5459 = vcombine.high %v5443, %v5443
    %v5460 = vcombine.high %v5450, %v5450
    %v5461 = vcombine.high %v5457, %v5457
    %v5470 = vadd.f32 %v5396, %v5436
    %v5471 = vadd.f32 %v5397, %v5450
    %v5472 = vadd.f32 %v5398, %v5458
    %v5473 = vadd.f32 %v5399, %v5460
    %v5474 = vadd.f32 %v5400, %v5443
    %v5475 = vadd.f32 %v5401, %v5457
    %v5476 = vadd.f32 %v5402, %v5459
    %v5477 = vadd.f32 %v5403, %v5461
    %v5478 = vtanh.pop %v5470
    %v5479 = vtanh.pop %v5471
    %v5480 = vtanh.pop %v5472
    %v5481 = vtanh.pop %v5473
    %v5482 = vtanh.pop %v5474
    %v5483 = vtanh.pop %v5475
    %v5484 = vtanh.pop %v5476
    %v5485 = vtanh.pop %v5477
    %v5486 = vmul.f32 %v5107, %v4847
    %v5487 = vmul.f32 %v5109, %v4848
    %v5488 = vmul.f32 %v5111, %v4849
    %v5489 = vmul.f32 %v5113, %v4850
    %v5490 = vmul.f32 %v5115, %v4851
    %v5491 = vmul.f32 %v5117, %v4852
    %v5492 = vmul.f32 %v5119, %v4853
    %v5493 = vmul.f32 %v5121, %v4854
    %v5494 = vsub.f32 1.0, %v5107
    %v5495 = vsub.f32 1.0, %v5109
    %v5496 = vsub.f32 1.0, %v5111
    %v5497 = vsub.f32 1.0, %v5113
    %v5498 = vsub.f32 1.0, %v5115
    %v5499 = vsub.f32 1.0, %v5117
    %v5500 = vsub.f32 1.0, %v5119
    %v5501 = vsub.f32 1.0, %v5121
    %v5502 = vmul.f32 %v5494, %v5478
    %v5503 = vmul.f32 %v5495, %v5479
    %v5504 = vmul.f32 %v5496, %v5480
    %v5505 = vmul.f32 %v5497, %v5481
    %v5506 = vmul.f32 %v5498, %v5482
    %v5507 = vmul.f32 %v5499, %v5483
    %v5508 = vmul.f32 %v5500, %v5484
    %v5509 = vmul.f32 %v5501, %v5485
    %v5510 = vadd.f32 %v5486, %v5502
    %v5511 = vadd.f32 %v5487, %v5503
    %v5512 = vadd.f32 %v5488, %v5504
    %v5513 = vadd.f32 %v5489, %v5505
    %v5514 = vadd.f32 %v5490, %v5506
    %v5515 = vadd.f32 %v5491, %v5507
    %v5516 = vadd.f32 %v5492, %v5508
    %v5517 = vadd.f32 %v5493, %v5509
    %v5518 = vmax.f32 %v5510, -5.0
    %v5519 = vmax.f32 %v5511, -5.0
    %v5520 = vmax.f32 %v5512, -5.0
    %v5521 = vmax.f32 %v5513, -5.0
    %v5522 = vmax.f32 %v5514, -5.0
    %v5523 = vmax.f32 %v5515, -5.0
    %v5524 = vmax.f32 %v5516, -5.0
    %v5525 = vmax.f32 %v5517, -5.0
    %v5526 = vmin.f32 %v5518, 5.0
    %v5527 = vmin.f32 %v5519, 5.0
    %v5528 = vmin.f32 %v5520, 5.0
    %v5529 = vmin.f32 %v5521, 5.0
    %v5530 = vmin.f32 %v5522, 5.0
    %v5531 = vmin.f32 %v5523, 5.0
    %v5532 = vmin.f32 %v5524, 5.0
    %v5533 = vmin.f32 %v5525, 5.0
    %5534 = vst [vmem:[%s6 + $0x7] sm:$0x1] %v5526
    %5535 = vst [vmem:[%s6 + $0xf] sm:$0x1] %v5527
    %5536 = vst [vmem:[%s6 + $0x17] sm:$0x1] %v5528
    %5537 = vst [vmem:[%s6 + $0x1f] sm:$0x1] %v5529
    %5538 = vst [vmem:[%s6 + $0x27] sm:$0x1] %v5530
    %5539 = vst [vmem:[%s6 + $0x2f] sm:$0x1] %v5531
    %5540 = vst [vmem:[%s6 + $0x37] sm:$0x1] %v5532
    %5541 = vst [vmem:[%s6 + $0x3f] sm:$0x1] %v5533
    %v5550 = vcombine.low %v5526, %v5527
    %v5551 = vcombine.low %v5528, %v5529
    %v5552 = vcombine.low %v5530, %v5531
    %v5553 = vcombine.low %v5532, %v5533
    %v5555 = vunpack.c.l.s4 1966171168
    %v5556 = vunpack.c.0.s8 %v5555
    %v5557 = vlaneseq
    %v5558 = vshrl.u32 %v5557, 7
    %v5559 = vsub.s32 %v5556, %v5558
    %v5560 = vrot.slane %v5550, %v5559
    %v5562 = vunpack.c.l.s4 1966171168
    %v5563 = vunpack.c.0.s8 %v5562
    %v5564 = vlaneseq
    %v5565 = vshrl.u32 %v5564, 7
    %v5566 = vsub.s32 %v5563, %v5565
    %v5567 = vrot.slane %v5551, %v5566
    %v5569 = vunpack.c.l.s4 1966171168
    %v5570 = vunpack.c.0.s8 %v5569
    %v5571 = vlaneseq
    %v5572 = vshrl.u32 %v5571, 7
    %v5573 = vsub.s32 %v5570, %v5572
    %v5574 = vrot.slane %v5552, %v5573
    %v5576 = vunpack.c.l.s4 1966171168
    %v5577 = vunpack.c.0.s8 %v5576
    %v5578 = vlaneseq
    %v5579 = vshrl.u32 %v5578, 7
    %v5580 = vsub.s32 %v5577, %v5579
    %v5581 = vrot.slane %v5553, %v5580
    %v5582 = vcombine.low %v5560, %v5567
    %v5583 = vcombine.low %v5574, %v5581
    %v5585 = vunpack.c.l.s4 1966171168
    %v5586 = vunpack.c.0.s8 %v5585
    %v5587 = vlaneseq
    %v5588 = vshrl.u32 %v5587, 7
    %v5589 = vsub.s32 %v5586, %v5588
    %v5590 = vrot.slane %v5582, %v5589
    %v5592 = vunpack.c.l.s4 1966171168
    %v5593 = vunpack.c.0.s8 %v5592
    %v5594 = vlaneseq
    %v5595 = vshrl.u32 %v5594, 7
    %v5596 = vsub.s32 %v5593, %v5595
    %v5597 = vrot.slane %v5583, %v5596
    %v5598 = vcombine.low %v5590, %v5597
    %5600 = vst [vmem:[#allocation2] sm:$0xff] %v5598
    // Predicated region
    $region34: #{clipped_gru_forward.1} parent=1 // pred_check
      _
    $region35: #{clipped_gru_forward.1} parent=1 // pred_check_branch
      %5602 = sbr.rel (0) target = $region37
    $region36: #{clipped_gru_forward.1} parent=1 // pred_region
      _
    $region37: #{clipped_gru_forward.1} parent=1 // pred_fallthru
      _
    // Predicated region
    $region38: #{clipped_gru_forward.1} parent=1 // pred_check
      _
    $region39: #{clipped_gru_forward.1} parent=1 // pred_check_branch
      %5604 = sbr.rel (0) target = $region41
    $region40: #{clipped_gru_forward.1} parent=1 // pred_region
      _
    $region41: #{clipped_gru_forward.1} parent=1 // pred_fallthru
      _
    %5605 = vsyncpa [#allocation4], 1

</llo_original>
